<compile_context>
chip_gen: v7x
topology: tpu7x:2x2x1
jax: 0.10.0
libtpu: 0.0.40
codegen_flags: <defaults>
</compile_context>

<pallas_src>
import math

import jax
import jax.numpy as jnp
from jax import lax
from jax.experimental import pallas as pl
from jax.experimental.pallas import tpu as pltpu


# ----------------------------- config (small, synthetic) -----------------------------
# head_dim = 128 matches real Mixtral and keeps every per-head slice / store
# lane-aligned; tensors stay tiny (B*S = 16 rows).
BATCH = 2
SEQ = 8
NUM_HEADS = 4
NUM_KV_HEADS = 2
HEAD_DIM = 128
HIDDEN = NUM_HEADS * HEAD_DIM           # 512
N_REP = NUM_HEADS // NUM_KV_HEADS       # 2
ROPE_THETA = 10000.0


# ----------------------------- tiling helper -----------------------------
def _pick_tile(dim, target, align):
    """Largest multiple-of-`align` divisor of `dim` that is <= target."""
    if dim <= target:
        return dim
    t = (target // align) * align
    while t >= align:
        if dim % t == 0:
            return t
        t -= align
    # TODO(synk): pad + masked tail instead of full-dim fallback for dims with
    # no aligned divisor (full-dim tiles can exceed scoped VMEM on v7x).
    return dim


# ----------------------------- tiled matmul kernel (projections) -----------------------------
def _matmul_kernel(x_ref, w_ref, o_ref, acc_ref):
    # x: [tm, tk], w: [tk, tn] (weight pre-transposed at load time), acc: [tm, tn] f32
    @pl.when(pl.program_id(2) == 0)
    def _init():
        acc_ref[...] = jnp.zeros_like(acc_ref)

    acc_ref[...] += jnp.dot(x_ref[...], w_ref[...],
                            preferred_element_type=jnp.float32)

    @pl.when(pl.program_id(2) == pl.num_programs(2) - 1)
    def _finalize():
        o_ref[...] = acc_ref[...].astype(o_ref.dtype)


def pallas_linear(x, w_t, *, tm=256, tn=256, tk=512):
    """y = x @ w_t ; x: [M, K], w_t: [K, N] = nn.Linear weight transposed once."""
    M, K = x.shape
    _, N = w_t.shape
    tm = _pick_tile(M, tm, 8)
    tn = _pick_tile(N, tn, 128)
    tk = _pick_tile(K, tk, 128)
    grid = (M // tm, N // tn, K // tk)
    return pl.pallas_call(
        _matmul_kernel,
        out_shape=jax.ShapeDtypeStruct((M, N), x.dtype),
        grid=grid,
        in_specs=[
            pl.BlockSpec((tm, tk), lambda i, j, k: (i, k)),
            pl.BlockSpec((tk, tn), lambda i, j, k: (k, j)),
        ],
        out_specs=pl.BlockSpec((tm, tn), lambda i, j, k: (i, j)),
        scratch_shapes=[pltpu.VMEM((tm, tn), jnp.float32)],
        compiler_params=pltpu.CompilerParams(
            dimension_semantics=("parallel", "parallel", "arbitrary")),
    )(x, w_t)


# ----------------------------- flash attention kernel -----------------------------
def _flash_attention_kernel(q_ref, k_ref, v_ref, ropeq_ref, ropek_ref,
                            o_ref, m_ref, l_ref, acc_ref):
    # Per grid step (b, g, qi, ki):
    #   q_ref:      [tq,  n_rep*D]   query heads of kv group g, q block qi
    #   k_ref/v_ref:[tkv, D]         kv head g, kv block ki
    #   ropeq_ref:  [tq,  D]         [cos/sqrt(D) | sin/sqrt(D)]  (unique halves)
    #   ropek_ref:  [tkv, D]         [cos | sin]
    #   o_ref:      [tq,  n_rep*D]   lane-dense output slab (written at last ki)
    #   m_ref/l_ref:[n_rep, tq, 1]   f32 running max / sum (flash state)
    #   acc_ref:    [tq,  n_rep*D]   f32 running PV accumulator
    qi = pl.program_id(2)
    ki = pl.program_id(3)
    tq = q_ref.shape[0]
    tkv, D = k_ref.shape
    Dh = D // 2
    n_rep = q_ref.shape[1] // D
    dt = q_ref.dtype                     # MXU operand dtype follows the input

    @pl.when(ki == 0)
    def _init():
        m_ref[...] = jnp.full_like(m_ref, -jnp.inf)
        l_ref[...] = jnp.zeros_like(l_ref)
        acc_ref[...] = jnp.zeros_like(acc_ref)

    row0 = qi * tq
    col0 = ki * tkv

    # Skip kv blocks that lie entirely in the causal future of this q block.
    @pl.when(col0 <= row0 + tq - 1)
    def _compute():
        # RoPE on K: once per kv block, reused by all n_rep query heads.
        c_k = ropek_ref[:, :Dh]
        s_k = ropek_ref[:, Dh:]
        k1 = k_ref[:, :Dh].astype(jnp.float32)
        k2 = k_ref[:, Dh:].astype(jnp.float32)
        k1r = (k1 * c_k - k2 * s_k).astype(dt)
        k2r = (k2 * c_k + k1 * s_k).astype(dt)
        v = v_ref[...]

        c_q = ropeq_ref[:, :Dh]          # 1/sqrt(D) already folded in
        s_q = ropeq_ref[:, Dh:]

        # Causal mask built in-kernel (no HBM mask traffic).
        rows = row0 + lax.broadcasted_iota(jnp.int32, (tq, tkv), 0)
        cols = col0 + lax.broadcasted_iota(jnp.int32, (tq, tkv), 1)
        causal = cols <= rows

        for r in range(n_rep):                      # query heads of this kv group
            c0 = r * D
            q1 = q_ref[:, c0:c0 + Dh].astype(jnp.float32)
            q2 = q_ref[:, c0 + Dh:c0 + D].astype(jnp.float32)
            q1r = (q1 * c_q - q2 * s_q).astype(dt)
            q2r = (q2 * c_q + q1 * s_q).astype(dt)

            # rope(q) . rope(k) split over the two halves: slices + elementwise
            # + two MXU dots, no lane rotation anywhere.
            s = (lax.dot_general(q1r, k1r, (((1,), (1,)), ((), ())),
                                 preferred_element_type=jnp.float32)
                 + lax.dot_general(q2r, k2r, (((1,), (1,)), ((), ())),
                                   preferred_element_type=jnp.float32))
            s = jnp.where(causal, s, -1e30)

            # Online softmax update (flash) in f32.
            m_prev = m_ref[r]
            m_new = jnp.maximum(m_prev, jnp.max(s, axis=-1, keepdims=True))
            alpha = jnp.exp(m_prev - m_new)
            p = jnp.exp(s - m_new)
            l_ref[r] = alpha * l_ref[r] + jnp.sum(p, axis=-1, keepdims=True)
            acc_ref[:, c0:c0 + D] = (
                alpha * acc_ref[:, c0:c0 + D]
                + jnp.dot(p.astype(v.dtype), v, preferred_element_type=jnp.float32))
            m_ref[r] = m_new

    @pl.when(ki == pl.num_programs(3) - 1)
    def _finalize():
        # Exact divide: it runs once per output (epilogue), not per kv block,
        # so exactness is free; swap to pl.reciprocal(..., approx=True) if the
        # EUP path is preferred.
        for r in range(n_rep):
            c0 = r * D
            acc_ref[:, c0:c0 + D] = acc_ref[:, c0:c0 + D] / l_ref[r]
        # Single lane-dense store of the whole group's output slab.
        o_ref[...] = acc_ref[...].astype(o_ref.dtype)


def pallas_flash_attention(q, k, v, rope_q, rope_k, *, tq_target=128, tkv_target=128):
    """q: [B,S,nH*D], k/v: [B,S,nKV*D], rope_q/rope_k: [S,D] packed half tables."""
    B, S, Hq = q.shape
    Hkv = k.shape[-1]
    D = rope_q.shape[-1]
    n_kv = Hkv // D
    n_rep = (Hq // D) // n_kv
    grp = n_rep * D

    # Block-shape legality for the minor (lane) dim: per-group Q/O blocks and
    # per-head K/V blocks must be 128-multiples (real Mixtral D=128) or full.
    if not (grp % 128 == 0 or grp == Hq) or not (D % 128 == 0 or D == Hkv):
        raise ValueError("head_dim (and n_rep*head_dim) must be a multiple of 128 "
                         "or equal to the full head axis for lane-aligned blocking")

    tq = _pick_tile(S, tq_target, 8)
    tkv = _pick_tile(S, tkv_target, 8)
    grid = (B, n_kv, S // tq, S // tkv)

    return pl.pallas_call(
        _flash_attention_kernel,
        out_shape=jax.ShapeDtypeStruct((B, S, Hq), q.dtype),
        grid=grid,
        in_specs=[
            pl.BlockSpec((None, tq, grp), lambda b, g, qi, ki: (b, qi, g)),
            pl.BlockSpec((None, tkv, D), lambda b, g, qi, ki: (b, ki, g)),
            pl.BlockSpec((None, tkv, D), lambda b, g, qi, ki: (b, ki, g)),
            pl.BlockSpec((tq, D), lambda b, g, qi, ki: (qi, 0)),
            pl.BlockSpec((tkv, D), lambda b, g, qi, ki: (ki, 0)),
        ],
        out_specs=pl.BlockSpec((None, tq, grp), lambda b, g, qi, ki: (b, qi, g)),
        scratch_shapes=[
            pltpu.VMEM((n_rep, tq, 1), jnp.float32),     # m (running max)
            pltpu.VMEM((n_rep, tq, 1), jnp.float32),     # l (running sum)
            pltpu.VMEM((tq, grp), jnp.float32),          # acc (PV accumulator slab)
        ],
        compiler_params=pltpu.CompilerParams(
            dimension_semantics=("parallel", "parallel", "parallel", "arbitrary")),
    )(q, k, v, rope_q, rope_k)


# ----------------------------- rope helpers (host-side, computed once) -----------------------------
def rope_half_tables(seq_len, dim, base):
    """Unique cos/sin halves [S, D/2] (the two halves of the full table are equal)."""
    inv_freq = 1.0 / (base ** (jnp.arange(0, dim, 2, dtype=jnp.float32) / dim))
    t = jnp.arange(seq_len, dtype=jnp.float32)
    freqs = jnp.outer(t, inv_freq)                  # [S, D/2]
    return jnp.cos(freqs), jnp.sin(freqs)


def prepare_params(raw):
    """One-time prep: fuse q/k/v weights and transpose nn.Linear [out,in] -> [in,out]."""
    return {
        "w_qkv_t": jnp.concatenate([raw["wq"].T, raw["wk"].T, raw["wv"].T], axis=1),
        "wo_t": raw["wo"].T,
    }


# ----------------------------- module forward -----------------------------
def mixtral_attention_forward(params, hidden_states):
    """hidden_states: [B, S, H]; causal attention (is_causal=True), no KV cache."""
    B, S, H = hidden_states.shape
    x2d = hidden_states.reshape(B * S, H)

    q_w = NUM_HEADS * HEAD_DIM
    kv_w = NUM_KV_HEADS * HEAD_DIM

    # Fused q/k/v projection: single tiled matmul, slice once.
    qkv = pallas_linear(x2d, params["w_qkv_t"])                 # [B*S, q_w+2*kv_w]
    q = qkv[:, :q_w].reshape(B, S, q_w)
    k = qkv[:, q_w:q_w + kv_w].reshape(B, S, kv_w)
    v = qkv[:, q_w + kv_w:].reshape(B, S, kv_w)

    # position_ids = arange(S) for every batch -> shared packed [S, D] tables;
    # 1/sqrt(D) folded into the Q-side table.
    cos_h, sin_h = rope_half_tables(S, HEAD_DIM, ROPE_THETA)
    inv_sqrt_d = 1.0 / math.sqrt(HEAD_DIM)
    rope_q = jnp.concatenate([cos_h * inv_sqrt_d, sin_h * inv_sqrt_d], axis=-1)
    rope_k = jnp.concatenate([cos_h, sin_h], axis=-1)

    attn = pallas_flash_attention(q, k, v, rope_q, rope_k)      # [B, S, nH*D]

    out = pallas_linear(attn.reshape(B * S, q_w), params["wo_t"]).reshape(B, S, H)
    return out


# ----------------------------- pure-JAX reference -----------------------------
def reference_forward(raw, hidden_states):
    B, S, H = hidden_states.shape
    q = hidden_states @ raw["wq"].T
    k = hidden_states @ raw["wk"].T
    v = hidden_states @ raw["wv"].T
    q = q.reshape(B, S, NUM_HEADS, HEAD_DIM).transpose(0, 2, 1, 3)
    k = k.reshape(B, S, NUM_KV_HEADS, HEAD_DIM).transpose(0, 2, 1, 3)
    v = v.reshape(B, S, NUM_KV_HEADS, HEAD_DIM).transpose(0, 2, 1, 3)

    cos_h, sin_h = rope_half_tables(S, HEAD_DIM, ROPE_THETA)
    cos = jnp.concatenate([cos_h, cos_h], axis=-1)[None, None]
    sin = jnp.concatenate([sin_h, sin_h], axis=-1)[None, None]

    def rotate_half(x):
        x1 = x[..., : x.shape[-1] // 2]
        x2 = x[..., x.shape[-1] // 2:]
        return jnp.concatenate([-x2, x1], axis=-1)

    q = q * cos + rotate_half(q) * sin
    k = k * cos + rotate_half(k) * sin

    k = jnp.repeat(k, N_REP, axis=1)
    v = jnp.repeat(v, N_REP, axis=1)

    i = jnp.arange(S)[:, None]
    j = jnp.arange(S)[None, :]
    mask = jnp.where(j <= i, 0.0, jnp.finfo(jnp.float32).min)[None, None]

    scores = jnp.einsum("bhqd,bhkd->bhqk", q, k) / math.sqrt(HEAD_DIM)
    scores = scores + mask
    w = jax.nn.softmax(scores.astype(jnp.float32), axis=-1).astype(q.dtype)
    attn = jnp.einsum("bhqk,bhkd->bhqd", w, v)
    attn = attn.transpose(0, 2, 1, 3).reshape(B, S, H)
    return attn @ raw["wo"].T


# ----------------------------- main -----------------------------
if __name__ == "__main__":
    key = jax.random.PRNGKey(0)
    k_x, k_q, k_k, k_v, k_o = jax.random.split(key, 5)

    hidden_states = jax.random.normal(k_x, (BATCH, SEQ, HIDDEN), dtype=jnp.float32)

    # nn.Linear weights are [out_features, in_features] (PyTorch layout)
    raw_params = {
        "wq": 0.05 * jax.random.normal(k_q, (NUM_HEADS * HEAD_DIM, HIDDEN), jnp.float32),
        "wk": 0.05 * jax.random.normal(k_k, (NUM_KV_HEADS * HEAD_DIM, HIDDEN), jnp.float32),
        "wv": 0.05 * jax.random.normal(k_v, (NUM_KV_HEADS * HEAD_DIM, HIDDEN), jnp.float32),
        "wo": 0.05 * jax.random.normal(k_o, (HIDDEN, NUM_HEADS * HEAD_DIM), jnp.float32),
    }
    params = prepare_params(raw_params)   # fuse + transpose once, outside the hot path

    fwd = jax.jit(mixtral_attention_forward)
    out = fwd(params, hidden_states)
    out = jax.block_until_ready(out)

    ref = reference_forward(raw_params, hidden_states)
    assert out.shape == (BATCH, SEQ, HIDDEN)
    max_diff = jnp.max(jnp.abs(out - ref))
    assert jnp.allclose(out, ref, atol=5e-3, rtol=5e-3), f"max abs diff = {max_diff}"

    print("KERNEL_OK")
</pallas_src>

<mosaic_0001>
module attributes {stable_mosaic.version = 11 : i64} {
  func.func @_matmul_kernel(%arg0: i32, %arg1: i32, %arg2: i32, %arg3: memref<16x512xf32, #tpu.memory_space<vmem>>, %arg4: memref<512x256xf32, #tpu.memory_space<vmem>>, %arg5: memref<16x256xf32, #tpu.memory_space<vmem>>, %arg6: memref<16x256xf32, #tpu.memory_space<vmem>>) attributes {dimension_semantics = [#tpu.dimension_semantics<parallel>, #tpu.dimension_semantics<parallel>, #tpu.dimension_semantics<arbitrary>], iteration_bounds = array<i64: 1, 4, 1>, scalar_prefetch = 0 : i64, scratch_operands = 1 : i64, tpu.core_type = #tpu.core_type<tc>, window_params = [{transform_indices = @transform_0, window_bounds = array<i64: 16, 512>}, {transform_indices = @transform_1, window_bounds = array<i64: 512, 256>}, {transform_indices = @transform_2, window_bounds = array<i64: 16, 256>}]} {
    %c0_i32 = arith.constant 0 : i32
    %0 = arith.cmpi eq, %arg2, %c0_i32 : i32
    %1 = arith.extui %0 : i1 to i32
    %c0_i32_0 = arith.constant 0 : i32
    %2 = arith.cmpi ne, %1, %c0_i32_0 : i32
    scf.if %2 {
      %cst_10 = arith.constant 0.000000e+00 : f32
      %12 = vector.broadcast %cst_10 : f32 to vector<16x256xf32>
      %c0_11 = arith.constant 0 : index
      %c0_12 = arith.constant 0 : index
      %13 = vector.load %arg6[%c0_11, %c0_12] : memref<16x256xf32, #tpu.memory_space<vmem>>, vector<16x256xf32>
      tpu.vector_store %arg6[%c0_11, %c0_12], %12 {strides = array<i32>} : memref<16x256xf32, #tpu.memory_space<vmem>>, vector<16x256xf32>,
    } else {
    }
    %c0 = arith.constant 0 : index
    %c0_1 = arith.constant 0 : index
    %3 = vector.load %arg6[%c0, %c0_1] : memref<16x256xf32, #tpu.memory_space<vmem>>, vector<16x256xf32>
    %c0_2 = arith.constant 0 : index
    %c0_3 = arith.constant 0 : index
    %4 = vector.load %arg3[%c0_2, %c0_3] : memref<16x512xf32, #tpu.memory_space<vmem>>, vector<16x512xf32>
    %c0_4 = arith.constant 0 : index
    %c0_5 = arith.constant 0 : index
    %5 = vector.load %arg4[%c0_4, %c0_5] : memref<512x256xf32, #tpu.memory_space<vmem>>, vector<512x256xf32>
    %cst = arith.constant dense<0.000000e+00> : vector<16x256xf32>
    %6 = tpu.matmul %4, %5, %cst {dimension_numbers = #tpu.dot_dimension_numbers<[1], [0], [0], [1], [0, 0, 1, 1], [], []>} : vector<16x512xf32>, vector<512x256xf32>, vector<16x256xf32> -> vector<16x256xf32>
    %7 = arith.addf %3, %6 : vector<16x256xf32>
    %c0_6 = arith.constant 0 : index
    %c0_7 = arith.constant 0 : index
    %8 = vector.load %arg6[%c0_6, %c0_7] : memref<16x256xf32, #tpu.memory_space<vmem>>, vector<16x256xf32>
    tpu.vector_store %arg6[%c0_6, %c0_7], %7 {strides = array<i32>} : memref<16x256xf32, #tpu.memory_space<vmem>>, vector<16x256xf32>,
    %c0_i32_8 = arith.constant 0 : i32
    %9 = arith.cmpi eq, %arg2, %c0_i32_8 : i32
    %10 = arith.extui %9 : i1 to i32
    %c0_i32_9 = arith.constant 0 : i32
    %11 = arith.cmpi ne, %10, %c0_i32_9 : i32
    scf.if %11 {
      %c0_10 = arith.constant 0 : index
      %c0_11 = arith.constant 0 : index
      %12 = vector.load %arg6[%c0_10, %c0_11] : memref<16x256xf32, #tpu.memory_space<vmem>>, vector<16x256xf32>
      %c0_12 = arith.constant 0 : index
      %c0_13 = arith.constant 0 : index
      %13 = vector.load %arg5[%c0_12, %c0_13] : memref<16x256xf32, #tpu.memory_space<vmem>>, vector<16x256xf32>
      tpu.vector_store %arg5[%c0_12, %c0_13], %12 {strides = array<i32>} : memref<16x256xf32, #tpu.memory_space<vmem>>, vector<16x256xf32>,
    } else {
    }
    return
  }
  func.func @transform_0(%arg0: i32, %arg1: i32, %arg2: i32) -> (i32, i32) {
    %c0_i32 = arith.constant 0 : i32
    return %arg0, %arg2 : i32, i32
  }
  func.func @transform_1(%arg0: i32, %arg1: i32, %arg2: i32) -> (i32, i32) {
    %c0_i32 = arith.constant 0 : i32
    return %arg2, %arg1 : i32, i32
  }
  func.func @transform_2(%arg0: i32, %arg1: i32, %arg2: i32) -> (i32, i32) {
    %c0_i32 = arith.constant 0 : i32
    return %arg0, %arg1 : i32, i32
  }
}

module attributes {stable_mosaic.version = 11 : i64} {
  func.func @_flash_attention_kernel(%arg0: i32, %arg1: i32, %arg2: i32, %arg3: i32, %arg4: memref<1x8x256xf32, #tpu.memory_space<vmem>>, %arg5: memref<1x8x128xf32, #tpu.memory_space<vmem>>, %arg6: memref<1x8x128xf32, #tpu.memory_space<vmem>>, %arg7: memref<8x128xf32, #tpu.memory_space<vmem>>, %arg8: memref<8x128xf32, #tpu.memory_space<vmem>>, %arg9: memref<1x8x256xf32, #tpu.memory_space<vmem>>, %arg10: memref<2x8x1xf32, #tpu.memory_space<vmem>>, %arg11: memref<2x8x1xf32, #tpu.memory_space<vmem>>, %arg12: memref<8x256xf32, #tpu.memory_space<vmem>>) attributes {dimension_semantics = [#tpu.dimension_semantics<parallel>, #tpu.dimension_semantics<parallel>, #tpu.dimension_semantics<parallel>, #tpu.dimension_semantics<arbitrary>], iteration_bounds = array<i64: 2, 2, 1, 1>, scalar_prefetch = 0 : i64, scratch_operands = 3 : i64, tpu.core_type = #tpu.core_type<tc>, window_params = [{transform_indices = @transform_0, window_bounds = array<i64: 1, 8, 256>}, {transform_indices = @transform_1, window_bounds = array<i64: 1, 8, 128>}, {transform_indices = @transform_2, window_bounds = array<i64: 1, 8, 128>}, {transform_indices = @transform_3, window_bounds = array<i64: 8, 128>}, {transform_indices = @transform_4, window_bounds = array<i64: 8, 128>}, {transform_indices = @transform_5, window_bounds = array<i64: 1, 8, 256>}]} {
    %c0_i32 = arith.constant 0 : i32
    %0 = arith.cmpi eq, %arg3, %c0_i32 : i32
    %1 = arith.extui %0 : i1 to i32
    %c0_i32_0 = arith.constant 0 : i32
    %2 = arith.cmpi ne, %1, %c0_i32_0 : i32
    scf.if %2 {
      %cst = arith.constant 0xFF800000 : f32
      %13 = vector.broadcast %cst : f32 to vector<2x8x1xf32>
      %c0 = arith.constant 0 : index
      %c0_6 = arith.constant 0 : index
      %c0_7 = arith.constant 0 : index
      %14 = vector.load %arg10[%c0, %c0_6, %c0_7] : memref<2x8x1xf32, #tpu.memory_space<vmem>>, vector<2x8x1xf32>
      tpu.vector_store %arg10[%c0, %c0_6, %c0_7], %13 {strides = array<i32>} : memref<2x8x1xf32, #tpu.memory_space<vmem>>, vector<2x8x1xf32>,
      %cst_8 = arith.constant 0.000000e+00 : f32
      %15 = vector.broadcast %cst_8 : f32 to vector<2x8x1xf32>
      %c0_9 = arith.constant 0 : index
      %c0_10 = arith.constant 0 : index
      %c0_11 = arith.constant 0 : index
      %16 = vector.load %arg11[%c0_9, %c0_10, %c0_11] : memref<2x8x1xf32, #tpu.memory_space<vmem>>, vector<2x8x1xf32>
      tpu.vector_store %arg11[%c0_9, %c0_10, %c0_11], %15 {strides = array<i32>} : memref<2x8x1xf32, #tpu.memory_space<vmem>>, vector<2x8x1xf32>,
      %cst_12 = arith.constant 0.000000e+00 : f32
      %17 = vector.broadcast %cst_12 : f32 to vector<8x256xf32>
      %c0_13 = arith.constant 0 : index
      %c0_14 = arith.constant 0 : index
      %18 = vector.load %arg12[%c0_13, %c0_14] : memref<8x256xf32, #tpu.memory_space<vmem>>, vector<8x256xf32>
      tpu.vector_store %arg12[%c0_13, %c0_14], %17 {strides = array<i32>} : memref<8x256xf32, #tpu.memory_space<vmem>>, vector<8x256xf32>,
    } else {
    }
    %c8_i32 = arith.constant 8 : i32
    %3 = arith.muli %arg2, %c8_i32 : i32
    %c8_i32_1 = arith.constant 8 : i32
    %4 = arith.muli %arg3, %c8_i32_1 : i32
    %c8_i32_2 = arith.constant 8 : i32
    %5 = arith.addi %3, %c8_i32_2 : i32
    %c1_i32 = arith.constant 1 : i32
    %6 = arith.subi %5, %c1_i32 : i32
    %7 = arith.cmpi sle, %4, %6 : i32
    %8 = arith.extui %7 : i1 to i32
    %c0_i32_3 = arith.constant 0 : i32
    %9 = arith.cmpi ne, %8, %c0_i32_3 : i32
    scf.if %9 {
      %c0 = arith.constant 0 : index
      %c0_6 = arith.constant 0 : index
      %13 = vector.load %arg8[%c0, %c0_6] : memref<8x128xf32, #tpu.memory_space<vmem>>, vector<8x64xf32>
      %c0_7 = arith.constant 0 : index
      %c64 = arith.constant 64 : index
      %14 = vector.load %arg8[%c0_7, %c64] : memref<8x128xf32, #tpu.memory_space<vmem>>, vector<8x64xf32>
      %c0_8 = arith.constant 0 : index
      %c0_9 = arith.constant 0 : index
      %c0_10 = arith.constant 0 : index
      %15 = vector.load %arg5[%c0_8, %c0_9, %c0_10] : memref<1x8x128xf32, #tpu.memory_space<vmem>>, vector<1x8x64xf32>
      %16 = vector.shape_cast %15 : vector<1x8x64xf32> to vector<8x64xf32>
      %c0_11 = arith.constant 0 : index
      %c0_12 = arith.constant 0 : index
      %c64_13 = arith.constant 64 : index
      %17 = vector.load %arg5[%c0_11, %c0_12, %c64_13] : memref<1x8x128xf32, #tpu.memory_space<vmem>>, vector<1x8x64xf32>
      %18 = vector.shape_cast %17 : vector<1x8x64xf32> to vector<8x64xf32>
      %19 = arith.mulf %16, %13 : vector<8x64xf32>
      %20 = arith.mulf %18, %14 : vector<8x64xf32>
      %21 = arith.subf %19, %20 : vector<8x64xf32>
      %22 = arith.mulf %18, %13 : vector<8x64xf32>
      %23 = arith.mulf %16, %14 : vector<8x64xf32>
      %24 = arith.addf %22, %23 : vector<8x64xf32>
      %c0_14 = arith.constant 0 : index
      %c0_15 = arith.constant 0 : index
      %c0_16 = arith.constant 0 : index
      %25 = vector.load %arg6[%c0_14, %c0_15, %c0_16] : memref<1x8x128xf32, #tpu.memory_space<vmem>>, vector<1x8x128xf32>
      %26 = vector.shape_cast %25 : vector<1x8x128xf32> to vector<8x128xf32>
      %c0_17 = arith.constant 0 : index
      %c0_18 = arith.constant 0 : index
      %27 = vector.load %arg7[%c0_17, %c0_18] : memref<8x128xf32, #tpu.memory_space<vmem>>, vector<8x64xf32>
      %c0_19 = arith.constant 0 : index
      %c64_20 = arith.constant 64 : index
      %28 = vector.load %arg7[%c0_19, %c64_20] : memref<8x128xf32, #tpu.memory_space<vmem>>, vector<8x64xf32>
      %29 = tpu.iota {dimensions = array<i32: 0>} : vector<8x8xi32>
      %30 = vector.broadcast %3 : i32 to vector<8x8xi32>
      %31 = arith.addi %30, %29 : vector<8x8xi32>
      %32 = tpu.iota {dimensions = array<i32: 1>} : vector<8x8xi32>
      %33 = vector.broadcast %4 : i32 to vector<8x8xi32>
      %34 = arith.addi %33, %32 : vector<8x8xi32>
      %35 = arith.cmpi sle, %34, %31 : vector<8x8xi32>
      %c0_21 = arith.constant 0 : index
      %c0_22 = arith.constant 0 : index
      %c0_23 = arith.constant 0 : index
      %36 = vector.load %arg4[%c0_21, %c0_22, %c0_23] : memref<1x8x256xf32, #tpu.memory_space<vmem>>, vector<1x8x64xf32>
      %37 = vector.shape_cast %36 : vector<1x8x64xf32> to vector<8x64xf32>
      %c0_24 = arith.constant 0 : index
      %c0_25 = arith.constant 0 : index
      %c64_26 = arith.constant 64 : index
      %38 = vector.load %arg4[%c0_24, %c0_25, %c64_26] : memref<1x8x256xf32, #tpu.memory_space<vmem>>, vector<1x8x64xf32>
      %39 = vector.shape_cast %38 : vector<1x8x64xf32> to vector<8x64xf32>
      %40 = arith.mulf %37, %27 : vector<8x64xf32>
      %41 = arith.mulf %39, %28 : vector<8x64xf32>
      %42 = arith.subf %40, %41 : vector<8x64xf32>
      %43 = arith.mulf %39, %27 : vector<8x64xf32>
      %44 = arith.mulf %37, %28 : vector<8x64xf32>
      %45 = arith.addf %43, %44 : vector<8x64xf32>
      %cst = arith.constant dense<0.000000e+00> : vector<8x8xf32>
      %46 = tpu.matmul %42, %21, %cst {dimension_numbers = #tpu.dot_dimension_numbers<[1], [1], [0], [0], [0, 0, 1, 0], [], []>} : vector<8x64xf32>, vector<8x64xf32>, vector<8x8xf32> -> vector<8x8xf32>
      %cst_27 = arith.constant dense<0.000000e+00> : vector<8x8xf32>
      %47 = tpu.matmul %45, %24, %cst_27 {dimension_numbers = #tpu.dot_dimension_numbers<[1], [1], [0], [0], [0, 0, 1, 0], [], []>} : vector<8x64xf32>, vector<8x64xf32>, vector<8x8xf32> -> vector<8x8xf32>
      %48 = arith.addf %46, %47 : vector<8x8xf32>
      %cst_28 = arith.constant -1.000000e+30 : f32
      %49 = vector.broadcast %cst_28 : f32 to vector<8x8xf32>
      %50 = arith.select %35, %48, %49 : vector<8x8xi1>, vector<8x8xf32>
      %c0_29 = arith.constant 0 : index
      %c0_30 = arith.constant 0 : index
      %c0_31 = arith.constant 0 : index
      %51 = vector.load %arg10[%c0_29, %c0_30, %c0_31] : memref<2x8x1xf32, #tpu.memory_space<vmem>>, vector<1x8x1xf32>
      %52 = vector.shape_cast %51 : vector<1x8x1xf32> to vector<8x1xf32>
      %cst_32 = arith.constant dense<0xFF800000> : vector<8xf32>
      %53 = vector.multi_reduction <maximumf>, %50, %cst_32 [1] : vector<8x8xf32> to vector<8xf32>
      %54 = vector.shape_cast %53 : vector<8xf32> to vector<8x1xf32>
      %55 = arith.maximumf %52, %54 : vector<8x1xf32>
      %56 = arith.subf %52, %55 : vector<8x1xf32>
      %57 = math.exp %56 : vector<8x1xf32>
      %58 = vector.broadcast %55 : vector<8x1xf32> to vector<8x8xf32>
      %59 = arith.subf %50, %58 : vector<8x8xf32>
      %60 = math.exp %59 : vector<8x8xf32>
      %c0_33 = arith.constant 0 : index
      %c0_34 = arith.constant 0 : index
      %c0_35 = arith.constant 0 : index
      %61 = vector.load %arg11[%c0_33, %c0_34, %c0_35] : memref<2x8x1xf32, #tpu.memory_space<vmem>>, vector<1x8x1xf32>
      %62 = vector.shape_cast %61 : vector<1x8x1xf32> to vector<8x1xf32>
      %63 = arith.mulf %57, %62 : vector<8x1xf32>
      %cst_36 = arith.constant dense<0.000000e+00> : vector<8xf32>
      %64 = vector.multi_reduction <add>, %60, %cst_36 [1] : vector<8x8xf32> to vector<8xf32>
      %65 = vector.shape_cast %64 : vector<8xf32> to vector<8x1xf32>
      %66 = arith.addf %63, %65 : vector<8x1xf32>
      %c0_37 = arith.constant 0 : index
      %c0_38 = arith.constant 0 : index
      %c0_39 = arith.constant 0 : index
      %67 = vector.load %arg11[%c0_37, %c0_38, %c0_39] : memref<2x8x1xf32, #tpu.memory_space<vmem>>, vector<1x8x1xf32>
      %68 = vector.shape_cast %67 : vector<1x8x1xf32> to vector<8x1xf32>
      %69 = vector.shape_cast %66 : vector<8x1xf32> to vector<1x8x1xf32>
      tpu.vector_store %arg11[%c0_37, %c0_38, %c0_39], %69 {strides = array<i32>} : memref<2x8x1xf32, #tpu.memory_space<vmem>>, vector<1x8x1xf32>,
      %c0_40 = arith.constant 0 : index
      %c0_41 = arith.constant 0 : index
      %70 = vector.load %arg12[%c0_40, %c0_41] : memref<8x256xf32, #tpu.memory_space<vmem>>, vector<8x128xf32>
      %71 = vector.broadcast %57 : vector<8x1xf32> to vector<8x128xf32>
      %72 = arith.mulf %71, %70 : vector<8x128xf32>
      %cst_42 = arith.constant dense<0.000000e+00> : vector<8x128xf32>
      %73 = tpu.matmul %60, %26, %cst_42 {dimension_numbers = #tpu.dot_dimension_numbers<[1], [0], [0], [1], [0, 0, 1, 1], [], []>} : vector<8x8xf32>, vector<8x128xf32>, vector<8x128xf32> -> vector<8x128xf32>
      %74 = arith.addf %72, %73 : vector<8x128xf32>
      %c0_43 = arith.constant 0 : index
      %c0_44 = arith.constant 0 : index
      %75 = vector.load %arg12[%c0_43, %c0_44] : memref<8x256xf32, #tpu.memory_space<vmem>>, vector<8x128xf32>
      tpu.vector_store %arg12[%c0_43, %c0_44], %74 {strides = array<i32>} : memref<8x256xf32, #tpu.memory_space<vmem>>, vector<8x128xf32>,
      %c0_45 = arith.constant 0 : index
      %c0_46 = arith.constant 0 : index
      %c0_47 = arith.constant 0 : index
      %76 = vector.load %arg10[%c0_45, %c0_46, %c0_47] : memref<2x8x1xf32, #tpu.memory_space<vmem>>, vector<1x8x1xf32>
      %77 = vector.shape_cast %76 : vector<1x8x1xf32> to vector<8x1xf32>
      %78 = vector.shape_cast %55 : vector<8x1xf32> to vector<1x8x1xf32>
      tpu.vector_store %arg10[%c0_45, %c0_46, %c0_47], %78 {strides = array<i32>} : memref<2x8x1xf32, #tpu.memory_space<vmem>>, vector<1x8x1xf32>,
      %c0_48 = arith.constant 0 : index
      %c0_49 = arith.constant 0 : index
      %c128 = arith.constant 128 : index
      %79 = vector.load %arg4[%c0_48, %c0_49, %c128] : memref<1x8x256xf32, #tpu.memory_space<vmem>>, vector<1x8x64xf32>
      %80 = vector.shape_cast %79 : vector<1x8x64xf32> to vector<8x64xf32>
      %c0_50 = arith.constant 0 : index
      %c0_51 = arith.constant 0 : index
      %c192 = arith.constant 192 : index
      %81 = vector.load %arg4[%c0_50, %c0_51, %c192] : memref<1x8x256xf32, #tpu.memory_space<vmem>>, vector<1x8x64xf32>
      %82 = vector.shape_cast %81 : vector<1x8x64xf32> to vector<8x64xf32>
      %83 = arith.mulf %80, %27 : vector<8x64xf32>
      %84 = arith.mulf %82, %28 : vector<8x64xf32>
      %85 = arith.subf %83, %84 : vector<8x64xf32>
      %86 = arith.mulf %82, %27 : vector<8x64xf32>
      %87 = arith.mulf %80, %28 : vector<8x64xf32>
      %88 = arith.addf %86, %87 : vector<8x64xf32>
      %cst_52 = arith.constant dense<0.000000e+00> : vector<8x8xf32>
      %89 = tpu.matmul %85, %21, %cst_52 {dimension_numbers = #tpu.dot_dimension_numbers<[1], [1], [0], [0], [0, 0, 1, 0], [], []>} : vector<8x64xf32>, vector<8x64xf32>, vector<8x8xf32> -> vector<8x8xf32>
      %cst_53 = arith.constant dense<0.000000e+00> : vector<8x8xf32>
      %90 = tpu.matmul %88, %24, %cst_53 {dimension_numbers = #tpu.dot_dimension_numbers<[1], [1], [0], [0], [0, 0, 1, 0], [], []>} : vector<8x64xf32>, vector<8x64xf32>, vector<8x8xf32> -> vector<8x8xf32>
      %91 = arith.addf %89, %90 : vector<8x8xf32>
      %cst_54 = arith.constant -1.000000e+30 : f32
      %92 = vector.broadcast %cst_54 : f32 to vector<8x8xf32>
      %93 = arith.select %35, %91, %92 : vector<8x8xi1>, vector<8x8xf32>
      %c1 = arith.constant 1 : index
      %c0_55 = arith.constant 0 : index
      %c0_56 = arith.constant 0 : index
      %94 = vector.load %arg10[%c1, %c0_55, %c0_56] : memref<2x8x1xf32, #tpu.memory_space<vmem>>, vector<1x8x1xf32>
      %95 = vector.shape_cast %94 : vector<1x8x1xf32> to vector<8x1xf32>
      %cst_57 = arith.constant dense<0xFF800000> : vector<8xf32>
      %96 = vector.multi_reduction <maximumf>, %93, %cst_57 [1] : vector<8x8xf32> to vector<8xf32>
      %97 = vector.shape_cast %96 : vector<8xf32> to vector<8x1xf32>
      %98 = arith.maximumf %95, %97 : vector<8x1xf32>
      %99 = arith.subf %95, %98 : vector<8x1xf32>
      %100 = math.exp %99 : vector<8x1xf32>
      %101 = vector.broadcast %98 : vector<8x1xf32> to vector<8x8xf32>
      %102 = arith.subf %93, %101 : vector<8x8xf32>
      %103 = math.exp %102 : vector<8x8xf32>
      %c1_58 = arith.constant 1 : index
      %c0_59 = arith.constant 0 : index
      %c0_60 = arith.constant 0 : index
      %104 = vector.load %arg11[%c1_58, %c0_59, %c0_60] : memref<2x8x1xf32, #tpu.memory_space<vmem>>, vector<1x8x1xf32>
      %105 = vector.shape_cast %104 : vector<1x8x1xf32> to vector<8x1xf32>
      %106 = arith.mulf %100, %105 : vector<8x1xf32>
      %cst_61 = arith.constant dense<0.000000e+00> : vector<8xf32>
      %107 = vector.multi_reduction <add>, %103, %cst_61 [1] : vector<8x8xf32> to vector<8xf32>
      %108 = vector.shape_cast %107 : vector<8xf32> to vector<8x1xf32>
      %109 = arith.addf %106, %108 : vector<8x1xf32>
      %c1_62 = arith.constant 1 : index
      %c0_63 = arith.constant 0 : index
      %c0_64 = arith.constant 0 : index
      %110 = vector.load %arg11[%c1_62, %c0_63, %c0_64] : memref<2x8x1xf32, #tpu.memory_space<vmem>>, vector<1x8x1xf32>
      %111 = vector.shape_cast %110 : vector<1x8x1xf32> to vector<8x1xf32>
      %112 = vector.shape_cast %109 : vector<8x1xf32> to vector<1x8x1xf32>
      tpu.vector_store %arg11[%c1_62, %c0_63, %c0_64], %112 {strides = array<i32>} : memref<2x8x1xf32, #tpu.memory_space<vmem>>, vector<1x8x1xf32>,
      %c0_65 = arith.constant 0 : index
      %c128_66 = arith.constant 128 : index
      %113 = vector.load %arg12[%c0_65, %c128_66] : memref<8x256xf32, #tpu.memory_space<vmem>>, vector<8x128xf32>
      %114 = vector.broadcast %100 : vector<8x1xf32> to vector<8x128xf32>
      %115 = arith.mulf %114, %113 : vector<8x128xf32>
      %cst_67 = arith.constant dense<0.000000e+00> : vector<8x128xf32>
      %116 = tpu.matmul %103, %26, %cst_67 {dimension_numbers = #tpu.dot_dimension_numbers<[1], [0], [0], [1], [0, 0, 1, 1], [], []>} : vector<8x8xf32>, vector<8x128xf32>, vector<8x128xf32> -> vector<8x128xf32>
      %117 = arith.addf %115, %116 : vector<8x128xf32>
      %c0_68 = arith.constant 0 : index
      %c128_69 = arith.constant 128 : index
      %118 = vector.load %arg12[%c0_68, %c128_69] : memref<8x256xf32, #tpu.memory_space<vmem>>, vector<8x128xf32>
      tpu.vector_store %arg12[%c0_68, %c128_69], %117 {strides = array<i32>} : memref<8x256xf32, #tpu.memory_space<vmem>>, vector<8x128xf32>,
      %c1_70 = arith.constant 1 : index
      %c0_71 = arith.constant 0 : index
      %c0_72 = arith.constant 0 : index
      %119 = vector.load %arg10[%c1_70, %c0_71, %c0_72] : memref<2x8x1xf32, #tpu.memory_space<vmem>>, vector<1x8x1xf32>
      %120 = vector.shape_cast %119 : vector<1x8x1xf32> to vector<8x1xf32>
      %121 = vector.shape_cast %98 : vector<8x1xf32> to vector<1x8x1xf32>
      tpu.vector_store %arg10[%c1_70, %c0_71, %c0_72], %121 {strides = array<i32>} : memref<2x8x1xf32, #tpu.memory_space<vmem>>, vector<1x8x1xf32>,
    } else {
    }
    %c0_i32_4 = arith.constant 0 : i32
    %10 = arith.cmpi eq, %arg3, %c0_i32_4 : i32
    %11 = arith.extui %10 : i1 to i32
    %c0_i32_5 = arith.constant 0 : i32
    %12 = arith.cmpi ne, %11, %c0_i32_5 : i32
    scf.if %12 {
      %c0 = arith.constant 0 : index
      %c0_6 = arith.constant 0 : index
      %13 = vector.load %arg12[%c0, %c0_6] : memref<8x256xf32, #tpu.memory_space<vmem>>, vector<8x128xf32>
      %c0_7 = arith.constant 0 : index
      %c0_8 = arith.constant 0 : index
      %c0_9 = arith.constant 0 : index
      %14 = vector.load %arg11[%c0_7, %c0_8, %c0_9] : memref<2x8x1xf32, #tpu.memory_space<vmem>>, vector<1x8x1xf32>
      %15 = vector.shape_cast %14 : vector<1x8x1xf32> to vector<8x1xf32>
      %16 = vector.broadcast %15 : vector<8x1xf32> to vector<8x128xf32>
      %17 = arith.divf %13, %16 : vector<8x128xf32>
      %c0_10 = arith.constant 0 : index
      %c0_11 = arith.constant 0 : index
      %18 = vector.load %arg12[%c0_10, %c0_11] : memref<8x256xf32, #tpu.memory_space<vmem>>, vector<8x128xf32>
      tpu.vector_store %arg12[%c0_10, %c0_11], %17 {strides = array<i32>} : memref<8x256xf32, #tpu.memory_space<vmem>>, vector<8x128xf32>,
      %c0_12 = arith.constant 0 : index
      %c128 = arith.constant 128 : index
      %19 = vector.load %arg12[%c0_12, %c128] : memref<8x256xf32, #tpu.memory_space<vmem>>, vector<8x128xf32>
      %c1 = arith.constant 1 : index
      %c0_13 = arith.constant 0 : index
      %c0_14 = arith.constant 0 : index
      %20 = vector.load %arg11[%c1, %c0_13, %c0_14] : memref<2x8x1xf32, #tpu.memory_space<vmem>>, vector<1x8x1xf32>
      %21 = vector.shape_cast %20 : vector<1x8x1xf32> to vector<8x1xf32>
      %22 = vector.broadcast %21 : vector<8x1xf32> to vector<8x128xf32>
      %23 = arith.divf %19, %22 : vector<8x128xf32>
      %c0_15 = arith.constant 0 : index
      %c128_16 = arith.constant 128 : index
      %24 = vector.load %arg12[%c0_15, %c128_16] : memref<8x256xf32, #tpu.memory_space<vmem>>, vector<8x128xf32>
      tpu.vector_store %arg12[%c0_15, %c128_16], %23 {strides = array<i32>} : memref<8x256xf32, #tpu.memory_space<vmem>>, vector<8x128xf32>,
      %c0_17 = arith.constant 0 : index
      %c0_18 = arith.constant 0 : index
      %25 = vector.load %arg12[%c0_17, %c0_18] : memref<8x256xf32, #tpu.memory_space<vmem>>, vector<8x256xf32>
      %c0_19 = arith.constant 0 : index
      %c0_20 = arith.constant 0 : index
      %c0_21 = arith.constant 0 : index
      %26 = vector.load %arg9[%c0_19, %c0_20, %c0_21] : memref<1x8x256xf32, #tpu.memory_space<vmem>>, vector<1x8x256xf32>
      %27 = vector.shape_cast %26 : vector<1x8x256xf32> to vector<8x256xf32>
      %28 = vector.shape_cast %25 : vector<8x256xf32> to vector<1x8x256xf32>
      tpu.vector_store %arg9[%c0_19, %c0_20, %c0_21], %28 {strides = array<i32>} : memref<1x8x256xf32, #tpu.memory_space<vmem>>, vector<1x8x256xf32>,
    } else {
    }
    return
  }
  func.func @transform_0(%arg0: i32, %arg1: i32, %arg2: i32, %arg3: i32) -> (i32, i32, i32) {
    %c0_i32 = arith.constant 0 : i32
    return %arg0, %arg2, %arg1 : i32, i32, i32
  }
  func.func @transform_1(%arg0: i32, %arg1: i32, %arg2: i32, %arg3: i32) -> (i32, i32, i32) {
    %c0_i32 = arith.constant 0 : i32
    return %arg0, %arg3, %arg1 : i32, i32, i32
  }
  func.func @transform_2(%arg0: i32, %arg1: i32, %arg2: i32, %arg3: i32) -> (i32, i32, i32) {
    %c0_i32 = arith.constant 0 : i32
    return %arg0, %arg3, %arg1 : i32, i32, i32
  }
  func.func @transform_3(%arg0: i32, %arg1: i32, %arg2: i32, %arg3: i32) -> (i32, i32) {
    %c0_i32 = arith.constant 0 : i32
    %c0_i32_0 = arith.constant 0 : i32
    return %arg2, %c0_i32 : i32, i32
  }
  func.func @transform_4(%arg0: i32, %arg1: i32, %arg2: i32, %arg3: i32) -> (i32, i32) {
    %c0_i32 = arith.constant 0 : i32
    %c0_i32_0 = arith.constant 0 : i32
    return %arg3, %c0_i32 : i32, i32
  }
  func.func @transform_5(%arg0: i32, %arg1: i32, %arg2: i32, %arg3: i32) -> (i32, i32, i32) {
    %c0_i32 = arith.constant 0 : i32
    return %arg0, %arg2, %arg1 : i32, i32, i32
  }
}

module attributes {stable_mosaic.version = 11 : i64} {
  func.func @_matmul_kernel(%arg0: i32, %arg1: i32, %arg2: i32, %arg3: memref<16x512xf32, #tpu.memory_space<vmem>>, %arg4: memref<512x256xf32, #tpu.memory_space<vmem>>, %arg5: memref<16x256xf32, #tpu.memory_space<vmem>>, %arg6: memref<16x256xf32, #tpu.memory_space<vmem>>) attributes {dimension_semantics = [#tpu.dimension_semantics<parallel>, #tpu.dimension_semantics<parallel>, #tpu.dimension_semantics<arbitrary>], iteration_bounds = array<i64: 1, 2, 1>, scalar_prefetch = 0 : i64, scratch_operands = 1 : i64, tpu.core_type = #tpu.core_type<tc>, window_params = [{transform_indices = @transform_0, window_bounds = array<i64: 16, 512>}, {transform_indices = @transform_1, window_bounds = array<i64: 512, 256>}, {transform_indices = @transform_2, window_bounds = array<i64: 16, 256>}]} {
    %c0_i32 = arith.constant 0 : i32
    %0 = arith.cmpi eq, %arg2, %c0_i32 : i32
    %1 = arith.extui %0 : i1 to i32
    %c0_i32_0 = arith.constant 0 : i32
    %2 = arith.cmpi ne, %1, %c0_i32_0 : i32
    scf.if %2 {
      %cst_10 = arith.constant 0.000000e+00 : f32
      %12 = vector.broadcast %cst_10 : f32 to vector<16x256xf32>
      %c0_11 = arith.constant 0 : index
      %c0_12 = arith.constant 0 : index
      %13 = vector.load %arg6[%c0_11, %c0_12] : memref<16x256xf32, #tpu.memory_space<vmem>>, vector<16x256xf32>
      tpu.vector_store %arg6[%c0_11, %c0_12], %12 {strides = array<i32>} : memref<16x256xf32, #tpu.memory_space<vmem>>, vector<16x256xf32>,
    } else {
    }
    %c0 = arith.constant 0 : index
    %c0_1 = arith.constant 0 : index
    %3 = vector.load %arg6[%c0, %c0_1] : memref<16x256xf32, #tpu.memory_space<vmem>>, vector<16x256xf32>
    %c0_2 = arith.constant 0 : index
    %c0_3 = arith.constant 0 : index
    %4 = vector.load %arg3[%c0_2, %c0_3] : memref<16x512xf32, #tpu.memory_space<vmem>>, vector<16x512xf32>
    %c0_4 = arith.constant 0 : index
    %c0_5 = arith.constant 0 : index
    %5 = vector.load %arg4[%c0_4, %c0_5] : memref<512x256xf32, #tpu.memory_space<vmem>>, vector<512x256xf32>
    %cst = arith.constant dense<0.000000e+00> : vector<16x256xf32>
    %6 = tpu.matmul %4, %5, %cst {dimension_numbers = #tpu.dot_dimension_numbers<[1], [0], [0], [1], [0, 0, 1, 1], [], []>} : vector<16x512xf32>, vector<512x256xf32>, vector<16x256xf32> -> vector<16x256xf32>
    %7 = arith.addf %3, %6 : vector<16x256xf32>
    %c0_6 = arith.constant 0 : index
    %c0_7 = arith.constant 0 : index
    %8 = vector.load %arg6[%c0_6, %c0_7] : memref<16x256xf32, #tpu.memory_space<vmem>>, vector<16x256xf32>
    tpu.vector_store %arg6[%c0_6, %c0_7], %7 {strides = array<i32>} : memref<16x256xf32, #tpu.memory_space<vmem>>, vector<16x256xf32>,
    %c0_i32_8 = arith.constant 0 : i32
    %9 = arith.cmpi eq, %arg2, %c0_i32_8 : i32
    %10 = arith.extui %9 : i1 to i32
    %c0_i32_9 = arith.constant 0 : i32
    %11 = arith.cmpi ne, %10, %c0_i32_9 : i32
    scf.if %11 {
      %c0_10 = arith.constant 0 : index
      %c0_11 = arith.constant 0 : index
      %12 = vector.load %arg6[%c0_10, %c0_11] : memref<16x256xf32, #tpu.memory_space<vmem>>, vector<16x256xf32>
      %c0_12 = arith.constant 0 : index
      %c0_13 = arith.constant 0 : index
      %13 = vector.load %arg5[%c0_12, %c0_13] : memref<16x256xf32, #tpu.memory_space<vmem>>, vector<16x256xf32>
      tpu.vector_store %arg5[%c0_12, %c0_13], %12 {strides = array<i32>} : memref<16x256xf32, #tpu.memory_space<vmem>>, vector<16x256xf32>,
    } else {
    }
    return
  }
  func.func @transform_0(%arg0: i32, %arg1: i32, %arg2: i32) -> (i32, i32) {
    %c0_i32 = arith.constant 0 : i32
    return %arg0, %arg2 : i32, i32
  }
  func.func @transform_1(%arg0: i32, %arg1: i32, %arg2: i32) -> (i32, i32) {
    %c0_i32 = arith.constant 0 : i32
    return %arg2, %arg1 : i32, i32
  }
  func.func @transform_2(%arg0: i32, %arg1: i32, %arg2: i32) -> (i32, i32) {
    %c0_i32 = arith.constant 0 : i32
    return %arg0, %arg1 : i32, i32
  }
}

</mosaic_0001>

<llo_original>
// kernel: mixtral_attention_forward.3
$region0: #{mixtral_attention_forward.3}
  #allocation0 [shape = 'u32[]', space=smem, size = 0x4, offset = 0x4, fixed_abs, tag = 'smem constant byte address 0x4 - core index']
  #allocation1 [shape = 'u32[144,128]{1,0:T(1,128)}', space=vmem, size = 0x12000, scoped, tag = 'internal scratch']
  #allocation2 [shape = 'f32[16,256]{1,0:T(8,128)}', space=vmem, size = 0x4000, scoped, tag = 'scratch operand']
  %s0 = inlined_call_operand.hbm [shape: f32[16,512], index: 0, kind: input, shape index: {}]
  %s1 = inlined_call_operand.hbm [shape: f32[512,1024], index: 1, kind: input, shape index: {}]
  %s2 = inlined_call_operand.vmem [shape: f32[16,1024], index: 2, kind: output, shape index: {}]
  %s3 = sld [smem:[#allocation0]]
  $region76: #{mixtral_attention_forward.3} parent=0
    _
  %s5 = ssub.s32 1, %s3
  %s6 = scalar_select 0, %s5, %s3
  $region1: #{mixtral_attention_forward.3} parent=0
    #allocation3 [shape = 'u8[32768]{0}', space=vmem, size = 0x8000, scoped, tag = 'input window, operand 0, single buffered']
    #allocation4 [shape = 's32[2]{0}', space=sflag, size = 0x8, scoped, tag = 'scoped memory for mixtral_attention_forward.3']
    #allocation5 [shape = 'u8[1048576]{0}', space=vmem, size = 0x100000, scoped, tag = 'input window, operand 1']
    #allocation6 [shape = 's32[2]{0}', space=sflag, size = 0x8, scoped, tag = 'scoped memory for mixtral_attention_forward.3']
    #allocation7 [shape = 'u8[32768]{0}', space=vmem, size = 0x8000, scoped, tag = 'output window, operand 0']
    %7 = vsyncpa [#allocation4], 0
    %8 = vsyncpa [#allocation6], 0
    %s9 = scalar_lea.sflag [#allocation6], 1
    %10 = vsyncpa %s9, 0
    loop: start=0, step=1, limit=6
    $region2: #{mixtral_attention_forward.3} parent=1 // loop_pre_header
      _
    $region3: #{mixtral_attention_forward.3} parent=1 // loop_header
      %s12 = sphi 0, %s16
      %p13 = scmp.ge.s32.totalorder %s12, 6
      %s19 = sphi 0, %s38
      %s20 = sphi 0, %s34
      %s21 = sphi 0, %s30
      %s22 = sphi 0, %s19
      %s23 = sphi 0, %s20
      %s24 = sphi 0, %s21
      %s25 = sphi 0, %s22
      %s26 = sphi 0, %s23
      %s27 = sphi 0, %s24
      %s43 = sphi 0, %s45
      %s46 = sphi 0, %s43
      %s47 = sphi 0, %s46
      %s63 = sphi 0, %s47
      %s71 = sphi 0, %s73
      %s74 = sphi 0, %s71
      %s75 = sphi 0, %s74
      %s91 = sphi 0, %s75
      %s99 = sphi 0, %s101
      %s102 = sphi 0, %s99
      %s103 = sphi 0, %s102
      %s119 = sphi 0, %s103
    $region4: #{mixtral_attention_forward.3} parent=1 // loop_header_branch
      %15 = sbr.rel (%p13) target = $region8
    $region5: #{mixtral_attention_forward.3} parent=1 // loop_body
      %s17 = ssub.s32 %s12, 1
      %s18 = ssub.s32 %s12, 2
      %s28 = sadd.s32 1, %s21
      %p29 = scmp.ge.s32.totalorder %s28, 1
      %s30 = scalar_select %p29, 0, %s28
      %s31 = sadd.s32 1, %s20
      %s32 = scalar_select %p29, %s31, %s20
      %p33 = scmp.ge.s32.totalorder %s32, 4
      %s34 = scalar_select %p33, 0, %s32
      %s35 = sadd.s32 1, %s19
      %s36 = scalar_select %p33, %s35, %s19
      %p37 = scmp.ge.s32.totalorder %s36, 1
      %s38 = scalar_select %p37, 0, %s36
      %s39 = ssub.s32 %s19, %s38
      %s40 = ssub.s32 %s21, %s30
      %s41 = sor.u32 %s39, %s40
      %p42 = scmp.eq.s32.totalorder %s41, 0
      %s44 = sadd.s32 %s43, 1
      %s45 = scalar_select %p42, %s43, %s44
      %p48 = pneg %p42
      %p49 = scmp.eq.s32.totalorder %s12, 3
      %p50 = por %p48, %p49
      %p51 = scmp.ne.s32.totalorder %s43, %s46
      %p52 = scmp.eq.s32.totalorder %s12, 0
      %p53 = por %p51, %p52
      %p54 = scmp.ne.s32.totalorder %s43, %s46
      %p55 = scmp.eq.s32.totalorder %s17, 3
      %p56 = por %p54, %p55
      %p57 = scmp.ne.s32.totalorder %s46, %s47
      %p58 = scmp.eq.s32.totalorder %s17, 0
      %p59 = por %p57, %p58
      %p60 = scmp.ne.s32.totalorder %s46, %s47
      %p61 = scmp.eq.s32.totalorder %s18, 3
      %p62 = por %p60, %p61
      %p64 = scmp.ne.s32.totalorder %s47, %s63
      %p65 = scmp.eq.s32.totalorder %s18, 0
      %p66 = por %p64, %p65
      %s67 = ssub.s32 %s21, %s30
      %s68 = ssub.s32 %s20, %s34
      %s69 = sor.u32 %s67, %s68
      %p70 = scmp.eq.s32.totalorder %s69, 0
      %s72 = sadd.s32 %s71, 1
      %s73 = scalar_select %p70, %s71, %s72
      %p76 = pneg %p70
      %p77 = scmp.eq.s32.totalorder %s12, 3
      %p78 = por %p76, %p77
      %p79 = scmp.ne.s32.totalorder %s71, %s74
      %p80 = scmp.eq.s32.totalorder %s12, 0
      %p81 = por %p79, %p80
      %p82 = scmp.ne.s32.totalorder %s71, %s74
      %p83 = scmp.eq.s32.totalorder %s17, 3
      %p84 = por %p82, %p83
      %p85 = scmp.ne.s32.totalorder %s74, %s75
      %p86 = scmp.eq.s32.totalorder %s17, 0
      %p87 = por %p85, %p86
      %p88 = scmp.ne.s32.totalorder %s74, %s75
      %p89 = scmp.eq.s32.totalorder %s18, 3
      %p90 = por %p88, %p89
      %p92 = scmp.ne.s32.totalorder %s75, %s91
      %p93 = scmp.eq.s32.totalorder %s18, 0
      %p94 = por %p92, %p93
      %s95 = ssub.s32 %s19, %s38
      %s96 = ssub.s32 %s20, %s34
      %s97 = sor.u32 %s95, %s96
      %p98 = scmp.eq.s32.totalorder %s97, 0
      %s100 = sadd.s32 %s99, 1
      %s101 = scalar_select %p98, %s99, %s100
      %p104 = pneg %p98
      %p105 = scmp.eq.s32.totalorder %s12, 3
      %p106 = por %p104, %p105
      %p107 = scmp.ne.s32.totalorder %s99, %s102
      %p108 = scmp.eq.s32.totalorder %s12, 0
      %p109 = por %p107, %p108
      %p110 = scmp.ne.s32.totalorder %s99, %s102
      %p111 = scmp.eq.s32.totalorder %s17, 3
      %p112 = por %p110, %p111
      %p113 = scmp.ne.s32.totalorder %s102, %s103
      %p114 = scmp.eq.s32.totalorder %s17, 0
      %p115 = por %p113, %p114
      %p116 = scmp.ne.s32.totalorder %s102, %s103
      %p117 = scmp.eq.s32.totalorder %s18, 3
      %p118 = por %p116, %p117
      %p120 = scmp.ne.s32.totalorder %s103, %s119
      %p121 = scmp.eq.s32.totalorder %s18, 0
      %p122 = por %p120, %p121
      %p123 = scmp.le.s32.totalorder 1, %s12
      %p124 = scmp.lt.s32.totalorder %s12, 5
      %p125 = pnand %p123, %p124
      %p126 = pneg %p125
      // Predicated region
      $region9: #{mixtral_attention_forward.3} parent=5 // pred_check
        _
      $region10: #{mixtral_attention_forward.3} parent=5 // pred_check_branch
        %128 = sbr.rel (%p125) target = $region12
      $region11: #{mixtral_attention_forward.3} parent=5 // pred_region
        %s129 = ssub.s32 %s12, 1
        // Predicated region
        $region13: #{mixtral_attention_forward.3} parent=11 // pred_check
          %p130 = pneg %p59
        $region14: #{mixtral_attention_forward.3} parent=11 // pred_check_branch
          %132 = sbr.rel (%p130) target = $region16
        $region15: #{mixtral_attention_forward.3} parent=11 // pred_region
          %s133 = smul.u32 2, %s22
          %s134 = smul.u32 4, %s24
          %s136 = ssub.s32 1024, 1024
          %137 = vsyncadd [#allocation4], %s136
          %s138 = smul.addr %s133, 4
          %s139 = sadd.s32 %s134, %s138
          %s140 = smul.addr %s139, 128
          %s141 = scalar_lea.hbm %s0, %s140
          %s142 = sshll.u32 [#allocation3], 4
          %s143 = int_to_ptr.vmem [resolvable:$true] %s142
          %148 = dma.hbm_to_vmem [thread:$0]  %s141, 1024, %s143, [#allocation4], 512, 512, 32
        $region16: #{mixtral_attention_forward.3} parent=11 // pred_fallthru
          _
      $region12: #{mixtral_attention_forward.3} parent=5 // pred_fallthru
        _
      %p149 = scmp.lt.s32.totalorder %s12, 4
      // Predicated region
      $region17: #{mixtral_attention_forward.3} parent=5 // pred_check
        %p150 = pneg %p149
      $region18: #{mixtral_attention_forward.3} parent=5 // pred_check_branch
        %152 = sbr.rel (%p150) target = $region20
      $region19: #{mixtral_attention_forward.3} parent=5 // pred_region
        // Predicated region
        $region21: #{mixtral_attention_forward.3} parent=19 // pred_check
          %p153 = pneg %p81
        $region22: #{mixtral_attention_forward.3} parent=19 // pred_check_branch
          %155 = sbr.rel (%p153) target = $region24
        $region23: #{mixtral_attention_forward.3} parent=19 // pred_region
          %s156 = sand.u32 %s71, 1
          %s157 = scalar_lea.sflag [#allocation6], %s156
          %s158 = sand.u32 %s71, 1
          %s159 = smul.addr %s158, 1024
          %s160 = scalar_lea.vmem [#allocation5], %s159
          %s161 = smul.u32 64, %s21
          %s162 = smul.u32 2, %s20
          %s164 = ssub.s32 16384, 16384
          %165 = vsyncadd %s157, %s164
          %s166 = smul.addr %s161, 8
          %s167 = sadd.s32 %s162, %s166
          %s168 = smul.addr %s167, 128
          %s169 = scalar_lea.hbm %s1, %s168
          %s170 = sshll.u32 %s160, 4
          %s171 = int_to_ptr.vmem [resolvable:$true] %s170
          %176 = dma.hbm_to_vmem [thread:$0]  %s169, 16384, %s171, %s157, 1024, 256, 16
        $region24: #{mixtral_attention_forward.3} parent=19 // pred_fallthru
          _
      $region20: #{mixtral_attention_forward.3} parent=5 // pred_fallthru
        _
      %p177 = scmp.le.s32.totalorder 1, %s12
      %p178 = scmp.lt.s32.totalorder %s12, 5
      %p179 = pnand %p177, %p178
      %p180 = pneg %p179
      // Predicated region
      $region25: #{mixtral_attention_forward.3} parent=5 // pred_check
        _
      $region26: #{mixtral_attention_forward.3} parent=5 // pred_check_branch
        %182 = sbr.rel (%p179) target = $region28
      $region27: #{mixtral_attention_forward.3} parent=5 // pred_region
        %s183 = ssub.s32 %s12, 1
        // Predicated region
        $region29: #{mixtral_attention_forward.3} parent=27 // pred_check
          %p184 = pneg %p59
        $region30: #{mixtral_attention_forward.3} parent=27 // pred_check_branch
          %186 = sbr.rel (%p184) target = $region32
        $region31: #{mixtral_attention_forward.3} parent=27 // pred_region
          %187 = dma.done [#allocation4], 1024
        $region32: #{mixtral_attention_forward.3} parent=27 // pred_fallthru
          _
        %s188 = sand.u32 %s74, 1
        %s189 = scalar_lea.sflag [#allocation6], %s188
        %s190 = sand.u32 %s74, 1
        %s191 = smul.addr %s190, 1024
        %s192 = scalar_lea.vmem [#allocation5], %s191
        // Predicated region
        $region33: #{mixtral_attention_forward.3} parent=27 // pred_check
          %p193 = pneg %p87
        $region34: #{mixtral_attention_forward.3} parent=27 // pred_check_branch
          %195 = sbr.rel (%p193) target = $region36
        $region35: #{mixtral_attention_forward.3} parent=27 // pred_region
          %196 = dma.done %s189, 16384
        $region36: #{mixtral_attention_forward.3} parent=27 // pred_fallthru
          _
        %p197 = pneg %p59
        %p198 = pneg %p56
        %s199 = sand.u32 %s74, 1
        %s200 = scalar_lea.sflag [#allocation6], %s199
        %s201 = sand.u32 %s74, 1
        %s202 = smul.addr %s201, 1024
        %s203 = scalar_lea.vmem [#allocation5], %s202
        %p204 = pneg %p87
        %p205 = pneg %p84
        %p206 = pneg %p115
        %p207 = pneg %p112
        %s208 = sand.u32 %s102, 1
        %s209 = sand.u32 %s102, 1
        %s210 = smul.addr %s209, 32
        %s211 = scalar_lea.vmem [#allocation7], %s210
        %s212 = smul.u32 2, %s22
        %s213 = smul.u32 4, %s24
        %s214 = smul.u32 64, %s24
        %s215 = smul.u32 2, %s23
        %s216 = smul.u32 2, %s22
        %s217 = smul.u32 2, %s23
        %p218 = scmp.eq.s32.totalorder %s24, 0
        // Predicated region
        $region37: #{mixtral_attention_forward.3} parent=27 // pred_check
          %p219 = pneg %p218
        $region38: #{mixtral_attention_forward.3} parent=27 // pred_check_branch
          %221 = sbr.rel (%p219) target = $region40
        $region39: #{mixtral_attention_forward.3} parent=27 // pred_region
          %222 = vst [vmem:[#allocation2] sm:$0xff] 0.0
          %223 = vst [vmem:[#allocation2 + $0x8] sm:$0xff] 0.0
          %224 = vst [vmem:[#allocation2 + $0x10] sm:$0xff] 0.0
          %225 = vst [vmem:[#allocation2 + $0x18] sm:$0xff] 0.0
        $region40: #{mixtral_attention_forward.3} parent=27 // pred_fallthru
          _
        %v226 = vld [vmem:[#allocation2] sm:$0xff]
        %v227 = vld [vmem:[#allocation2 + $0x8] sm:$0xff]
        %v228 = vld [vmem:[#allocation2 + $0x10] sm:$0xff]
        %v229 = vld [vmem:[#allocation2 + $0x18] sm:$0xff]
        %v230 = vld [vmem:[#allocation3] sm:$0xff]
        %v231 = vld [vmem:[#allocation3 + $0x8] sm:$0xff]
        %v232 = vld [vmem:[#allocation3 + $0x10] sm:$0xff]
        %v233 = vld [vmem:[#allocation3 + $0x18] sm:$0xff]
        %v234 = vld [vmem:[#allocation3 + $0x20] sm:$0xff]
        %v235 = vld [vmem:[#allocation3 + $0x28] sm:$0xff]
        %v236 = vld [vmem:[#allocation3 + $0x30] sm:$0xff]
        %v237 = vld [vmem:[#allocation3 + $0x38] sm:$0xff]
        %v238 = vld [vmem:[%s192] sm:$0xff]
        %v239 = vld [vmem:[%s192 + $0x8] sm:$0xff]
        %v240 = vld [vmem:[%s192 + $0x10] sm:$0xff]
        %v241 = vld [vmem:[%s192 + $0x18] sm:$0xff]
        %v242 = vld [vmem:[%s192 + $0x20] sm:$0xff]
        %v243 = vld [vmem:[%s192 + $0x28] sm:$0xff]
        %v244 = vld [vmem:[%s192 + $0x30] sm:$0xff]
        %v245 = vld [vmem:[%s192 + $0x38] sm:$0xff]
        %v246 = vld [vmem:[%s192 + $0x40] sm:$0xff]
        %v247 = vld [vmem:[%s192 + $0x48] sm:$0xff]
        %v248 = vld [vmem:[%s192 + $0x50] sm:$0xff]
        %v249 = vld [vmem:[%s192 + $0x58] sm:$0xff]
        %v250 = vld [vmem:[%s192 + $0x60] sm:$0xff]
        %v251 = vld [vmem:[%s192 + $0x68] sm:$0xff]
        %v252 = vld [vmem:[%s192 + $0x70] sm:$0xff]
        %v253 = vld [vmem:[%s192 + $0x78] sm:$0xff]
        %v254 = vld [vmem:[%s192 + $0x80] sm:$0xff]
        %v255 = vld [vmem:[%s192 + $0x88] sm:$0xff]
        %v256 = vld [vmem:[%s192 + $0x90] sm:$0xff]
        %v257 = vld [vmem:[%s192 + $0x98] sm:$0xff]
        %v258 = vld [vmem:[%s192 + $0xa0] sm:$0xff]
        %v259 = vld [vmem:[%s192 + $0xa8] sm:$0xff]
        %v260 = vld [vmem:[%s192 + $0xb0] sm:$0xff]
        %v261 = vld [vmem:[%s192 + $0xb8] sm:$0xff]
        %v262 = vld [vmem:[%s192 + $0xc0] sm:$0xff]
        %v263 = vld [vmem:[%s192 + $0xc8] sm:$0xff]
        %v264 = vld [vmem:[%s192 + $0xd0] sm:$0xff]
        %v265 = vld [vmem:[%s192 + $0xd8] sm:$0xff]
        %v266 = vld [vmem:[%s192 + $0xe0] sm:$0xff]
        %v267 = vld [vmem:[%s192 + $0xe8] sm:$0xff]
        %v268 = vld [vmem:[%s192 + $0xf0] sm:$0xff]
        %v269 = vld [vmem:[%s192 + $0xf8] sm:$0xff]
        %v270 = vld [vmem:[%s192 + $0x100] sm:$0xff]
        %v271 = vld [vmem:[%s192 + $0x108] sm:$0xff]
        %v272 = vld [vmem:[%s192 + $0x110] sm:$0xff]
        %v273 = vld [vmem:[%s192 + $0x118] sm:$0xff]
        %v274 = vld [vmem:[%s192 + $0x120] sm:$0xff]
        %v275 = vld [vmem:[%s192 + $0x128] sm:$0xff]
        %v276 = vld [vmem:[%s192 + $0x130] sm:$0xff]
        %v277 = vld [vmem:[%s192 + $0x138] sm:$0xff]
        %v278 = vld [vmem:[%s192 + $0x140] sm:$0xff]
        %v279 = vld [vmem:[%s192 + $0x148] sm:$0xff]
        %v280 = vld [vmem:[%s192 + $0x150] sm:$0xff]
        %v281 = vld [vmem:[%s192 + $0x158] sm:$0xff]
        %v282 = vld [vmem:[%s192 + $0x160] sm:$0xff]
        %v283 = vld [vmem:[%s192 + $0x168] sm:$0xff]
        %v284 = vld [vmem:[%s192 + $0x170] sm:$0xff]
        %v285 = vld [vmem:[%s192 + $0x178] sm:$0xff]
        %v286 = vld [vmem:[%s192 + $0x180] sm:$0xff]
        %v287 = vld [vmem:[%s192 + $0x188] sm:$0xff]
        %v288 = vld [vmem:[%s192 + $0x190] sm:$0xff]
        %v289 = vld [vmem:[%s192 + $0x198] sm:$0xff]
        %v290 = vld [vmem:[%s192 + $0x1a0] sm:$0xff]
        %v291 = vld [vmem:[%s192 + $0x1a8] sm:$0xff]
        %v292 = vld [vmem:[%s192 + $0x1b0] sm:$0xff]
        %v293 = vld [vmem:[%s192 + $0x1b8] sm:$0xff]
        %v294 = vld [vmem:[%s192 + $0x1c0] sm:$0xff]
        %v295 = vld [vmem:[%s192 + $0x1c8] sm:$0xff]
        %v296 = vld [vmem:[%s192 + $0x1d0] sm:$0xff]
        %v297 = vld [vmem:[%s192 + $0x1d8] sm:$0xff]
        %v298 = vld [vmem:[%s192 + $0x1e0] sm:$0xff]
        %v299 = vld [vmem:[%s192 + $0x1e8] sm:$0xff]
        %v300 = vld [vmem:[%s192 + $0x1f0] sm:$0xff]
        %v301 = vld [vmem:[%s192 + $0x1f8] sm:$0xff]
        %v302 = vld [vmem:[%s192 + $0x200] sm:$0xff]
        %v303 = vld [vmem:[%s192 + $0x208] sm:$0xff]
        %v304 = vld [vmem:[%s192 + $0x210] sm:$0xff]
        %v305 = vld [vmem:[%s192 + $0x218] sm:$0xff]
        %v306 = vld [vmem:[%s192 + $0x220] sm:$0xff]
        %v307 = vld [vmem:[%s192 + $0x228] sm:$0xff]
        %v308 = vld [vmem:[%s192 + $0x230] sm:$0xff]
        %v309 = vld [vmem:[%s192 + $0x238] sm:$0xff]
        %v310 = vld [vmem:[%s192 + $0x240] sm:$0xff]
        %v311 = vld [vmem:[%s192 + $0x248] sm:$0xff]
        %v312 = vld [vmem:[%s192 + $0x250] sm:$0xff]
        %v313 = vld [vmem:[%s192 + $0x258] sm:$0xff]
        %v314 = vld [vmem:[%s192 + $0x260] sm:$0xff]
        %v315 = vld [vmem:[%s192 + $0x268] sm:$0xff]
        %v316 = vld [vmem:[%s192 + $0x270] sm:$0xff]
        %v317 = vld [vmem:[%s192 + $0x278] sm:$0xff]
        %v318 = vld [vmem:[%s192 + $0x280] sm:$0xff]
        %v319 = vld [vmem:[%s192 + $0x288] sm:$0xff]
        %v320 = vld [vmem:[%s192 + $0x290] sm:$0xff]
        %v321 = vld [vmem:[%s192 + $0x298] sm:$0xff]
        %v322 = vld [vmem:[%s192 + $0x2a0] sm:$0xff]
        %v323 = vld [vmem:[%s192 + $0x2a8] sm:$0xff]
        %v324 = vld [vmem:[%s192 + $0x2b0] sm:$0xff]
        %v325 = vld [vmem:[%s192 + $0x2b8] sm:$0xff]
        %v326 = vld [vmem:[%s192 + $0x2c0] sm:$0xff]
        %v327 = vld [vmem:[%s192 + $0x2c8] sm:$0xff]
        %v328 = vld [vmem:[%s192 + $0x2d0] sm:$0xff]
        %v329 = vld [vmem:[%s192 + $0x2d8] sm:$0xff]
        %v330 = vld [vmem:[%s192 + $0x2e0] sm:$0xff]
        %v331 = vld [vmem:[%s192 + $0x2e8] sm:$0xff]
        %v332 = vld [vmem:[%s192 + $0x2f0] sm:$0xff]
        %v333 = vld [vmem:[%s192 + $0x2f8] sm:$0xff]
        %v334 = vld [vmem:[%s192 + $0x300] sm:$0xff]
        %v335 = vld [vmem:[%s192 + $0x308] sm:$0xff]
        %v336 = vld [vmem:[%s192 + $0x310] sm:$0xff]
        %v337 = vld [vmem:[%s192 + $0x318] sm:$0xff]
        %v338 = vld [vmem:[%s192 + $0x320] sm:$0xff]
        %v339 = vld [vmem:[%s192 + $0x328] sm:$0xff]
        %v340 = vld [vmem:[%s192 + $0x330] sm:$0xff]
        %v341 = vld [vmem:[%s192 + $0x338] sm:$0xff]
        %v342 = vld [vmem:[%s192 + $0x340] sm:$0xff]
        %v343 = vld [vmem:[%s192 + $0x348] sm:$0xff]
        %v344 = vld [vmem:[%s192 + $0x350] sm:$0xff]
        %v345 = vld [vmem:[%s192 + $0x358] sm:$0xff]
        %v346 = vld [vmem:[%s192 + $0x360] sm:$0xff]
        %v347 = vld [vmem:[%s192 + $0x368] sm:$0xff]
        %v348 = vld [vmem:[%s192 + $0x370] sm:$0xff]
        %v349 = vld [vmem:[%s192 + $0x378] sm:$0xff]
        %v350 = vld [vmem:[%s192 + $0x380] sm:$0xff]
        %v351 = vld [vmem:[%s192 + $0x388] sm:$0xff]
        %v352 = vld [vmem:[%s192 + $0x390] sm:$0xff]
        %v353 = vld [vmem:[%s192 + $0x398] sm:$0xff]
        %v354 = vld [vmem:[%s192 + $0x3a0] sm:$0xff]
        %v355 = vld [vmem:[%s192 + $0x3a8] sm:$0xff]
        %v356 = vld [vmem:[%s192 + $0x3b0] sm:$0xff]
        %v357 = vld [vmem:[%s192 + $0x3b8] sm:$0xff]
        %v358 = vld [vmem:[%s192 + $0x3c0] sm:$0xff]
        %v359 = vld [vmem:[%s192 + $0x3c8] sm:$0xff]
        %v360 = vld [vmem:[%s192 + $0x3d0] sm:$0xff]
        %v361 = vld [vmem:[%s192 + $0x3d8] sm:$0xff]
        %v362 = vld [vmem:[%s192 + $0x3e0] sm:$0xff]
        %v363 = vld [vmem:[%s192 + $0x3e8] sm:$0xff]
        %v364 = vld [vmem:[%s192 + $0x3f0] sm:$0xff]
        %v365 = vld [vmem:[%s192 + $0x3f8] sm:$0xff]
        %366 = vmatprep.subr.mxu0 %v239
        %367 = vmatpush1.msra.mxu0 %v238
        %368 = vmatprep.subr.mxu0 %v241
        %369 = vmatpush1.msra.mxu0 %v240
        %370 = vmatprep.subr.mxu0 %v243
        %371 = vmatpush1.msra.mxu0 %v242
        %372 = vmatprep.subr.mxu0 %v245
        %373 = vmatpush1.msra.mxu0 %v244
        %374 = vmatprep.subr.mxu0 %v247
        %375 = vmatpush1.msra.mxu0 %v246
        %376 = vmatprep.subr.mxu0 %v249
        %377 = vmatpush1.msra.mxu0 %v248
        %378 = vmatprep.subr.mxu0 %v251
        %379 = vmatpush1.msra.mxu0 %v250
        %380 = vmatprep.subr.mxu0 %v253
        %381 = vmatpush1.msra.mxu0 %v252
        %382 = vmatprep.subr.mxu0 %v255
        %383 = vmatpush1.msra.mxu0 %v254
        %384 = vmatprep.subr.mxu0 %v257
        %385 = vmatpush1.msra.mxu0 %v256
        %386 = vmatprep.subr.mxu0 %v259
        %387 = vmatpush1.msra.mxu0 %v258
        %388 = vmatprep.subr.mxu0 %v261
        %389 = vmatpush1.msra.mxu0 %v260
        %390 = vmatprep.subr.mxu0 %v263
        %391 = vmatpush1.msra.mxu0 %v262
        %392 = vmatprep.subr.mxu0 %v265
        %393 = vmatpush1.msra.mxu0 %v264
        %394 = vmatprep.subr.mxu0 %v267
        %395 = vmatpush1.msra.mxu0 %v266
        %396 = vmatprep.subr.mxu0 %v269
        %397 = vmatpush1.msra.mxu0 %v268
        %398 = vmatprep.subr.mxu0 %v271
        %399 = vmatpush1.msra.mxu0 %v270
        %400 = vmatprep.subr.mxu0 %v273
        %401 = vmatpush1.msra.mxu0 %v272
        %402 = vmatprep.subr.mxu0 %v275
        %403 = vmatpush1.msra.mxu0 %v274
        %404 = vmatprep.subr.mxu0 %v277
        %405 = vmatpush1.msra.mxu0 %v276
        %406 = vmatprep.subr.mxu0 %v279
        %407 = vmatpush1.msra.mxu0 %v278
        %408 = vmatprep.subr.mxu0 %v281
        %409 = vmatpush1.msra.mxu0 %v280
        %410 = vmatprep.subr.mxu0 %v283
        %411 = vmatpush1.msra.mxu0 %v282
        %412 = vmatprep.subr.mxu0 %v285
        %413 = vmatpush1.msra.mxu0 %v284
        %414 = vmatprep.subr.mxu0 %v287
        %415 = vmatpush1.msra.mxu0 %v286
        %416 = vmatprep.subr.mxu0 %v289
        %417 = vmatpush1.msra.mxu0 %v288
        %418 = vmatprep.subr.mxu0 %v291
        %419 = vmatpush1.msra.mxu0 %v290
        %420 = vmatprep.subr.mxu0 %v293
        %421 = vmatpush1.msra.mxu0 %v292
        %422 = vmatprep.subr.mxu0 %v295
        %423 = vmatpush1.msra.mxu0 %v294
        %424 = vmatprep.subr.mxu0 %v297
        %425 = vmatpush1.msra.mxu0 %v296
        %426 = vmatprep.subr.mxu0 %v299
        %427 = vmatpush1.msra.mxu0 %v298
        %428 = vmatprep.subr.mxu0 %v301
        %429 = vmatpush1.msra.mxu0 %v300
        %430 = vmatprep.mubr.f32.mxu0 %v231
        %431 = vmatmul.mubr.f32.gmra.mrb[0].mxu0 %v230
        %v432 = vpop.f32.mrb[0].mxu0
        %v433 = vadd.f32 0.0, %v432
        %v434 = vpop.f32.mrb[0].mxu0
        %v435 = vadd.f32 0.0, %v434
        %436 = vmatprep.mubr.f32.mxu0 %v235
        %437 = vmatmul.mubr.f32.gmra.mrb[0].mxu0 %v234
        %v438 = vpop.f32.mrb[0].mxu0
        %v439 = vadd.f32 0.0, %v438
        %v440 = vpop.f32.mrb[0].mxu0
        %v441 = vadd.f32 0.0, %v440
        %442 = vdwg.mxu0
        %443 = vmatprep.subr.mxu0 %v303
        %444 = vmatpush1.msra.mxu0 %v302
        %445 = vmatprep.subr.mxu0 %v305
        %446 = vmatpush1.msra.mxu0 %v304
        %447 = vmatprep.subr.mxu0 %v307
        %448 = vmatpush1.msra.mxu0 %v306
        %449 = vmatprep.subr.mxu0 %v309
        %450 = vmatpush1.msra.mxu0 %v308
        %451 = vmatprep.subr.mxu0 %v311
        %452 = vmatpush1.msra.mxu0 %v310
        %453 = vmatprep.subr.mxu0 %v313
        %454 = vmatpush1.msra.mxu0 %v312
        %455 = vmatprep.subr.mxu0 %v315
        %456 = vmatpush1.msra.mxu0 %v314
        %457 = vmatprep.subr.mxu0 %v317
        %458 = vmatpush1.msra.mxu0 %v316
        %459 = vmatprep.subr.mxu0 %v319
        %460 = vmatpush1.msra.mxu0 %v318
        %461 = vmatprep.subr.mxu0 %v321
        %462 = vmatpush1.msra.mxu0 %v320
        %463 = vmatprep.subr.mxu0 %v323
        %464 = vmatpush1.msra.mxu0 %v322
        %465 = vmatprep.subr.mxu0 %v325
        %466 = vmatpush1.msra.mxu0 %v324
        %467 = vmatprep.subr.mxu0 %v327
        %468 = vmatpush1.msra.mxu0 %v326
        %469 = vmatprep.subr.mxu0 %v329
        %470 = vmatpush1.msra.mxu0 %v328
        %471 = vmatprep.subr.mxu0 %v331
        %472 = vmatpush1.msra.mxu0 %v330
        %473 = vmatprep.subr.mxu0 %v333
        %474 = vmatpush1.msra.mxu0 %v332
        %475 = vmatprep.subr.mxu0 %v335
        %476 = vmatpush1.msra.mxu0 %v334
        %477 = vmatprep.subr.mxu0 %v337
        %478 = vmatpush1.msra.mxu0 %v336
        %479 = vmatprep.subr.mxu0 %v339
        %480 = vmatpush1.msra.mxu0 %v338
        %481 = vmatprep.subr.mxu0 %v341
        %482 = vmatpush1.msra.mxu0 %v340
        %483 = vmatprep.subr.mxu0 %v343
        %484 = vmatpush1.msra.mxu0 %v342
        %485 = vmatprep.subr.mxu0 %v345
        %486 = vmatpush1.msra.mxu0 %v344
        %487 = vmatprep.subr.mxu0 %v347
        %488 = vmatpush1.msra.mxu0 %v346
        %489 = vmatprep.subr.mxu0 %v349
        %490 = vmatpush1.msra.mxu0 %v348
        %491 = vmatprep.subr.mxu0 %v351
        %492 = vmatpush1.msra.mxu0 %v350
        %493 = vmatprep.subr.mxu0 %v353
        %494 = vmatpush1.msra.mxu0 %v352
        %495 = vmatprep.subr.mxu0 %v355
        %496 = vmatpush1.msra.mxu0 %v354
        %497 = vmatprep.subr.mxu0 %v357
        %498 = vmatpush1.msra.mxu0 %v356
        %499 = vmatprep.subr.mxu0 %v359
        %500 = vmatpush1.msra.mxu0 %v358
        %501 = vmatprep.subr.mxu0 %v361
        %502 = vmatpush1.msra.mxu0 %v360
        %503 = vmatprep.subr.mxu0 %v363
        %504 = vmatpush1.msra.mxu0 %v362
        %505 = vmatprep.subr.mxu0 %v365
        %506 = vmatpush1.msra.mxu0 %v364
        %507 = vmatprep.mubr.f32.mxu0 %v233
        %508 = vmatmul.mubr.f32.gmra.mrb[0].mxu0 %v232
        %v509 = vpop.f32.mrb[0].mxu0
        %v510 = vadd.f32 %v433, %v509
        %v511 = vpop.f32.mrb[0].mxu0
        %v512 = vadd.f32 %v435, %v511
        %513 = vmatprep.mubr.f32.mxu0 %v237
        %514 = vmatmul.mubr.f32.gmra.mrb[0].mxu0 %v236
        %v515 = vpop.f32.mrb[0].mxu0
        %v516 = vadd.f32 %v439, %v515
        %v517 = vpop.f32.mrb[0].mxu0
        %v518 = vadd.f32 %v441, %v517
        %519 = vdwg.mxu0
        %v520 = vadd.f32 %v226, %v510
        %v521 = vadd.f32 %v227, %v512
        %v522 = vadd.f32 %v228, %v516
        %v523 = vadd.f32 %v229, %v518
        %524 = vst [vmem:[#allocation2] sm:$0xff] %v520
        %525 = vst [vmem:[#allocation2 + $0x8] sm:$0xff] %v521
        %526 = vst [vmem:[#allocation2 + $0x10] sm:$0xff] %v522
        %527 = vst [vmem:[#allocation2 + $0x18] sm:$0xff] %v523
        // Predicated region
        $region41: #{mixtral_attention_forward.3} parent=27 // pred_check
          %p528 = pneg %p218
        $region42: #{mixtral_attention_forward.3} parent=27 // pred_check_branch
          %530 = sbr.rel (%p528) target = $region44
        $region43: #{mixtral_attention_forward.3} parent=27 // pred_region
          %v531 = vld [vmem:[#allocation2] sm:$0xff]
          %v532 = vld [vmem:[#allocation2 + $0x8] sm:$0xff]
          %v533 = vld [vmem:[#allocation2 + $0x10] sm:$0xff]
          %v534 = vld [vmem:[#allocation2 + $0x18] sm:$0xff]
          %535 = vst [vmem:[%s211] sm:$0xff] %v531
          %536 = vst [vmem:[%s211 + $0x8] sm:$0xff] %v532
          %537 = vst [vmem:[%s211 + $0x10] sm:$0xff] %v533
          %538 = vst [vmem:[%s211 + $0x18] sm:$0xff] %v534
        $region44: #{mixtral_attention_forward.3} parent=27 // pred_fallthru
          _
        %s539 = sand.u32 %s102, 1
        %s540 = sand.u32 %s102, 1
        %s541 = smul.addr %s540, 32
        %s542 = scalar_lea.vmem [#allocation7], %s541
        // Predicated region
        $region45: #{mixtral_attention_forward.3} parent=27 // pred_check
          %p543 = pneg %p112
        $region46: #{mixtral_attention_forward.3} parent=27 // pred_check_branch
          %545 = sbr.rel (%p543) target = $region48
        $region47: #{mixtral_attention_forward.3} parent=27 // pred_region
          %s546 = smul.u32 2, %s22
          %s547 = smul.u32 2, %s23
          %s548 = smul.addr %s546, 8
          %s549 = sadd.s32 %s547, %s548
          %s550 = smul.addr %s549, 8
          %s551 = scalar_lea.vmem %s2, %s550
          // Predicated region
          $region49: #{mixtral_attention_forward.3} parent=47 // pred_check
            _
          $region50: #{mixtral_attention_forward.3} parent=47 // pred_check_branch
            %553 = sbr.rel (0) target = $region52
          $region51: #{mixtral_attention_forward.3} parent=47 // pred_region
            // Predicated region
            $region53: #{mixtral_attention_forward.3} parent=51 // pred_check
              _
            $region54: #{mixtral_attention_forward.3} parent=51 // pred_check_branch
              %555 = sbr.rel (0) target = $region56
            $region55: #{mixtral_attention_forward.3} parent=51 // pred_region
              loop: start=0, step=1, limit=1
              $region57: #{mixtral_attention_forward.3} parent=55 // loop_pre_header
                _
              $region58: #{mixtral_attention_forward.3} parent=55 // loop_header
                %s557 = sphi 0, %s561
                %p558 = scmp.ge.s32.totalorder %s557, 1
                %s562 = sphi %s542, %s542
                %s563 = sphi %s551, %s551
              $region59: #{mixtral_attention_forward.3} parent=55 // loop_header_branch
                %560 = sbr.rel (%p558) target = $region63
              $region60: #{mixtral_attention_forward.3} parent=55 // loop_body
                %v564 = vld [vmem:[%s562] sm:$0xff]
                %565 = vst [vmem:[%s563] sm:$0xff] %v564
                %v566 = vld [vmem:[%s562 + $0x8] sm:$0xff]
                %567 = vst [vmem:[%s563 + $0x8] sm:$0xff] %v566
                %v568 = vld [vmem:[%s562 + $0x10] sm:$0xff]
                %569 = vst [vmem:[%s563 + $0x40] sm:$0xff] %v568
                %v570 = vld [vmem:[%s562 + $0x18] sm:$0xff]
                %571 = vst [vmem:[%s563 + $0x48] sm:$0xff] %v570
              $region61: #{mixtral_attention_forward.3} parent=55 // loop_footer
                %s561 = sadd.s32 1, %s557
              $region62: #{mixtral_attention_forward.3} parent=55 // loop_footer_branch
                %556 = sbr.rel target = $region58
              $region63: #{mixtral_attention_forward.3} parent=55 // loop_exit
                _
            $region56: #{mixtral_attention_forward.3} parent=51 // pred_fallthru
              _
            // Predicated region
            $region64: #{mixtral_attention_forward.3} parent=51 // pred_check
              _
            $region65: #{mixtral_attention_forward.3} parent=51 // pred_check_branch
              %573 = sbr.rel target = $region67
            $region66: #{mixtral_attention_forward.3} parent=51 // pred_region
              _
            $region67: #{mixtral_attention_forward.3} parent=51 // pred_fallthru
              _
          $region52: #{mixtral_attention_forward.3} parent=47 // pred_fallthru
            _
          %574 = vnop
        $region48: #{mixtral_attention_forward.3} parent=27 // pred_fallthru
          _
      $region28: #{mixtral_attention_forward.3} parent=5 // pred_fallthru
        _
      %p575 = scmp.le.s32.totalorder 2, %s12
      // Predicated region
      $region68: #{mixtral_attention_forward.3} parent=5 // pred_check
        %p576 = pneg %p575
      $region69: #{mixtral_attention_forward.3} parent=5 // pred_check_branch
        %578 = sbr.rel (%p576) target = $region71
      $region70: #{mixtral_attention_forward.3} parent=5 // pred_region
        %s579 = ssub.s32 %s12, 2
        // Predicated region
        $region72: #{mixtral_attention_forward.3} parent=70 // pred_check
          %p580 = pneg %p118
        $region73: #{mixtral_attention_forward.3} parent=70 // pred_check_branch
          %582 = sbr.rel (%p580) target = $region75
        $region74: #{mixtral_attention_forward.3} parent=70 // pred_region
          %s583 = sand.u32 %s103, 1
          %s584 = sand.u32 %s103, 1
          %s585 = smul.addr %s584, 32
          %s586 = scalar_lea.vmem [#allocation7], %s585
        $region75: #{mixtral_attention_forward.3} parent=70 // pred_fallthru
          _
      $region71: #{mixtral_attention_forward.3} parent=5 // pred_fallthru
        _
    $region6: #{mixtral_attention_forward.3} parent=1 // loop_footer
      %s16 = sadd.s32 1, %s12
    $region7: #{mixtral_attention_forward.3} parent=1 // loop_footer_branch
      %11 = sbr.rel target = $region3
    $region8: #{mixtral_attention_forward.3} parent=1 // loop_exit
      _
    %587 = vsyncpa [#allocation4], 1
    %s588 = scalar_lea.sflag [#allocation4], 1
    %589 = vsyncpa %s588, 1
    %590 = vsyncpa [#allocation6], 1
    %s591 = scalar_lea.sflag [#allocation6], 1
    %592 = vsyncpa %s591, 1

// kernel: mixtral_attention_forward.5
$region0: #{mixtral_attention_forward.5}
  #allocation0 [shape = 'u32[]', space=smem, size = 0x4, offset = 0x4, fixed_abs, tag = 'smem constant byte address 0x4 - core index']
  #allocation1 [shape = 'u32[144,128]{1,0:T(1,128)}', space=vmem, size = 0x12000, scoped, tag = 'internal scratch']
  #allocation2 [shape = 'f32[16,256]{1,0:T(8,128)}', space=vmem, size = 0x4000, scoped, tag = 'scratch operand']
  %s0 = inlined_call_operand.vmem [shape: f32[16,512], index: 0, kind: input, shape index: {}]
  %s1 = inlined_call_operand.vmem [shape: f32[512,512], index: 1, kind: input, shape index: {}]
  %s2 = inlined_call_operand.hbm [shape: f32[16,512], index: 2, kind: output, shape index: {}]
  %s3 = sld [smem:[#allocation0]]
  $region72: #{mixtral_attention_forward.5} parent=0
    _
  %s5 = ssub.s32 1, %s3
  %s6 = scalar_select 0, %s5, %s3
  $region1: #{mixtral_attention_forward.5} parent=0
    #allocation3 [shape = 'u8[1048576]{0}', space=vmem, size = 0x100000, scoped, tag = 'input window, operand 1']
    #allocation4 [shape = 'u8[32768]{0}', space=vmem, size = 0x8000, scoped, tag = 'output window, operand 0']
    #allocation5 [shape = 's32[2]{0}', space=sflag, size = 0x8, scoped, tag = 'scoped memory for mixtral_attention_forward.5']
    %7 = vsyncpa [#allocation5], 0
    %s8 = scalar_lea.sflag [#allocation5], 1
    %9 = vsyncpa %s8, 0
    loop: start=0, step=1, limit=4
    $region2: #{mixtral_attention_forward.5} parent=1 // loop_pre_header
      _
    $region3: #{mixtral_attention_forward.5} parent=1 // loop_header
      %s11 = sphi 0, %s15
      %p12 = scmp.ge.s32.totalorder %s11, 4
      %s18 = sphi 0, %s37
      %s19 = sphi 0, %s33
      %s20 = sphi 0, %s29
      %s21 = sphi 0, %s18
      %s22 = sphi 0, %s19
      %s23 = sphi 0, %s20
      %s24 = sphi 0, %s21
      %s25 = sphi 0, %s22
      %s26 = sphi 0, %s23
      %s42 = sphi 0, %s44
      %s45 = sphi 0, %s42
      %s46 = sphi 0, %s45
      %s62 = sphi 0, %s46
      %s70 = sphi 0, %s72
      %s73 = sphi 0, %s70
      %s74 = sphi 0, %s73
      %s90 = sphi 0, %s74
      %s98 = sphi 0, %s100
      %s101 = sphi 0, %s98
      %s102 = sphi 0, %s101
      %s118 = sphi 0, %s102
    $region4: #{mixtral_attention_forward.5} parent=1 // loop_header_branch
      %14 = sbr.rel (%p12) target = $region8
    $region5: #{mixtral_attention_forward.5} parent=1 // loop_body
      %s16 = ssub.s32 %s11, 1
      %s17 = ssub.s32 %s11, 2
      %s27 = sadd.s32 1, %s20
      %p28 = scmp.ge.s32.totalorder %s27, 1
      %s29 = scalar_select %p28, 0, %s27
      %s30 = sadd.s32 1, %s19
      %s31 = scalar_select %p28, %s30, %s19
      %p32 = scmp.ge.s32.totalorder %s31, 2
      %s33 = scalar_select %p32, 0, %s31
      %s34 = sadd.s32 1, %s18
      %s35 = scalar_select %p32, %s34, %s18
      %p36 = scmp.ge.s32.totalorder %s35, 1
      %s37 = scalar_select %p36, 0, %s35
      %s38 = ssub.s32 %s18, %s37
      %s39 = ssub.s32 %s20, %s29
      %s40 = sor.u32 %s38, %s39
      %p41 = scmp.eq.s32.totalorder %s40, 0
      %s43 = sadd.s32 %s42, 1
      %s44 = scalar_select %p41, %s42, %s43
      %p47 = pneg %p41
      %p48 = scmp.eq.s32.totalorder %s11, 1
      %p49 = por %p47, %p48
      %p50 = scmp.ne.s32.totalorder %s42, %s45
      %p51 = scmp.eq.s32.totalorder %s11, 0
      %p52 = por %p50, %p51
      %p53 = scmp.ne.s32.totalorder %s42, %s45
      %p54 = scmp.eq.s32.totalorder %s16, 1
      %p55 = por %p53, %p54
      %p56 = scmp.ne.s32.totalorder %s45, %s46
      %p57 = scmp.eq.s32.totalorder %s16, 0
      %p58 = por %p56, %p57
      %p59 = scmp.ne.s32.totalorder %s45, %s46
      %p60 = scmp.eq.s32.totalorder %s17, 1
      %p61 = por %p59, %p60
      %p63 = scmp.ne.s32.totalorder %s46, %s62
      %p64 = scmp.eq.s32.totalorder %s17, 0
      %p65 = por %p63, %p64
      %s66 = ssub.s32 %s20, %s29
      %s67 = ssub.s32 %s19, %s33
      %s68 = sor.u32 %s66, %s67
      %p69 = scmp.eq.s32.totalorder %s68, 0
      %s71 = sadd.s32 %s70, 1
      %s72 = scalar_select %p69, %s70, %s71
      %p75 = pneg %p69
      %p76 = scmp.eq.s32.totalorder %s11, 1
      %p77 = por %p75, %p76
      %p78 = scmp.ne.s32.totalorder %s70, %s73
      %p79 = scmp.eq.s32.totalorder %s11, 0
      %p80 = por %p78, %p79
      %p81 = scmp.ne.s32.totalorder %s70, %s73
      %p82 = scmp.eq.s32.totalorder %s16, 1
      %p83 = por %p81, %p82
      %p84 = scmp.ne.s32.totalorder %s73, %s74
      %p85 = scmp.eq.s32.totalorder %s16, 0
      %p86 = por %p84, %p85
      %p87 = scmp.ne.s32.totalorder %s73, %s74
      %p88 = scmp.eq.s32.totalorder %s17, 1
      %p89 = por %p87, %p88
      %p91 = scmp.ne.s32.totalorder %s74, %s90
      %p92 = scmp.eq.s32.totalorder %s17, 0
      %p93 = por %p91, %p92
      %s94 = ssub.s32 %s18, %s37
      %s95 = ssub.s32 %s19, %s33
      %s96 = sor.u32 %s94, %s95
      %p97 = scmp.eq.s32.totalorder %s96, 0
      %s99 = sadd.s32 %s98, 1
      %s100 = scalar_select %p97, %s98, %s99
      %p103 = pneg %p97
      %p104 = scmp.eq.s32.totalorder %s11, 1
      %p105 = por %p103, %p104
      %p106 = scmp.ne.s32.totalorder %s98, %s101
      %p107 = scmp.eq.s32.totalorder %s11, 0
      %p108 = por %p106, %p107
      %p109 = scmp.ne.s32.totalorder %s98, %s101
      %p110 = scmp.eq.s32.totalorder %s16, 1
      %p111 = por %p109, %p110
      %p112 = scmp.ne.s32.totalorder %s101, %s102
      %p113 = scmp.eq.s32.totalorder %s16, 0
      %p114 = por %p112, %p113
      %p115 = scmp.ne.s32.totalorder %s101, %s102
      %p116 = scmp.eq.s32.totalorder %s17, 1
      %p117 = por %p115, %p116
      %p119 = scmp.ne.s32.totalorder %s102, %s118
      %p120 = scmp.eq.s32.totalorder %s17, 0
      %p121 = por %p119, %p120
      %p122 = scmp.le.s32.totalorder 1, %s11
      %p123 = scmp.lt.s32.totalorder %s11, 3
      %p124 = pnand %p122, %p123
      %p125 = pneg %p124
      // Predicated region
      $region9: #{mixtral_attention_forward.5} parent=5 // pred_check
        _
      $region10: #{mixtral_attention_forward.5} parent=5 // pred_check_branch
        %127 = sbr.rel (%p124) target = $region12
      $region11: #{mixtral_attention_forward.5} parent=5 // pred_region
        %s128 = ssub.s32 %s11, 1
        // Predicated region
        $region13: #{mixtral_attention_forward.5} parent=11 // pred_check
          %p129 = pneg %p58
        $region14: #{mixtral_attention_forward.5} parent=11 // pred_check_branch
          %131 = sbr.rel (%p129) target = $region16
        $region15: #{mixtral_attention_forward.5} parent=11 // pred_region
          %s132 = smul.u32 2, %s21
          %s133 = smul.u32 4, %s23
          %p134 = scmp.lt.s32.totalorder %s132, 1
          %s135 = scalar_select %p134, %s132, 1
          %p136 = scmp.lt.s32.totalorder %s133, 3
          %s137 = scalar_select %p136, %s133, 3
          %s138 = smul.addr %s135, 4
          %s139 = sadd.s32 %s137, %s138
          %s140 = smul.addr %s139, 8
          %s141 = scalar_lea.vmem %s0, %s140
          %s142 = smul.u32 2, %s21
          %s143 = smul.u32 4, %s23
        $region16: #{mixtral_attention_forward.5} parent=11 // pred_fallthru
          _
      $region12: #{mixtral_attention_forward.5} parent=5 // pred_fallthru
        _
      %p144 = scmp.lt.s32.totalorder %s11, 2
      // Predicated region
      $region17: #{mixtral_attention_forward.5} parent=5 // pred_check
        %p145 = pneg %p144
      $region18: #{mixtral_attention_forward.5} parent=5 // pred_check_branch
        %147 = sbr.rel (%p145) target = $region20
      $region19: #{mixtral_attention_forward.5} parent=5 // pred_region
        // Predicated region
        $region21: #{mixtral_attention_forward.5} parent=19 // pred_check
          %p148 = pneg %p80
        $region22: #{mixtral_attention_forward.5} parent=19 // pred_check_branch
          %150 = sbr.rel (%p148) target = $region24
        $region23: #{mixtral_attention_forward.5} parent=19 // pred_region
          %s151 = sand.u32 %s70, 1
          %s152 = sand.u32 %s70, 1
          %s153 = smul.addr %s152, 1024
          %s154 = scalar_lea.vmem [#allocation3], %s153
          %s155 = smul.u32 64, %s20
          %s156 = smul.u32 2, %s19
          %s157 = smul.addr %s155, 4
          %s158 = sadd.s32 %s156, %s157
          %s159 = smul.addr %s158, 8
          %s160 = scalar_lea.vmem %s1, %s159
          // Predicated region
          $region25: #{mixtral_attention_forward.5} parent=23 // pred_check
            _
          $region26: #{mixtral_attention_forward.5} parent=23 // pred_check_branch
            %162 = sbr.rel (0) target = $region28
          $region27: #{mixtral_attention_forward.5} parent=23 // pred_region
            // Predicated region
            $region29: #{mixtral_attention_forward.5} parent=27 // pred_check
              _
            $region30: #{mixtral_attention_forward.5} parent=27 // pred_check_branch
              %164 = sbr.rel (0) target = $region32
            $region31: #{mixtral_attention_forward.5} parent=27 // pred_region
              loop: start=0, step=1, limit=1
              $region33: #{mixtral_attention_forward.5} parent=31 // loop_pre_header
                _
              $region34: #{mixtral_attention_forward.5} parent=31 // loop_header
                %s166 = sphi 0, %s170
                %p167 = scmp.ge.s32.totalorder %s166, 1
                %s171 = sphi %s160, %s160
                %s172 = sphi %s154, %s154
              $region35: #{mixtral_attention_forward.5} parent=31 // loop_header_branch
                %169 = sbr.rel (%p167) target = $region39
              $region36: #{mixtral_attention_forward.5} parent=31 // loop_body
                %v173 = vld [vmem:[%s171] sm:$0xff]
                %174 = vst [vmem:[%s172] sm:$0xff] %v173
                %v175 = vld [vmem:[%s171 + $0x8] sm:$0xff]
                %176 = vst [vmem:[%s172 + $0x8] sm:$0xff] %v175
                %v177 = vld [vmem:[%s171 + $0x20] sm:$0xff]
                %178 = vst [vmem:[%s172 + $0x10] sm:$0xff] %v177
                %v179 = vld [vmem:[%s171 + $0x28] sm:$0xff]
                %180 = vst [vmem:[%s172 + $0x18] sm:$0xff] %v179
                %v181 = vld [vmem:[%s171 + $0x40] sm:$0xff]
                %182 = vst [vmem:[%s172 + $0x20] sm:$0xff] %v181
                %v183 = vld [vmem:[%s171 + $0x48] sm:$0xff]
                %184 = vst [vmem:[%s172 + $0x28] sm:$0xff] %v183
                %v185 = vld [vmem:[%s171 + $0x60] sm:$0xff]
                %186 = vst [vmem:[%s172 + $0x30] sm:$0xff] %v185
                %v187 = vld [vmem:[%s171 + $0x68] sm:$0xff]
                %188 = vst [vmem:[%s172 + $0x38] sm:$0xff] %v187
                %v189 = vld [vmem:[%s171 + $0x80] sm:$0xff]
                %190 = vst [vmem:[%s172 + $0x40] sm:$0xff] %v189
                %v191 = vld [vmem:[%s171 + $0x88] sm:$0xff]
                %192 = vst [vmem:[%s172 + $0x48] sm:$0xff] %v191
                %v193 = vld [vmem:[%s171 + $0xa0] sm:$0xff]
                %194 = vst [vmem:[%s172 + $0x50] sm:$0xff] %v193
                %v195 = vld [vmem:[%s171 + $0xa8] sm:$0xff]
                %196 = vst [vmem:[%s172 + $0x58] sm:$0xff] %v195
                %v197 = vld [vmem:[%s171 + $0xc0] sm:$0xff]
                %198 = vst [vmem:[%s172 + $0x60] sm:$0xff] %v197
                %v199 = vld [vmem:[%s171 + $0xc8] sm:$0xff]
                %200 = vst [vmem:[%s172 + $0x68] sm:$0xff] %v199
                %v201 = vld [vmem:[%s171 + $0xe0] sm:$0xff]
                %202 = vst [vmem:[%s172 + $0x70] sm:$0xff] %v201
                %v203 = vld [vmem:[%s171 + $0xe8] sm:$0xff]
                %204 = vst [vmem:[%s172 + $0x78] sm:$0xff] %v203
                %v205 = vld [vmem:[%s171 + $0x100] sm:$0xff]
                %206 = vst [vmem:[%s172 + $0x80] sm:$0xff] %v205
                %v207 = vld [vmem:[%s171 + $0x108] sm:$0xff]
                %208 = vst [vmem:[%s172 + $0x88] sm:$0xff] %v207
                %v209 = vld [vmem:[%s171 + $0x120] sm:$0xff]
                %210 = vst [vmem:[%s172 + $0x90] sm:$0xff] %v209
                %v211 = vld [vmem:[%s171 + $0x128] sm:$0xff]
                %212 = vst [vmem:[%s172 + $0x98] sm:$0xff] %v211
                %v213 = vld [vmem:[%s171 + $0x140] sm:$0xff]
                %214 = vst [vmem:[%s172 + $0xa0] sm:$0xff] %v213
                %v215 = vld [vmem:[%s171 + $0x148] sm:$0xff]
                %216 = vst [vmem:[%s172 + $0xa8] sm:$0xff] %v215
                %v217 = vld [vmem:[%s171 + $0x160] sm:$0xff]
                %218 = vst [vmem:[%s172 + $0xb0] sm:$0xff] %v217
                %v219 = vld [vmem:[%s171 + $0x168] sm:$0xff]
                %220 = vst [vmem:[%s172 + $0xb8] sm:$0xff] %v219
                %v221 = vld [vmem:[%s171 + $0x180] sm:$0xff]
                %222 = vst [vmem:[%s172 + $0xc0] sm:$0xff] %v221
                %v223 = vld [vmem:[%s171 + $0x188] sm:$0xff]
                %224 = vst [vmem:[%s172 + $0xc8] sm:$0xff] %v223
                %v225 = vld [vmem:[%s171 + $0x1a0] sm:$0xff]
                %226 = vst [vmem:[%s172 + $0xd0] sm:$0xff] %v225
                %v227 = vld [vmem:[%s171 + $0x1a8] sm:$0xff]
                %228 = vst [vmem:[%s172 + $0xd8] sm:$0xff] %v227
                %v229 = vld [vmem:[%s171 + $0x1c0] sm:$0xff]
                %230 = vst [vmem:[%s172 + $0xe0] sm:$0xff] %v229
                %v231 = vld [vmem:[%s171 + $0x1c8] sm:$0xff]
                %232 = vst [vmem:[%s172 + $0xe8] sm:$0xff] %v231
                %v233 = vld [vmem:[%s171 + $0x1e0] sm:$0xff]
                %234 = vst [vmem:[%s172 + $0xf0] sm:$0xff] %v233
                %v235 = vld [vmem:[%s171 + $0x1e8] sm:$0xff]
                %236 = vst [vmem:[%s172 + $0xf8] sm:$0xff] %v235
                %v237 = vld [vmem:[%s171 + $0x200] sm:$0xff]
                %238 = vst [vmem:[%s172 + $0x100] sm:$0xff] %v237
                %v239 = vld [vmem:[%s171 + $0x208] sm:$0xff]
                %240 = vst [vmem:[%s172 + $0x108] sm:$0xff] %v239
                %v241 = vld [vmem:[%s171 + $0x220] sm:$0xff]
                %242 = vst [vmem:[%s172 + $0x110] sm:$0xff] %v241
                %v243 = vld [vmem:[%s171 + $0x228] sm:$0xff]
                %244 = vst [vmem:[%s172 + $0x118] sm:$0xff] %v243
                %v245 = vld [vmem:[%s171 + $0x240] sm:$0xff]
                %246 = vst [vmem:[%s172 + $0x120] sm:$0xff] %v245
                %v247 = vld [vmem:[%s171 + $0x248] sm:$0xff]
                %248 = vst [vmem:[%s172 + $0x128] sm:$0xff] %v247
                %v249 = vld [vmem:[%s171 + $0x260] sm:$0xff]
                %250 = vst [vmem:[%s172 + $0x130] sm:$0xff] %v249
                %v251 = vld [vmem:[%s171 + $0x268] sm:$0xff]
                %252 = vst [vmem:[%s172 + $0x138] sm:$0xff] %v251
                %v253 = vld [vmem:[%s171 + $0x280] sm:$0xff]
                %254 = vst [vmem:[%s172 + $0x140] sm:$0xff] %v253
                %v255 = vld [vmem:[%s171 + $0x288] sm:$0xff]
                %256 = vst [vmem:[%s172 + $0x148] sm:$0xff] %v255
                %v257 = vld [vmem:[%s171 + $0x2a0] sm:$0xff]
                %258 = vst [vmem:[%s172 + $0x150] sm:$0xff] %v257
                %v259 = vld [vmem:[%s171 + $0x2a8] sm:$0xff]
                %260 = vst [vmem:[%s172 + $0x158] sm:$0xff] %v259
                %v261 = vld [vmem:[%s171 + $0x2c0] sm:$0xff]
                %262 = vst [vmem:[%s172 + $0x160] sm:$0xff] %v261
                %v263 = vld [vmem:[%s171 + $0x2c8] sm:$0xff]
                %264 = vst [vmem:[%s172 + $0x168] sm:$0xff] %v263
                %v265 = vld [vmem:[%s171 + $0x2e0] sm:$0xff]
                %266 = vst [vmem:[%s172 + $0x170] sm:$0xff] %v265
                %v267 = vld [vmem:[%s171 + $0x2e8] sm:$0xff]
                %268 = vst [vmem:[%s172 + $0x178] sm:$0xff] %v267
                %v269 = vld [vmem:[%s171 + $0x300] sm:$0xff]
                %270 = vst [vmem:[%s172 + $0x180] sm:$0xff] %v269
                %v271 = vld [vmem:[%s171 + $0x308] sm:$0xff]
                %272 = vst [vmem:[%s172 + $0x188] sm:$0xff] %v271
                %v273 = vld [vmem:[%s171 + $0x320] sm:$0xff]
                %274 = vst [vmem:[%s172 + $0x190] sm:$0xff] %v273
                %v275 = vld [vmem:[%s171 + $0x328] sm:$0xff]
                %276 = vst [vmem:[%s172 + $0x198] sm:$0xff] %v275
                %v277 = vld [vmem:[%s171 + $0x340] sm:$0xff]
                %278 = vst [vmem:[%s172 + $0x1a0] sm:$0xff] %v277
                %v279 = vld [vmem:[%s171 + $0x348] sm:$0xff]
                %280 = vst [vmem:[%s172 + $0x1a8] sm:$0xff] %v279
                %v281 = vld [vmem:[%s171 + $0x360] sm:$0xff]
                %282 = vst [vmem:[%s172 + $0x1b0] sm:$0xff] %v281
                %v283 = vld [vmem:[%s171 + $0x368] sm:$0xff]
                %284 = vst [vmem:[%s172 + $0x1b8] sm:$0xff] %v283
                %v285 = vld [vmem:[%s171 + $0x380] sm:$0xff]
                %286 = vst [vmem:[%s172 + $0x1c0] sm:$0xff] %v285
                %v287 = vld [vmem:[%s171 + $0x388] sm:$0xff]
                %288 = vst [vmem:[%s172 + $0x1c8] sm:$0xff] %v287
                %v289 = vld [vmem:[%s171 + $0x3a0] sm:$0xff]
                %290 = vst [vmem:[%s172 + $0x1d0] sm:$0xff] %v289
                %v291 = vld [vmem:[%s171 + $0x3a8] sm:$0xff]
                %292 = vst [vmem:[%s172 + $0x1d8] sm:$0xff] %v291
                %v293 = vld [vmem:[%s171 + $0x3c0] sm:$0xff]
                %294 = vst [vmem:[%s172 + $0x1e0] sm:$0xff] %v293
                %v295 = vld [vmem:[%s171 + $0x3c8] sm:$0xff]
                %296 = vst [vmem:[%s172 + $0x1e8] sm:$0xff] %v295
                %v297 = vld [vmem:[%s171 + $0x3e0] sm:$0xff]
                %298 = vst [vmem:[%s172 + $0x1f0] sm:$0xff] %v297
                %v299 = vld [vmem:[%s171 + $0x3e8] sm:$0xff]
                %300 = vst [vmem:[%s172 + $0x1f8] sm:$0xff] %v299
                %v301 = vld [vmem:[%s171 + $0x400] sm:$0xff]
                %302 = vst [vmem:[%s172 + $0x200] sm:$0xff] %v301
                %v303 = vld [vmem:[%s171 + $0x408] sm:$0xff]
                %304 = vst [vmem:[%s172 + $0x208] sm:$0xff] %v303
                %v305 = vld [vmem:[%s171 + $0x420] sm:$0xff]
                %306 = vst [vmem:[%s172 + $0x210] sm:$0xff] %v305
                %v307 = vld [vmem:[%s171 + $0x428] sm:$0xff]
                %308 = vst [vmem:[%s172 + $0x218] sm:$0xff] %v307
                %v309 = vld [vmem:[%s171 + $0x440] sm:$0xff]
                %310 = vst [vmem:[%s172 + $0x220] sm:$0xff] %v309
                %v311 = vld [vmem:[%s171 + $0x448] sm:$0xff]
                %312 = vst [vmem:[%s172 + $0x228] sm:$0xff] %v311
                %v313 = vld [vmem:[%s171 + $0x460] sm:$0xff]
                %314 = vst [vmem:[%s172 + $0x230] sm:$0xff] %v313
                %v315 = vld [vmem:[%s171 + $0x468] sm:$0xff]
                %316 = vst [vmem:[%s172 + $0x238] sm:$0xff] %v315
                %v317 = vld [vmem:[%s171 + $0x480] sm:$0xff]
                %318 = vst [vmem:[%s172 + $0x240] sm:$0xff] %v317
                %v319 = vld [vmem:[%s171 + $0x488] sm:$0xff]
                %320 = vst [vmem:[%s172 + $0x248] sm:$0xff] %v319
                %v321 = vld [vmem:[%s171 + $0x4a0] sm:$0xff]
                %322 = vst [vmem:[%s172 + $0x250] sm:$0xff] %v321
                %v323 = vld [vmem:[%s171 + $0x4a8] sm:$0xff]
                %324 = vst [vmem:[%s172 + $0x258] sm:$0xff] %v323
                %v325 = vld [vmem:[%s171 + $0x4c0] sm:$0xff]
                %326 = vst [vmem:[%s172 + $0x260] sm:$0xff] %v325
                %v327 = vld [vmem:[%s171 + $0x4c8] sm:$0xff]
                %328 = vst [vmem:[%s172 + $0x268] sm:$0xff] %v327
                %v329 = vld [vmem:[%s171 + $0x4e0] sm:$0xff]
                %330 = vst [vmem:[%s172 + $0x270] sm:$0xff] %v329
                %v331 = vld [vmem:[%s171 + $0x4e8] sm:$0xff]
                %332 = vst [vmem:[%s172 + $0x278] sm:$0xff] %v331
                %v333 = vld [vmem:[%s171 + $0x500] sm:$0xff]
                %334 = vst [vmem:[%s172 + $0x280] sm:$0xff] %v333
                %v335 = vld [vmem:[%s171 + $0x508] sm:$0xff]
                %336 = vst [vmem:[%s172 + $0x288] sm:$0xff] %v335
                %v337 = vld [vmem:[%s171 + $0x520] sm:$0xff]
                %338 = vst [vmem:[%s172 + $0x290] sm:$0xff] %v337
                %v339 = vld [vmem:[%s171 + $0x528] sm:$0xff]
                %340 = vst [vmem:[%s172 + $0x298] sm:$0xff] %v339
                %v341 = vld [vmem:[%s171 + $0x540] sm:$0xff]
                %342 = vst [vmem:[%s172 + $0x2a0] sm:$0xff] %v341
                %v343 = vld [vmem:[%s171 + $0x548] sm:$0xff]
                %344 = vst [vmem:[%s172 + $0x2a8] sm:$0xff] %v343
                %v345 = vld [vmem:[%s171 + $0x560] sm:$0xff]
                %346 = vst [vmem:[%s172 + $0x2b0] sm:$0xff] %v345
                %v347 = vld [vmem:[%s171 + $0x568] sm:$0xff]
                %348 = vst [vmem:[%s172 + $0x2b8] sm:$0xff] %v347
                %v349 = vld [vmem:[%s171 + $0x580] sm:$0xff]
                %350 = vst [vmem:[%s172 + $0x2c0] sm:$0xff] %v349
                %v351 = vld [vmem:[%s171 + $0x588] sm:$0xff]
                %352 = vst [vmem:[%s172 + $0x2c8] sm:$0xff] %v351
                %v353 = vld [vmem:[%s171 + $0x5a0] sm:$0xff]
                %354 = vst [vmem:[%s172 + $0x2d0] sm:$0xff] %v353
                %v355 = vld [vmem:[%s171 + $0x5a8] sm:$0xff]
                %356 = vst [vmem:[%s172 + $0x2d8] sm:$0xff] %v355
                %v357 = vld [vmem:[%s171 + $0x5c0] sm:$0xff]
                %358 = vst [vmem:[%s172 + $0x2e0] sm:$0xff] %v357
                %v359 = vld [vmem:[%s171 + $0x5c8] sm:$0xff]
                %360 = vst [vmem:[%s172 + $0x2e8] sm:$0xff] %v359
                %v361 = vld [vmem:[%s171 + $0x5e0] sm:$0xff]
                %362 = vst [vmem:[%s172 + $0x2f0] sm:$0xff] %v361
                %v363 = vld [vmem:[%s171 + $0x5e8] sm:$0xff]
                %364 = vst [vmem:[%s172 + $0x2f8] sm:$0xff] %v363
                %v365 = vld [vmem:[%s171 + $0x600] sm:$0xff]
                %366 = vst [vmem:[%s172 + $0x300] sm:$0xff] %v365
                %v367 = vld [vmem:[%s171 + $0x608] sm:$0xff]
                %368 = vst [vmem:[%s172 + $0x308] sm:$0xff] %v367
                %v369 = vld [vmem:[%s171 + $0x620] sm:$0xff]
                %370 = vst [vmem:[%s172 + $0x310] sm:$0xff] %v369
                %v371 = vld [vmem:[%s171 + $0x628] sm:$0xff]
                %372 = vst [vmem:[%s172 + $0x318] sm:$0xff] %v371
                %v373 = vld [vmem:[%s171 + $0x640] sm:$0xff]
                %374 = vst [vmem:[%s172 + $0x320] sm:$0xff] %v373
                %v375 = vld [vmem:[%s171 + $0x648] sm:$0xff]
                %376 = vst [vmem:[%s172 + $0x328] sm:$0xff] %v375
                %v377 = vld [vmem:[%s171 + $0x660] sm:$0xff]
                %378 = vst [vmem:[%s172 + $0x330] sm:$0xff] %v377
                %v379 = vld [vmem:[%s171 + $0x668] sm:$0xff]
                %380 = vst [vmem:[%s172 + $0x338] sm:$0xff] %v379
                %v381 = vld [vmem:[%s171 + $0x680] sm:$0xff]
                %382 = vst [vmem:[%s172 + $0x340] sm:$0xff] %v381
                %v383 = vld [vmem:[%s171 + $0x688] sm:$0xff]
                %384 = vst [vmem:[%s172 + $0x348] sm:$0xff] %v383
                %v385 = vld [vmem:[%s171 + $0x6a0] sm:$0xff]
                %386 = vst [vmem:[%s172 + $0x350] sm:$0xff] %v385
                %v387 = vld [vmem:[%s171 + $0x6a8] sm:$0xff]
                %388 = vst [vmem:[%s172 + $0x358] sm:$0xff] %v387
                %v389 = vld [vmem:[%s171 + $0x6c0] sm:$0xff]
                %390 = vst [vmem:[%s172 + $0x360] sm:$0xff] %v389
                %v391 = vld [vmem:[%s171 + $0x6c8] sm:$0xff]
                %392 = vst [vmem:[%s172 + $0x368] sm:$0xff] %v391
                %v393 = vld [vmem:[%s171 + $0x6e0] sm:$0xff]
                %394 = vst [vmem:[%s172 + $0x370] sm:$0xff] %v393
                %v395 = vld [vmem:[%s171 + $0x6e8] sm:$0xff]
                %396 = vst [vmem:[%s172 + $0x378] sm:$0xff] %v395
                %v397 = vld [vmem:[%s171 + $0x700] sm:$0xff]
                %398 = vst [vmem:[%s172 + $0x380] sm:$0xff] %v397
                %v399 = vld [vmem:[%s171 + $0x708] sm:$0xff]
                %400 = vst [vmem:[%s172 + $0x388] sm:$0xff] %v399
                %v401 = vld [vmem:[%s171 + $0x720] sm:$0xff]
                %402 = vst [vmem:[%s172 + $0x390] sm:$0xff] %v401
                %v403 = vld [vmem:[%s171 + $0x728] sm:$0xff]
                %404 = vst [vmem:[%s172 + $0x398] sm:$0xff] %v403
                %v405 = vld [vmem:[%s171 + $0x740] sm:$0xff]
                %406 = vst [vmem:[%s172 + $0x3a0] sm:$0xff] %v405
                %v407 = vld [vmem:[%s171 + $0x748] sm:$0xff]
                %408 = vst [vmem:[%s172 + $0x3a8] sm:$0xff] %v407
                %v409 = vld [vmem:[%s171 + $0x760] sm:$0xff]
                %410 = vst [vmem:[%s172 + $0x3b0] sm:$0xff] %v409
                %v411 = vld [vmem:[%s171 + $0x768] sm:$0xff]
                %412 = vst [vmem:[%s172 + $0x3b8] sm:$0xff] %v411
                %v413 = vld [vmem:[%s171 + $0x780] sm:$0xff]
                %414 = vst [vmem:[%s172 + $0x3c0] sm:$0xff] %v413
                %v415 = vld [vmem:[%s171 + $0x788] sm:$0xff]
                %416 = vst [vmem:[%s172 + $0x3c8] sm:$0xff] %v415
                %v417 = vld [vmem:[%s171 + $0x7a0] sm:$0xff]
                %418 = vst [vmem:[%s172 + $0x3d0] sm:$0xff] %v417
                %v419 = vld [vmem:[%s171 + $0x7a8] sm:$0xff]
                %420 = vst [vmem:[%s172 + $0x3d8] sm:$0xff] %v419
                %v421 = vld [vmem:[%s171 + $0x7c0] sm:$0xff]
                %422 = vst [vmem:[%s172 + $0x3e0] sm:$0xff] %v421
                %v423 = vld [vmem:[%s171 + $0x7c8] sm:$0xff]
                %424 = vst [vmem:[%s172 + $0x3e8] sm:$0xff] %v423
                %v425 = vld [vmem:[%s171 + $0x7e0] sm:$0xff]
                %426 = vst [vmem:[%s172 + $0x3f0] sm:$0xff] %v425
                %v427 = vld [vmem:[%s171 + $0x7e8] sm:$0xff]
                %428 = vst [vmem:[%s172 + $0x3f8] sm:$0xff] %v427
              $region37: #{mixtral_attention_forward.5} parent=31 // loop_footer
                %s170 = sadd.s32 1, %s166
              $region38: #{mixtral_attention_forward.5} parent=31 // loop_footer_branch
                %165 = sbr.rel target = $region34
              $region39: #{mixtral_attention_forward.5} parent=31 // loop_exit
                _
            $region32: #{mixtral_attention_forward.5} parent=27 // pred_fallthru
              _
            // Predicated region
            $region40: #{mixtral_attention_forward.5} parent=27 // pred_check
              _
            $region41: #{mixtral_attention_forward.5} parent=27 // pred_check_branch
              %430 = sbr.rel target = $region43
            $region42: #{mixtral_attention_forward.5} parent=27 // pred_region
              _
            $region43: #{mixtral_attention_forward.5} parent=27 // pred_fallthru
              _
          $region28: #{mixtral_attention_forward.5} parent=23 // pred_fallthru
            _
          %431 = vnop
        $region24: #{mixtral_attention_forward.5} parent=19 // pred_fallthru
          _
      $region20: #{mixtral_attention_forward.5} parent=5 // pred_fallthru
        _
      %p432 = scmp.le.s32.totalorder 1, %s11
      %p433 = scmp.lt.s32.totalorder %s11, 3
      %p434 = pnand %p432, %p433
      %p435 = pneg %p434
      // Predicated region
      $region44: #{mixtral_attention_forward.5} parent=5 // pred_check
        _
      $region45: #{mixtral_attention_forward.5} parent=5 // pred_check_branch
        %437 = sbr.rel (%p434) target = $region47
      $region46: #{mixtral_attention_forward.5} parent=5 // pred_region
        %s438 = ssub.s32 %s11, 1
        %s439 = sand.u32 %s73, 1
        %s440 = sand.u32 %s73, 1
        %s441 = smul.addr %s440, 1024
        %s442 = scalar_lea.vmem [#allocation3], %s441
        // Predicated region
        $region48: #{mixtral_attention_forward.5} parent=46 // pred_check
          %p443 = pneg %p86
        $region49: #{mixtral_attention_forward.5} parent=46 // pred_check_branch
          %445 = sbr.rel (%p443) target = $region51
        $region50: #{mixtral_attention_forward.5} parent=46 // pred_region
          _
        $region51: #{mixtral_attention_forward.5} parent=46 // pred_fallthru
          _
        %s446 = smul.u32 2, %s21
        %s447 = smul.u32 4, %s23
        %p448 = scmp.lt.s32.totalorder %s446, 1
        %s449 = scalar_select %p448, %s446, 1
        %p450 = scmp.lt.s32.totalorder %s447, 3
        %s451 = scalar_select %p450, %s447, 3
        %s452 = smul.addr %s449, 4
        %s453 = sadd.s32 %s451, %s452
        %s454 = smul.addr %s453, 8
        %s455 = scalar_lea.vmem %s0, %s454
        %p456 = pneg %p58
        %p457 = pneg %p55
        %s458 = sand.u32 %s73, 1
        %s459 = sand.u32 %s73, 1
        %s460 = smul.addr %s459, 1024
        %s461 = scalar_lea.vmem [#allocation3], %s460
        %p462 = pneg %p86
        %p463 = pneg %p83
        %p464 = pneg %p114
        %p465 = pneg %p111
        %s466 = sand.u32 %s101, 1
        %s467 = scalar_lea.sflag [#allocation5], %s466
        %s468 = sand.u32 %s101, 1
        %s469 = smul.addr %s468, 32
        %s470 = scalar_lea.vmem [#allocation4], %s469
        %s471 = smul.u32 2, %s21
        %s472 = smul.u32 4, %s23
        %p473 = scmp.lt.s32.totalorder %s471, 1
        %s474 = scalar_select %p473, %s471, 1
        %p475 = scmp.lt.s32.totalorder %s472, 3
        %s476 = scalar_select %p475, %s472, 3
        %s477 = smul.addr %s474, 4
        %s478 = sadd.s32 %s476, %s477
        %s479 = smul.addr %s478, 8
        %s480 = scalar_lea.vmem %s0, %s479
        %s481 = smul.u32 2, %s21
        %s482 = smul.u32 4, %s23
        %s483 = smul.u32 64, %s23
        %s484 = smul.u32 2, %s22
        %s485 = smul.u32 2, %s21
        %s486 = smul.u32 2, %s22
        %p487 = scmp.eq.s32.totalorder %s23, 0
        // Predicated region
        $region52: #{mixtral_attention_forward.5} parent=46 // pred_check
          %p488 = pneg %p487
        $region53: #{mixtral_attention_forward.5} parent=46 // pred_check_branch
          %490 = sbr.rel (%p488) target = $region55
        $region54: #{mixtral_attention_forward.5} parent=46 // pred_region
          %491 = vst [vmem:[#allocation2] sm:$0xff] 0.0
          %492 = vst [vmem:[#allocation2 + $0x8] sm:$0xff] 0.0
          %493 = vst [vmem:[#allocation2 + $0x10] sm:$0xff] 0.0
          %494 = vst [vmem:[#allocation2 + $0x18] sm:$0xff] 0.0
        $region55: #{mixtral_attention_forward.5} parent=46 // pred_fallthru
          _
        %v495 = vld [vmem:[#allocation2] sm:$0xff]
        %v496 = vld [vmem:[#allocation2 + $0x8] sm:$0xff]
        %v497 = vld [vmem:[#allocation2 + $0x10] sm:$0xff]
        %v498 = vld [vmem:[#allocation2 + $0x18] sm:$0xff]
        %v499 = vld [vmem:[%s480] sm:$0xff]
        %v500 = vld [vmem:[%s480 + $0x8] sm:$0xff]
        %v501 = vld [vmem:[%s480 + $0x10] sm:$0xff]
        %v502 = vld [vmem:[%s480 + $0x18] sm:$0xff]
        %v503 = vld [vmem:[%s480 + $0x20] sm:$0xff]
        %v504 = vld [vmem:[%s480 + $0x28] sm:$0xff]
        %v505 = vld [vmem:[%s480 + $0x30] sm:$0xff]
        %v506 = vld [vmem:[%s480 + $0x38] sm:$0xff]
        %v507 = vld [vmem:[%s442] sm:$0xff]
        %v508 = vld [vmem:[%s442 + $0x8] sm:$0xff]
        %v509 = vld [vmem:[%s442 + $0x10] sm:$0xff]
        %v510 = vld [vmem:[%s442 + $0x18] sm:$0xff]
        %v511 = vld [vmem:[%s442 + $0x20] sm:$0xff]
        %v512 = vld [vmem:[%s442 + $0x28] sm:$0xff]
        %v513 = vld [vmem:[%s442 + $0x30] sm:$0xff]
        %v514 = vld [vmem:[%s442 + $0x38] sm:$0xff]
        %v515 = vld [vmem:[%s442 + $0x40] sm:$0xff]
        %v516 = vld [vmem:[%s442 + $0x48] sm:$0xff]
        %v517 = vld [vmem:[%s442 + $0x50] sm:$0xff]
        %v518 = vld [vmem:[%s442 + $0x58] sm:$0xff]
        %v519 = vld [vmem:[%s442 + $0x60] sm:$0xff]
        %v520 = vld [vmem:[%s442 + $0x68] sm:$0xff]
        %v521 = vld [vmem:[%s442 + $0x70] sm:$0xff]
        %v522 = vld [vmem:[%s442 + $0x78] sm:$0xff]
        %v523 = vld [vmem:[%s442 + $0x80] sm:$0xff]
        %v524 = vld [vmem:[%s442 + $0x88] sm:$0xff]
        %v525 = vld [vmem:[%s442 + $0x90] sm:$0xff]
        %v526 = vld [vmem:[%s442 + $0x98] sm:$0xff]
        %v527 = vld [vmem:[%s442 + $0xa0] sm:$0xff]
        %v528 = vld [vmem:[%s442 + $0xa8] sm:$0xff]
        %v529 = vld [vmem:[%s442 + $0xb0] sm:$0xff]
        %v530 = vld [vmem:[%s442 + $0xb8] sm:$0xff]
        %v531 = vld [vmem:[%s442 + $0xc0] sm:$0xff]
        %v532 = vld [vmem:[%s442 + $0xc8] sm:$0xff]
        %v533 = vld [vmem:[%s442 + $0xd0] sm:$0xff]
        %v534 = vld [vmem:[%s442 + $0xd8] sm:$0xff]
        %v535 = vld [vmem:[%s442 + $0xe0] sm:$0xff]
        %v536 = vld [vmem:[%s442 + $0xe8] sm:$0xff]
        %v537 = vld [vmem:[%s442 + $0xf0] sm:$0xff]
        %v538 = vld [vmem:[%s442 + $0xf8] sm:$0xff]
        %v539 = vld [vmem:[%s442 + $0x100] sm:$0xff]
        %v540 = vld [vmem:[%s442 + $0x108] sm:$0xff]
        %v541 = vld [vmem:[%s442 + $0x110] sm:$0xff]
        %v542 = vld [vmem:[%s442 + $0x118] sm:$0xff]
        %v543 = vld [vmem:[%s442 + $0x120] sm:$0xff]
        %v544 = vld [vmem:[%s442 + $0x128] sm:$0xff]
        %v545 = vld [vmem:[%s442 + $0x130] sm:$0xff]
        %v546 = vld [vmem:[%s442 + $0x138] sm:$0xff]
        %v547 = vld [vmem:[%s442 + $0x140] sm:$0xff]
        %v548 = vld [vmem:[%s442 + $0x148] sm:$0xff]
        %v549 = vld [vmem:[%s442 + $0x150] sm:$0xff]
        %v550 = vld [vmem:[%s442 + $0x158] sm:$0xff]
        %v551 = vld [vmem:[%s442 + $0x160] sm:$0xff]
        %v552 = vld [vmem:[%s442 + $0x168] sm:$0xff]
        %v553 = vld [vmem:[%s442 + $0x170] sm:$0xff]
        %v554 = vld [vmem:[%s442 + $0x178] sm:$0xff]
        %v555 = vld [vmem:[%s442 + $0x180] sm:$0xff]
        %v556 = vld [vmem:[%s442 + $0x188] sm:$0xff]
        %v557 = vld [vmem:[%s442 + $0x190] sm:$0xff]
        %v558 = vld [vmem:[%s442 + $0x198] sm:$0xff]
        %v559 = vld [vmem:[%s442 + $0x1a0] sm:$0xff]
        %v560 = vld [vmem:[%s442 + $0x1a8] sm:$0xff]
        %v561 = vld [vmem:[%s442 + $0x1b0] sm:$0xff]
        %v562 = vld [vmem:[%s442 + $0x1b8] sm:$0xff]
        %v563 = vld [vmem:[%s442 + $0x1c0] sm:$0xff]
        %v564 = vld [vmem:[%s442 + $0x1c8] sm:$0xff]
        %v565 = vld [vmem:[%s442 + $0x1d0] sm:$0xff]
        %v566 = vld [vmem:[%s442 + $0x1d8] sm:$0xff]
        %v567 = vld [vmem:[%s442 + $0x1e0] sm:$0xff]
        %v568 = vld [vmem:[%s442 + $0x1e8] sm:$0xff]
        %v569 = vld [vmem:[%s442 + $0x1f0] sm:$0xff]
        %v570 = vld [vmem:[%s442 + $0x1f8] sm:$0xff]
        %v571 = vld [vmem:[%s442 + $0x200] sm:$0xff]
        %v572 = vld [vmem:[%s442 + $0x208] sm:$0xff]
        %v573 = vld [vmem:[%s442 + $0x210] sm:$0xff]
        %v574 = vld [vmem:[%s442 + $0x218] sm:$0xff]
        %v575 = vld [vmem:[%s442 + $0x220] sm:$0xff]
        %v576 = vld [vmem:[%s442 + $0x228] sm:$0xff]
        %v577 = vld [vmem:[%s442 + $0x230] sm:$0xff]
        %v578 = vld [vmem:[%s442 + $0x238] sm:$0xff]
        %v579 = vld [vmem:[%s442 + $0x240] sm:$0xff]
        %v580 = vld [vmem:[%s442 + $0x248] sm:$0xff]
        %v581 = vld [vmem:[%s442 + $0x250] sm:$0xff]
        %v582 = vld [vmem:[%s442 + $0x258] sm:$0xff]
        %v583 = vld [vmem:[%s442 + $0x260] sm:$0xff]
        %v584 = vld [vmem:[%s442 + $0x268] sm:$0xff]
        %v585 = vld [vmem:[%s442 + $0x270] sm:$0xff]
        %v586 = vld [vmem:[%s442 + $0x278] sm:$0xff]
        %v587 = vld [vmem:[%s442 + $0x280] sm:$0xff]
        %v588 = vld [vmem:[%s442 + $0x288] sm:$0xff]
        %v589 = vld [vmem:[%s442 + $0x290] sm:$0xff]
        %v590 = vld [vmem:[%s442 + $0x298] sm:$0xff]
        %v591 = vld [vmem:[%s442 + $0x2a0] sm:$0xff]
        %v592 = vld [vmem:[%s442 + $0x2a8] sm:$0xff]
        %v593 = vld [vmem:[%s442 + $0x2b0] sm:$0xff]
        %v594 = vld [vmem:[%s442 + $0x2b8] sm:$0xff]
        %v595 = vld [vmem:[%s442 + $0x2c0] sm:$0xff]
        %v596 = vld [vmem:[%s442 + $0x2c8] sm:$0xff]
        %v597 = vld [vmem:[%s442 + $0x2d0] sm:$0xff]
        %v598 = vld [vmem:[%s442 + $0x2d8] sm:$0xff]
        %v599 = vld [vmem:[%s442 + $0x2e0] sm:$0xff]
        %v600 = vld [vmem:[%s442 + $0x2e8] sm:$0xff]
        %v601 = vld [vmem:[%s442 + $0x2f0] sm:$0xff]
        %v602 = vld [vmem:[%s442 + $0x2f8] sm:$0xff]
        %v603 = vld [vmem:[%s442 + $0x300] sm:$0xff]
        %v604 = vld [vmem:[%s442 + $0x308] sm:$0xff]
        %v605 = vld [vmem:[%s442 + $0x310] sm:$0xff]
        %v606 = vld [vmem:[%s442 + $0x318] sm:$0xff]
        %v607 = vld [vmem:[%s442 + $0x320] sm:$0xff]
        %v608 = vld [vmem:[%s442 + $0x328] sm:$0xff]
        %v609 = vld [vmem:[%s442 + $0x330] sm:$0xff]
        %v610 = vld [vmem:[%s442 + $0x338] sm:$0xff]
        %v611 = vld [vmem:[%s442 + $0x340] sm:$0xff]
        %v612 = vld [vmem:[%s442 + $0x348] sm:$0xff]
        %v613 = vld [vmem:[%s442 + $0x350] sm:$0xff]
        %v614 = vld [vmem:[%s442 + $0x358] sm:$0xff]
        %v615 = vld [vmem:[%s442 + $0x360] sm:$0xff]
        %v616 = vld [vmem:[%s442 + $0x368] sm:$0xff]
        %v617 = vld [vmem:[%s442 + $0x370] sm:$0xff]
        %v618 = vld [vmem:[%s442 + $0x378] sm:$0xff]
        %v619 = vld [vmem:[%s442 + $0x380] sm:$0xff]
        %v620 = vld [vmem:[%s442 + $0x388] sm:$0xff]
        %v621 = vld [vmem:[%s442 + $0x390] sm:$0xff]
        %v622 = vld [vmem:[%s442 + $0x398] sm:$0xff]
        %v623 = vld [vmem:[%s442 + $0x3a0] sm:$0xff]
        %v624 = vld [vmem:[%s442 + $0x3a8] sm:$0xff]
        %v625 = vld [vmem:[%s442 + $0x3b0] sm:$0xff]
        %v626 = vld [vmem:[%s442 + $0x3b8] sm:$0xff]
        %v627 = vld [vmem:[%s442 + $0x3c0] sm:$0xff]
        %v628 = vld [vmem:[%s442 + $0x3c8] sm:$0xff]
        %v629 = vld [vmem:[%s442 + $0x3d0] sm:$0xff]
        %v630 = vld [vmem:[%s442 + $0x3d8] sm:$0xff]
        %v631 = vld [vmem:[%s442 + $0x3e0] sm:$0xff]
        %v632 = vld [vmem:[%s442 + $0x3e8] sm:$0xff]
        %v633 = vld [vmem:[%s442 + $0x3f0] sm:$0xff]
        %v634 = vld [vmem:[%s442 + $0x3f8] sm:$0xff]
        %635 = vmatprep.subr.mxu0 %v508
        %636 = vmatpush1.msra.mxu0 %v507
        %637 = vmatprep.subr.mxu0 %v510
        %638 = vmatpush1.msra.mxu0 %v509
        %639 = vmatprep.subr.mxu0 %v512
        %640 = vmatpush1.msra.mxu0 %v511
        %641 = vmatprep.subr.mxu0 %v514
        %642 = vmatpush1.msra.mxu0 %v513
        %643 = vmatprep.subr.mxu0 %v516
        %644 = vmatpush1.msra.mxu0 %v515
        %645 = vmatprep.subr.mxu0 %v518
        %646 = vmatpush1.msra.mxu0 %v517
        %647 = vmatprep.subr.mxu0 %v520
        %648 = vmatpush1.msra.mxu0 %v519
        %649 = vmatprep.subr.mxu0 %v522
        %650 = vmatpush1.msra.mxu0 %v521
        %651 = vmatprep.subr.mxu0 %v524
        %652 = vmatpush1.msra.mxu0 %v523
        %653 = vmatprep.subr.mxu0 %v526
        %654 = vmatpush1.msra.mxu0 %v525
        %655 = vmatprep.subr.mxu0 %v528
        %656 = vmatpush1.msra.mxu0 %v527
        %657 = vmatprep.subr.mxu0 %v530
        %658 = vmatpush1.msra.mxu0 %v529
        %659 = vmatprep.subr.mxu0 %v532
        %660 = vmatpush1.msra.mxu0 %v531
        %661 = vmatprep.subr.mxu0 %v534
        %662 = vmatpush1.msra.mxu0 %v533
        %663 = vmatprep.subr.mxu0 %v536
        %664 = vmatpush1.msra.mxu0 %v535
        %665 = vmatprep.subr.mxu0 %v538
        %666 = vmatpush1.msra.mxu0 %v537
        %667 = vmatprep.subr.mxu0 %v540
        %668 = vmatpush1.msra.mxu0 %v539
        %669 = vmatprep.subr.mxu0 %v542
        %670 = vmatpush1.msra.mxu0 %v541
        %671 = vmatprep.subr.mxu0 %v544
        %672 = vmatpush1.msra.mxu0 %v543
        %673 = vmatprep.subr.mxu0 %v546
        %674 = vmatpush1.msra.mxu0 %v545
        %675 = vmatprep.subr.mxu0 %v548
        %676 = vmatpush1.msra.mxu0 %v547
        %677 = vmatprep.subr.mxu0 %v550
        %678 = vmatpush1.msra.mxu0 %v549
        %679 = vmatprep.subr.mxu0 %v552
        %680 = vmatpush1.msra.mxu0 %v551
        %681 = vmatprep.subr.mxu0 %v554
        %682 = vmatpush1.msra.mxu0 %v553
        %683 = vmatprep.subr.mxu0 %v556
        %684 = vmatpush1.msra.mxu0 %v555
        %685 = vmatprep.subr.mxu0 %v558
        %686 = vmatpush1.msra.mxu0 %v557
        %687 = vmatprep.subr.mxu0 %v560
        %688 = vmatpush1.msra.mxu0 %v559
        %689 = vmatprep.subr.mxu0 %v562
        %690 = vmatpush1.msra.mxu0 %v561
        %691 = vmatprep.subr.mxu0 %v564
        %692 = vmatpush1.msra.mxu0 %v563
        %693 = vmatprep.subr.mxu0 %v566
        %694 = vmatpush1.msra.mxu0 %v565
        %695 = vmatprep.subr.mxu0 %v568
        %696 = vmatpush1.msra.mxu0 %v567
        %697 = vmatprep.subr.mxu0 %v570
        %698 = vmatpush1.msra.mxu0 %v569
        %699 = vmatprep.mubr.f32.mxu0 %v500
        %700 = vmatmul.mubr.f32.gmra.mrb[0].mxu0 %v499
        %v701 = vpop.f32.mrb[0].mxu0
        %v702 = vadd.f32 0.0, %v701
        %v703 = vpop.f32.mrb[0].mxu0
        %v704 = vadd.f32 0.0, %v703
        %705 = vmatprep.mubr.f32.mxu0 %v504
        %706 = vmatmul.mubr.f32.gmra.mrb[0].mxu0 %v503
        %v707 = vpop.f32.mrb[0].mxu0
        %v708 = vadd.f32 0.0, %v707
        %v709 = vpop.f32.mrb[0].mxu0
        %v710 = vadd.f32 0.0, %v709
        %711 = vdwg.mxu0
        %712 = vmatprep.subr.mxu0 %v572
        %713 = vmatpush1.msra.mxu0 %v571
        %714 = vmatprep.subr.mxu0 %v574
        %715 = vmatpush1.msra.mxu0 %v573
        %716 = vmatprep.subr.mxu0 %v576
        %717 = vmatpush1.msra.mxu0 %v575
        %718 = vmatprep.subr.mxu0 %v578
        %719 = vmatpush1.msra.mxu0 %v577
        %720 = vmatprep.subr.mxu0 %v580
        %721 = vmatpush1.msra.mxu0 %v579
        %722 = vmatprep.subr.mxu0 %v582
        %723 = vmatpush1.msra.mxu0 %v581
        %724 = vmatprep.subr.mxu0 %v584
        %725 = vmatpush1.msra.mxu0 %v583
        %726 = vmatprep.subr.mxu0 %v586
        %727 = vmatpush1.msra.mxu0 %v585
        %728 = vmatprep.subr.mxu0 %v588
        %729 = vmatpush1.msra.mxu0 %v587
        %730 = vmatprep.subr.mxu0 %v590
        %731 = vmatpush1.msra.mxu0 %v589
        %732 = vmatprep.subr.mxu0 %v592
        %733 = vmatpush1.msra.mxu0 %v591
        %734 = vmatprep.subr.mxu0 %v594
        %735 = vmatpush1.msra.mxu0 %v593
        %736 = vmatprep.subr.mxu0 %v596
        %737 = vmatpush1.msra.mxu0 %v595
        %738 = vmatprep.subr.mxu0 %v598
        %739 = vmatpush1.msra.mxu0 %v597
        %740 = vmatprep.subr.mxu0 %v600
        %741 = vmatpush1.msra.mxu0 %v599
        %742 = vmatprep.subr.mxu0 %v602
        %743 = vmatpush1.msra.mxu0 %v601
        %744 = vmatprep.subr.mxu0 %v604
        %745 = vmatpush1.msra.mxu0 %v603
        %746 = vmatprep.subr.mxu0 %v606
        %747 = vmatpush1.msra.mxu0 %v605
        %748 = vmatprep.subr.mxu0 %v608
        %749 = vmatpush1.msra.mxu0 %v607
        %750 = vmatprep.subr.mxu0 %v610
        %751 = vmatpush1.msra.mxu0 %v609
        %752 = vmatprep.subr.mxu0 %v612
        %753 = vmatpush1.msra.mxu0 %v611
        %754 = vmatprep.subr.mxu0 %v614
        %755 = vmatpush1.msra.mxu0 %v613
        %756 = vmatprep.subr.mxu0 %v616
        %757 = vmatpush1.msra.mxu0 %v615
        %758 = vmatprep.subr.mxu0 %v618
        %759 = vmatpush1.msra.mxu0 %v617
        %760 = vmatprep.subr.mxu0 %v620
        %761 = vmatpush1.msra.mxu0 %v619
        %762 = vmatprep.subr.mxu0 %v622
        %763 = vmatpush1.msra.mxu0 %v621
        %764 = vmatprep.subr.mxu0 %v624
        %765 = vmatpush1.msra.mxu0 %v623
        %766 = vmatprep.subr.mxu0 %v626
        %767 = vmatpush1.msra.mxu0 %v625
        %768 = vmatprep.subr.mxu0 %v628
        %769 = vmatpush1.msra.mxu0 %v627
        %770 = vmatprep.subr.mxu0 %v630
        %771 = vmatpush1.msra.mxu0 %v629
        %772 = vmatprep.subr.mxu0 %v632
        %773 = vmatpush1.msra.mxu0 %v631
        %774 = vmatprep.subr.mxu0 %v634
        %775 = vmatpush1.msra.mxu0 %v633
        %776 = vmatprep.mubr.f32.mxu0 %v502
        %777 = vmatmul.mubr.f32.gmra.mrb[0].mxu0 %v501
        %v778 = vpop.f32.mrb[0].mxu0
        %v779 = vadd.f32 %v702, %v778
        %v780 = vpop.f32.mrb[0].mxu0
        %v781 = vadd.f32 %v704, %v780
        %782 = vmatprep.mubr.f32.mxu0 %v506
        %783 = vmatmul.mubr.f32.gmra.mrb[0].mxu0 %v505
        %v784 = vpop.f32.mrb[0].mxu0
        %v785 = vadd.f32 %v708, %v784
        %v786 = vpop.f32.mrb[0].mxu0
        %v787 = vadd.f32 %v710, %v786
        %788 = vdwg.mxu0
        %v789 = vadd.f32 %v495, %v779
        %v790 = vadd.f32 %v496, %v781
        %v791 = vadd.f32 %v497, %v785
        %v792 = vadd.f32 %v498, %v787
        %793 = vst [vmem:[#allocation2] sm:$0xff] %v789
        %794 = vst [vmem:[#allocation2 + $0x8] sm:$0xff] %v790
        %795 = vst [vmem:[#allocation2 + $0x10] sm:$0xff] %v791
        %796 = vst [vmem:[#allocation2 + $0x18] sm:$0xff] %v792
        // Predicated region
        $region56: #{mixtral_attention_forward.5} parent=46 // pred_check
          %p797 = pneg %p487
        $region57: #{mixtral_attention_forward.5} parent=46 // pred_check_branch
          %799 = sbr.rel (%p797) target = $region59
        $region58: #{mixtral_attention_forward.5} parent=46 // pred_region
          %v800 = vld [vmem:[#allocation2] sm:$0xff]
          %v801 = vld [vmem:[#allocation2 + $0x8] sm:$0xff]
          %v802 = vld [vmem:[#allocation2 + $0x10] sm:$0xff]
          %v803 = vld [vmem:[#allocation2 + $0x18] sm:$0xff]
          %804 = vst [vmem:[%s470] sm:$0xff] %v800
          %805 = vst [vmem:[%s470 + $0x8] sm:$0xff] %v801
          %806 = vst [vmem:[%s470 + $0x10] sm:$0xff] %v802
          %807 = vst [vmem:[%s470 + $0x18] sm:$0xff] %v803
        $region59: #{mixtral_attention_forward.5} parent=46 // pred_fallthru
          _
        %s808 = sand.u32 %s101, 1
        %s809 = scalar_lea.sflag [#allocation5], %s808
        %s810 = sand.u32 %s101, 1
        %s811 = smul.addr %s810, 32
        %s812 = scalar_lea.vmem [#allocation4], %s811
        // Predicated region
        $region60: #{mixtral_attention_forward.5} parent=46 // pred_check
          %p813 = pneg %p111
        $region61: #{mixtral_attention_forward.5} parent=46 // pred_check_branch
          %815 = sbr.rel (%p813) target = $region63
        $region62: #{mixtral_attention_forward.5} parent=46 // pred_region
          %s816 = smul.u32 2, %s21
          %s817 = smul.u32 2, %s22
          %s819 = ssub.s32 512, 512
          %820 = vsyncadd %s809, %s819
          %s821 = smul.addr %s816, 4
          %s822 = sadd.s32 %s817, %s821
          %s823 = smul.addr %s822, 128
          %s824 = scalar_lea.hbm %s2, %s823
          %s825 = sshll.u32 %s812, 4
          %s826 = int_to_ptr.vmem [resolvable:$true] %s825
          %831 = dma.vmem_to_hbm [thread:$0]  %s826, 512, %s824, %s809, 256, 512, 16
        $region63: #{mixtral_attention_forward.5} parent=46 // pred_fallthru
          _
      $region47: #{mixtral_attention_forward.5} parent=5 // pred_fallthru
        _
      %p832 = scmp.le.s32.totalorder 2, %s11
      // Predicated region
      $region64: #{mixtral_attention_forward.5} parent=5 // pred_check
        %p833 = pneg %p832
      $region65: #{mixtral_attention_forward.5} parent=5 // pred_check_branch
        %835 = sbr.rel (%p833) target = $region67
      $region66: #{mixtral_attention_forward.5} parent=5 // pred_region
        %s836 = ssub.s32 %s11, 2
        // Predicated region
        $region68: #{mixtral_attention_forward.5} parent=66 // pred_check
          %p837 = pneg %p117
        $region69: #{mixtral_attention_forward.5} parent=66 // pred_check_branch
          %839 = sbr.rel (%p837) target = $region71
        $region70: #{mixtral_attention_forward.5} parent=66 // pred_region
          %s840 = sand.u32 %s102, 1
          %s841 = scalar_lea.sflag [#allocation5], %s840
          %s842 = sand.u32 %s102, 1
          %s843 = smul.addr %s842, 32
          %s844 = scalar_lea.vmem [#allocation4], %s843
          %845 = dma.done %s841, 512
        $region71: #{mixtral_attention_forward.5} parent=66 // pred_fallthru
          _
      $region67: #{mixtral_attention_forward.5} parent=5 // pred_fallthru
        _
    $region6: #{mixtral_attention_forward.5} parent=1 // loop_footer
      %s15 = sadd.s32 1, %s11
    $region7: #{mixtral_attention_forward.5} parent=1 // loop_footer_branch
      %10 = sbr.rel target = $region3
    $region8: #{mixtral_attention_forward.5} parent=1 // loop_exit
      _
    %846 = vsyncpa [#allocation5], 1
    %s847 = scalar_lea.sflag [#allocation5], 1
    %848 = vsyncpa %s847, 1

// kernel: mixtral_attention_forward.4
$region0: #{mixtral_attention_forward.4}
  #allocation0 [shape = 'u32[]', space=smem, size = 0x4, offset = 0x4, fixed_abs, tag = 'smem constant byte address 0x4 - core index']
  #allocation1 [shape = 'u32[144,128]{1,0:T(1,128)}', space=vmem, size = 0x12000, scoped, tag = 'internal scratch']
  #allocation2 [shape = 'f32[2,8,1]{2,1,0:T(8,128)}', space=vmem, size = 0x2000, scoped, tag = 'scratch operand']
  #allocation3 [shape = 'f32[2,8,1]{2,1,0:T(8,128)}', space=vmem, size = 0x2000, scoped, tag = 'scratch operand']
  #allocation4 [shape = 'f32[8,256]{1,0:T(8,128)}', space=vmem, size = 0x2000, scoped, tag = 'scratch operand']
  %s0 = inlined_call_operand.vmem [shape: f32[2,8,512], index: 0, kind: input, shape index: {}]
  %s1 = inlined_call_operand.vmem [shape: f32[2,8,256], index: 1, kind: input, shape index: {}]
  %s2 = inlined_call_operand.vmem [shape: f32[2,8,256], index: 2, kind: input, shape index: {}]
  %s3 = inlined_call_operand.vmem [shape: f32[8,128], index: 3, kind: input, shape index: {}]
  %s4 = inlined_call_operand.vmem [shape: f32[8,128], index: 4, kind: input, shape index: {}]
  %s5 = inlined_call_operand.vmem [shape: f32[2,8,512], index: 5, kind: output, shape index: {}]
  %s6 = sld [smem:[#allocation0]]
  $region65: #{mixtral_attention_forward.4} parent=0
    _
  %s8 = ssub.s32 1, %s6
  %s9 = scalar_select 0, %s8, %s6
  loop: start=0, step=1, limit=6
  $region2: #{mixtral_attention_forward.4} parent=0 // loop_pre_header
    _
  $region3: #{mixtral_attention_forward.4} parent=0 // loop_header
    %s11 = sphi 0, %s15
    %p12 = scmp.ge.s32.totalorder %s11, 6
    %s18 = sphi 0, %s44
    %s19 = sphi 0, %s40
    %s20 = sphi 0, %s36
    %s21 = sphi 0, %s32
    %s22 = sphi 0, %s18
    %s23 = sphi 0, %s19
    %s24 = sphi 0, %s20
    %s25 = sphi 0, %s21
    %s26 = sphi 0, %s22
    %s27 = sphi 0, %s23
    %s28 = sphi 0, %s24
    %s29 = sphi 0, %s25
    %s51 = sphi 0, %s53
    %s54 = sphi 0, %s51
    %s55 = sphi 0, %s54
    %s71 = sphi 0, %s55
    %s81 = sphi 0, %s83
    %s84 = sphi 0, %s81
    %s85 = sphi 0, %s84
    %s101 = sphi 0, %s85
    %s111 = sphi 0, %s113
    %s114 = sphi 0, %s111
    %s115 = sphi 0, %s114
    %s131 = sphi 0, %s115
    %s137 = sphi 0, %s139
    %s140 = sphi 0, %s137
    %s141 = sphi 0, %s140
    %s157 = sphi 0, %s141
    %s163 = sphi 0, %s165
    %s166 = sphi 0, %s163
    %s167 = sphi 0, %s166
    %s183 = sphi 0, %s167
    %s193 = sphi 0, %s195
    %s196 = sphi 0, %s193
    %s197 = sphi 0, %s196
    %s213 = sphi 0, %s197
  $region4: #{mixtral_attention_forward.4} parent=0 // loop_header_branch
    %14 = sbr.rel (%p12) target = $region8
  $region5: #{mixtral_attention_forward.4} parent=0 // loop_body
    %s16 = ssub.s32 %s11, 1
    %s17 = ssub.s32 %s11, 2
    %s30 = sadd.s32 1, %s21
    %p31 = scmp.ge.s32.totalorder %s30, 1
    %s32 = scalar_select %p31, 0, %s30
    %s33 = sadd.s32 1, %s20
    %s34 = scalar_select %p31, %s33, %s20
    %p35 = scmp.ge.s32.totalorder %s34, 1
    %s36 = scalar_select %p35, 0, %s34
    %s37 = sadd.s32 1, %s19
    %s38 = scalar_select %p35, %s37, %s19
    %p39 = scmp.ge.s32.totalorder %s38, 2
    %s40 = scalar_select %p39, 0, %s38
    %s41 = sadd.s32 1, %s18
    %s42 = scalar_select %p39, %s41, %s18
    %p43 = scmp.ge.s32.totalorder %s42, 2
    %s44 = scalar_select %p43, 0, %s42
    %s45 = ssub.s32 %s18, %s44
    %s46 = ssub.s32 %s20, %s36
    %s47 = sor.u32 %s45, %s46
    %s48 = ssub.s32 %s19, %s40
    %s49 = sor.u32 %s47, %s48
    %p50 = scmp.eq.s32.totalorder %s49, 0
    %s52 = sadd.s32 %s51, 1
    %s53 = scalar_select %p50, %s51, %s52
    %p56 = pneg %p50
    %p57 = scmp.eq.s32.totalorder %s11, 3
    %p58 = por %p56, %p57
    %p59 = scmp.ne.s32.totalorder %s51, %s54
    %p60 = scmp.eq.s32.totalorder %s11, 0
    %p61 = por %p59, %p60
    %p62 = scmp.ne.s32.totalorder %s51, %s54
    %p63 = scmp.eq.s32.totalorder %s16, 3
    %p64 = por %p62, %p63
    %p65 = scmp.ne.s32.totalorder %s54, %s55
    %p66 = scmp.eq.s32.totalorder %s16, 0
    %p67 = por %p65, %p66
    %p68 = scmp.ne.s32.totalorder %s54, %s55
    %p69 = scmp.eq.s32.totalorder %s17, 3
    %p70 = por %p68, %p69
    %p72 = scmp.ne.s32.totalorder %s55, %s71
    %p73 = scmp.eq.s32.totalorder %s17, 0
    %p74 = por %p72, %p73
    %s75 = ssub.s32 %s18, %s44
    %s76 = ssub.s32 %s21, %s32
    %s77 = sor.u32 %s75, %s76
    %s78 = ssub.s32 %s19, %s40
    %s79 = sor.u32 %s77, %s78
    %p80 = scmp.eq.s32.totalorder %s79, 0
    %s82 = sadd.s32 %s81, 1
    %s83 = scalar_select %p80, %s81, %s82
    %p86 = pneg %p80
    %p87 = scmp.eq.s32.totalorder %s11, 3
    %p88 = por %p86, %p87
    %p89 = scmp.ne.s32.totalorder %s81, %s84
    %p90 = scmp.eq.s32.totalorder %s11, 0
    %p91 = por %p89, %p90
    %p92 = scmp.ne.s32.totalorder %s81, %s84
    %p93 = scmp.eq.s32.totalorder %s16, 3
    %p94 = por %p92, %p93
    %p95 = scmp.ne.s32.totalorder %s84, %s85
    %p96 = scmp.eq.s32.totalorder %s16, 0
    %p97 = por %p95, %p96
    %p98 = scmp.ne.s32.totalorder %s84, %s85
    %p99 = scmp.eq.s32.totalorder %s17, 3
    %p100 = por %p98, %p99
    %p102 = scmp.ne.s32.totalorder %s85, %s101
    %p103 = scmp.eq.s32.totalorder %s17, 0
    %p104 = por %p102, %p103
    %s105 = ssub.s32 %s18, %s44
    %s106 = ssub.s32 %s21, %s32
    %s107 = sor.u32 %s105, %s106
    %s108 = ssub.s32 %s19, %s40
    %s109 = sor.u32 %s107, %s108
    %p110 = scmp.eq.s32.totalorder %s109, 0
    %s112 = sadd.s32 %s111, 1
    %s113 = scalar_select %p110, %s111, %s112
    %p116 = pneg %p110
    %p117 = scmp.eq.s32.totalorder %s11, 3
    %p118 = por %p116, %p117
    %p119 = scmp.ne.s32.totalorder %s111, %s114
    %p120 = scmp.eq.s32.totalorder %s11, 0
    %p121 = por %p119, %p120
    %p122 = scmp.ne.s32.totalorder %s111, %s114
    %p123 = scmp.eq.s32.totalorder %s16, 3
    %p124 = por %p122, %p123
    %p125 = scmp.ne.s32.totalorder %s114, %s115
    %p126 = scmp.eq.s32.totalorder %s16, 0
    %p127 = por %p125, %p126
    %p128 = scmp.ne.s32.totalorder %s114, %s115
    %p129 = scmp.eq.s32.totalorder %s17, 3
    %p130 = por %p128, %p129
    %p132 = scmp.ne.s32.totalorder %s115, %s131
    %p133 = scmp.eq.s32.totalorder %s17, 0
    %p134 = por %p132, %p133
    %s135 = ssub.s32 %s20, %s36
    %p136 = scmp.eq.s32.totalorder %s135, 0
    %s138 = sadd.s32 %s137, 1
    %s139 = scalar_select %p136, %s137, %s138
    %p142 = pneg %p136
    %p143 = scmp.eq.s32.totalorder %s11, 3
    %p144 = por %p142, %p143
    %p145 = scmp.ne.s32.totalorder %s137, %s140
    %p146 = scmp.eq.s32.totalorder %s11, 0
    %p147 = por %p145, %p146
    %p148 = scmp.ne.s32.totalorder %s137, %s140
    %p149 = scmp.eq.s32.totalorder %s16, 3
    %p150 = por %p148, %p149
    %p151 = scmp.ne.s32.totalorder %s140, %s141
    %p152 = scmp.eq.s32.totalorder %s16, 0
    %p153 = por %p151, %p152
    %p154 = scmp.ne.s32.totalorder %s140, %s141
    %p155 = scmp.eq.s32.totalorder %s17, 3
    %p156 = por %p154, %p155
    %p158 = scmp.ne.s32.totalorder %s141, %s157
    %p159 = scmp.eq.s32.totalorder %s17, 0
    %p160 = por %p158, %p159
    %s161 = ssub.s32 %s21, %s32
    %p162 = scmp.eq.s32.totalorder %s161, 0
    %s164 = sadd.s32 %s163, 1
    %s165 = scalar_select %p162, %s163, %s164
    %p168 = pneg %p162
    %p169 = scmp.eq.s32.totalorder %s11, 3
    %p170 = por %p168, %p169
    %p171 = scmp.ne.s32.totalorder %s163, %s166
    %p172 = scmp.eq.s32.totalorder %s11, 0
    %p173 = por %p171, %p172
    %p174 = scmp.ne.s32.totalorder %s163, %s166
    %p175 = scmp.eq.s32.totalorder %s16, 3
    %p176 = por %p174, %p175
    %p177 = scmp.ne.s32.totalorder %s166, %s167
    %p178 = scmp.eq.s32.totalorder %s16, 0
    %p179 = por %p177, %p178
    %p180 = scmp.ne.s32.totalorder %s166, %s167
    %p181 = scmp.eq.s32.totalorder %s17, 3
    %p182 = por %p180, %p181
    %p184 = scmp.ne.s32.totalorder %s167, %s183
    %p185 = scmp.eq.s32.totalorder %s17, 0
    %p186 = por %p184, %p185
    %s187 = ssub.s32 %s18, %s44
    %s188 = ssub.s32 %s20, %s36
    %s189 = sor.u32 %s187, %s188
    %s190 = ssub.s32 %s19, %s40
    %s191 = sor.u32 %s189, %s190
    %p192 = scmp.eq.s32.totalorder %s191, 0
    %s194 = sadd.s32 %s193, 1
    %s195 = scalar_select %p192, %s193, %s194
    %p198 = pneg %p192
    %p199 = scmp.eq.s32.totalorder %s11, 3
    %p200 = por %p198, %p199
    %p201 = scmp.ne.s32.totalorder %s193, %s196
    %p202 = scmp.eq.s32.totalorder %s11, 0
    %p203 = por %p201, %p202
    %p204 = scmp.ne.s32.totalorder %s193, %s196
    %p205 = scmp.eq.s32.totalorder %s16, 3
    %p206 = por %p204, %p205
    %p207 = scmp.ne.s32.totalorder %s196, %s197
    %p208 = scmp.eq.s32.totalorder %s16, 0
    %p209 = por %p207, %p208
    %p210 = scmp.ne.s32.totalorder %s196, %s197
    %p211 = scmp.eq.s32.totalorder %s17, 3
    %p212 = por %p210, %p211
    %p214 = scmp.ne.s32.totalorder %s197, %s213
    %p215 = scmp.eq.s32.totalorder %s17, 0
    %p216 = por %p214, %p215
    %p217 = scmp.le.s32.totalorder 1, %s11
    %p218 = scmp.lt.s32.totalorder %s11, 5
    %p219 = pnand %p217, %p218
    %p220 = pneg %p219
    // Predicated region
    $region9: #{mixtral_attention_forward.4} parent=5 // pred_check
      _
    $region10: #{mixtral_attention_forward.4} parent=5 // pred_check_branch
      %222 = sbr.rel (%p219) target = $region12
    $region11: #{mixtral_attention_forward.4} parent=5 // pred_region
      %s223 = ssub.s32 %s11, 1
      // Predicated region
      $region13: #{mixtral_attention_forward.4} parent=11 // pred_check
        %p224 = pneg %p153
      $region14: #{mixtral_attention_forward.4} parent=11 // pred_check_branch
        %226 = sbr.rel (%p224) target = $region16
      $region15: #{mixtral_attention_forward.4} parent=11 // pred_region
        %p227 = scmp.lt.s32.totalorder %s24, 0
        %s228 = scalar_select %p227, %s24, 0
        %s229 = smul.addr %s228, 8
        %s230 = scalar_lea.vmem %s3, %s229
      $region16: #{mixtral_attention_forward.4} parent=11 // pred_fallthru
        _
      // Predicated region
      $region17: #{mixtral_attention_forward.4} parent=11 // pred_check
        %p231 = pneg %p179
      $region18: #{mixtral_attention_forward.4} parent=11 // pred_check_branch
        %233 = sbr.rel (%p231) target = $region20
      $region19: #{mixtral_attention_forward.4} parent=11 // pred_region
        %p234 = scmp.lt.s32.totalorder %s25, 0
        %s235 = scalar_select %p234, %s25, 0
        %s236 = smul.addr %s235, 8
        %s237 = scalar_lea.vmem %s4, %s236
      $region20: #{mixtral_attention_forward.4} parent=11 // pred_fallthru
        _
    $region12: #{mixtral_attention_forward.4} parent=5 // pred_fallthru
      _
    %p238 = scmp.lt.s32.totalorder %s11, 4
    // Predicated region
    $region21: #{mixtral_attention_forward.4} parent=5 // pred_check
      %p239 = pneg %p238
    $region22: #{mixtral_attention_forward.4} parent=5 // pred_check_branch
      %241 = sbr.rel (%p239) target = $region24
    $region23: #{mixtral_attention_forward.4} parent=5 // pred_region
      // Predicated region
      $region25: #{mixtral_attention_forward.4} parent=23 // pred_check
        %p242 = pneg %p61
      $region26: #{mixtral_attention_forward.4} parent=23 // pred_check_branch
        %244 = sbr.rel (%p242) target = $region28
      $region27: #{mixtral_attention_forward.4} parent=23 // pred_region
        %s245 = smul.u32 2, %s19
        %p246 = scmp.lt.s32.totalorder %s18, 1
        %s247 = scalar_select %p246, %s18, 1
        %p248 = scmp.lt.s32.totalorder %s20, 0
        %s249 = scalar_select %p248, %s20, 0
        %p250 = scmp.lt.s32.totalorder %s245, 3
        %s251 = scalar_select %p250, %s245, 3
        %s252 = smul.addr %s249, 4
        %s253 = sadd.s32 %s251, %s252
        %s254 = smul.addr %s247, 4
        %s255 = sadd.s32 %s253, %s254
        %s256 = smul.addr %s255, 8
        %s257 = scalar_lea.vmem %s0, %s256
        %s258 = smul.u32 2, %s19
      $region28: #{mixtral_attention_forward.4} parent=23 // pred_fallthru
        _
      // Predicated region
      $region29: #{mixtral_attention_forward.4} parent=23 // pred_check
        %p259 = pneg %p91
      $region30: #{mixtral_attention_forward.4} parent=23 // pred_check_branch
        %261 = sbr.rel (%p259) target = $region32
      $region31: #{mixtral_attention_forward.4} parent=23 // pred_region
        %p262 = scmp.lt.s32.totalorder %s18, 1
        %s263 = scalar_select %p262, %s18, 1
        %p264 = scmp.lt.s32.totalorder %s21, 0
        %s265 = scalar_select %p264, %s21, 0
        %p266 = scmp.lt.s32.totalorder %s19, 1
        %s267 = scalar_select %p266, %s19, 1
        %s268 = smul.addr %s265, 2
        %s269 = sadd.s32 %s267, %s268
        %s270 = smul.addr %s263, 2
        %s271 = sadd.s32 %s269, %s270
        %s272 = smul.addr %s271, 8
        %s273 = scalar_lea.vmem %s1, %s272
      $region32: #{mixtral_attention_forward.4} parent=23 // pred_fallthru
        _
      // Predicated region
      $region33: #{mixtral_attention_forward.4} parent=23 // pred_check
        %p274 = pneg %p121
      $region34: #{mixtral_attention_forward.4} parent=23 // pred_check_branch
        %276 = sbr.rel (%p274) target = $region36
      $region35: #{mixtral_attention_forward.4} parent=23 // pred_region
        %p277 = scmp.lt.s32.totalorder %s18, 1
        %s278 = scalar_select %p277, %s18, 1
        %p279 = scmp.lt.s32.totalorder %s21, 0
        %s280 = scalar_select %p279, %s21, 0
        %p281 = scmp.lt.s32.totalorder %s19, 1
        %s282 = scalar_select %p281, %s19, 1
        %s283 = smul.addr %s280, 2
        %s284 = sadd.s32 %s282, %s283
        %s285 = smul.addr %s278, 2
        %s286 = sadd.s32 %s284, %s285
        %s287 = smul.addr %s286, 8
        %s288 = scalar_lea.vmem %s2, %s287
      $region36: #{mixtral_attention_forward.4} parent=23 // pred_fallthru
        _
    $region24: #{mixtral_attention_forward.4} parent=5 // pred_fallthru
      _
    %p289 = scmp.le.s32.totalorder 1, %s11
    %p290 = scmp.lt.s32.totalorder %s11, 5
    %p291 = pnand %p289, %p290
    %p292 = pneg %p291
    // Predicated region
    $region37: #{mixtral_attention_forward.4} parent=5 // pred_check
      _
    $region38: #{mixtral_attention_forward.4} parent=5 // pred_check_branch
      %294 = sbr.rel (%p291) target = $region40
    $region39: #{mixtral_attention_forward.4} parent=5 // pred_region
      %s295 = ssub.s32 %s11, 1
      %s296 = smul.u32 2, %s23
      %p297 = scmp.lt.s32.totalorder %s22, 1
      %s298 = scalar_select %p297, %s22, 1
      %p299 = scmp.lt.s32.totalorder %s24, 0
      %s300 = scalar_select %p299, %s24, 0
      %p301 = scmp.lt.s32.totalorder %s296, 3
      %s302 = scalar_select %p301, %s296, 3
      %s303 = smul.addr %s300, 4
      %s304 = sadd.s32 %s302, %s303
      %s305 = smul.addr %s298, 4
      %s306 = sadd.s32 %s304, %s305
      %s307 = smul.addr %s306, 8
      %s308 = scalar_lea.vmem %s0, %s307
      %p309 = pneg %p67
      %p310 = pneg %p64
      %p311 = scmp.lt.s32.totalorder %s22, 1
      %s312 = scalar_select %p311, %s22, 1
      %p313 = scmp.lt.s32.totalorder %s25, 0
      %s314 = scalar_select %p313, %s25, 0
      %p315 = scmp.lt.s32.totalorder %s23, 1
      %s316 = scalar_select %p315, %s23, 1
      %s317 = smul.addr %s314, 2
      %s318 = sadd.s32 %s316, %s317
      %s319 = smul.addr %s312, 2
      %s320 = sadd.s32 %s318, %s319
      %s321 = smul.addr %s320, 8
      %s322 = scalar_lea.vmem %s1, %s321
      %p323 = pneg %p97
      %p324 = pneg %p94
      %p325 = scmp.lt.s32.totalorder %s22, 1
      %s326 = scalar_select %p325, %s22, 1
      %p327 = scmp.lt.s32.totalorder %s25, 0
      %s328 = scalar_select %p327, %s25, 0
      %p329 = scmp.lt.s32.totalorder %s23, 1
      %s330 = scalar_select %p329, %s23, 1
      %s331 = smul.addr %s328, 2
      %s332 = sadd.s32 %s330, %s331
      %s333 = smul.addr %s326, 2
      %s334 = sadd.s32 %s332, %s333
      %s335 = smul.addr %s334, 8
      %s336 = scalar_lea.vmem %s2, %s335
      %p337 = pneg %p127
      %p338 = pneg %p124
      %p339 = scmp.lt.s32.totalorder %s24, 0
      %s340 = scalar_select %p339, %s24, 0
      %s341 = smul.addr %s340, 8
      %s342 = scalar_lea.vmem %s3, %s341
      %p343 = pneg %p153
      %p344 = pneg %p150
      %p345 = scmp.lt.s32.totalorder %s25, 0
      %s346 = scalar_select %p345, %s25, 0
      %s347 = smul.addr %s346, 8
      %s348 = scalar_lea.vmem %s4, %s347
      %p349 = pneg %p179
      %p350 = pneg %p176
      %p351 = pneg %p209
      %p352 = pneg %p206
      %s353 = smul.u32 2, %s23
      %p354 = scmp.lt.s32.totalorder %s22, 1
      %s355 = scalar_select %p354, %s22, 1
      %p356 = scmp.lt.s32.totalorder %s24, 0
      %s357 = scalar_select %p356, %s24, 0
      %p358 = scmp.lt.s32.totalorder %s353, 3
      %s359 = scalar_select %p358, %s353, 3
      %s360 = smul.addr %s357, 4
      %s361 = sadd.s32 %s359, %s360
      %s362 = smul.addr %s355, 4
      %s363 = sadd.s32 %s361, %s362
      %s364 = smul.addr %s363, 8
      %s365 = scalar_lea.vmem %s5, %s364
      %s366 = smul.u32 2, %s23
      %p367 = scmp.lt.s32.totalorder %s22, 1
      %s368 = scalar_select %p367, %s22, 1
      %p369 = scmp.lt.s32.totalorder %s24, 0
      %s370 = scalar_select %p369, %s24, 0
      %p371 = scmp.lt.s32.totalorder %s366, 3
      %s372 = scalar_select %p371, %s366, 3
      %s373 = smul.addr %s370, 4
      %s374 = sadd.s32 %s372, %s373
      %s375 = smul.addr %s368, 4
      %s376 = sadd.s32 %s374, %s375
      %s377 = smul.addr %s376, 8
      %s378 = scalar_lea.vmem %s0, %s377
      %s379 = smul.u32 2, %s23
      %p380 = scmp.lt.s32.totalorder %s22, 1
      %s381 = scalar_select %p380, %s22, 1
      %p382 = scmp.lt.s32.totalorder %s25, 0
      %s383 = scalar_select %p382, %s25, 0
      %p384 = scmp.lt.s32.totalorder %s23, 1
      %s385 = scalar_select %p384, %s23, 1
      %s386 = smul.addr %s383, 2
      %s387 = sadd.s32 %s385, %s386
      %s388 = smul.addr %s381, 2
      %s389 = sadd.s32 %s387, %s388
      %s390 = smul.addr %s389, 8
      %s391 = scalar_lea.vmem %s1, %s390
      %p392 = scmp.lt.s32.totalorder %s22, 1
      %s393 = scalar_select %p392, %s22, 1
      %p394 = scmp.lt.s32.totalorder %s25, 0
      %s395 = scalar_select %p394, %s25, 0
      %p396 = scmp.lt.s32.totalorder %s23, 1
      %s397 = scalar_select %p396, %s23, 1
      %s398 = smul.addr %s395, 2
      %s399 = sadd.s32 %s397, %s398
      %s400 = smul.addr %s393, 2
      %s401 = sadd.s32 %s399, %s400
      %s402 = smul.addr %s401, 8
      %s403 = scalar_lea.vmem %s2, %s402
      %p404 = scmp.lt.s32.totalorder %s24, 0
      %s405 = scalar_select %p404, %s24, 0
      %s406 = smul.addr %s405, 8
      %s407 = scalar_lea.vmem %s3, %s406
      %p408 = scmp.lt.s32.totalorder %s25, 0
      %s409 = scalar_select %p408, %s25, 0
      %s410 = smul.addr %s409, 8
      %s411 = scalar_lea.vmem %s4, %s410
      %s412 = smul.u32 2, %s23
      %p413 = scmp.lt.s32.totalorder %s22, 1
      %s414 = scalar_select %p413, %s22, 1
      %p415 = scmp.lt.s32.totalorder %s24, 0
      %s416 = scalar_select %p415, %s24, 0
      %p417 = scmp.lt.s32.totalorder %s412, 3
      %s418 = scalar_select %p417, %s412, 3
      %s419 = smul.addr %s416, 4
      %s420 = sadd.s32 %s418, %s419
      %s421 = smul.addr %s414, 4
      %s422 = sadd.s32 %s420, %s421
      %s423 = smul.addr %s422, 8
      %s424 = scalar_lea.vmem %s5, %s423
      %s425 = smul.u32 2, %s23
      %p426 = scmp.eq.s32.totalorder %s25, 0
      // Predicated region
      $region41: #{mixtral_attention_forward.4} parent=39 // pred_check
        %p427 = pneg %p426
      $region42: #{mixtral_attention_forward.4} parent=39 // pred_check_branch
        %429 = sbr.rel (%p427) target = $region44
      $region43: #{mixtral_attention_forward.4} parent=39 // pred_region
        %vm430 = vcmask 7168
        %431 = vst.msk [vmem:[#allocation2] sm:$0xff] %vm430, -inf
        %432 = vst.msk [vmem:[#allocation2 + $0x8] sm:$0xff] %vm430, -inf
        %433 = vst.msk [vmem:[#allocation3] sm:$0xff] %vm430, 0.0
        %434 = vst.msk [vmem:[#allocation3 + $0x8] sm:$0xff] %vm430, 0.0
        %435 = vst [vmem:[#allocation4] sm:$0xff] 0.0
        %436 = vst [vmem:[#allocation4 + $0x8] sm:$0xff] 0.0
      $region44: #{mixtral_attention_forward.4} parent=39 // pred_fallthru
        _
      %s437 = smul.u32 %s24, 8
      %s438 = smul.u32 %s25, 8
      %s439 = sadd.s32 %s437, 7
      %p440 = scmp.le.s32.totalorder %s438, %s439
      // Predicated region
      $region45: #{mixtral_attention_forward.4} parent=39 // pred_check
        %p441 = pneg %p440
      $region46: #{mixtral_attention_forward.4} parent=39 // pred_check_branch
        %443 = sbr.rel (%p441) target = $region48
      $region47: #{mixtral_attention_forward.4} parent=39 // pred_region
        %v444 = vld [vmem:[%s411] sm:$0xff]
        %v445 = vld [vmem:[%s391] sm:$0xff]
        %v446 = vmul.f32 %v445, %v444
        %448 = vrot.lane.b32.xlu0 %v446, 64
        %v449 = vpop.permute.xlu0 %448
        %v451 = vsub.f32 %v446, %v449
        %453 = vrot.lane.b32.xlu0 %v444, 64
        %v454 = vpop.permute.xlu0 %453
        %v456 = vmul.f32 %v445, %v454
        %458 = vrot.lane.b32.xlu0 %v456, 64
        %v459 = vpop.permute.xlu0 %458
        %v461 = vadd.f32 %v456, %v459
        %v462 = vld [vmem:[%s403] sm:$0xff]
        %v463 = vld [vmem:[%s407] sm:$0xff]
        %v464 = vlaneseq
        %v465 = vshrl.u32 %v464, 7
        %v466 = vstv %s437
        %v467 = vadd.s32 %v466, %v465
        %v468 = vlaneseq
        %v469 = vand.u32 %v468, 127
        %v470 = vstv %s438
        %v471 = vadd.s32 %v470, %v469
        %vm472 = vcmp.le.s32.totalorder %v471, %v467
        %v473 = vld [vmem:[%s378] sm:$0xff]
        %v474 = vmul.f32 %v473, %v463
        %476 = vrot.lane.b32.xlu0 %v474, 64
        %v477 = vpop.permute.xlu0 %476
        %v479 = vsub.f32 %v474, %v477
        %481 = vrot.lane.b32.xlu0 %v463, 64
        %v482 = vpop.permute.xlu0 %481
        %v484 = vmul.f32 %v473, %v482
        %486 = vrot.lane.b32.xlu0 %v484, 64
        %v487 = vpop.permute.xlu0 %486
        %v489 = vadd.f32 %v484, %v487
        %491 = vrot.lane.b32.xlu0 %v489, 64
        %v492 = vpop.permute.xlu0 %491
        %494 = vrot.lane.b32.xlu0 %v461, 64
        %v495 = vpop.permute.xlu0 %494
        %vm496 = vcmask 523264
        %v497 = vsel %vm496, %v492, 0
        %v499 = vsel %vm496, %v495, 0
        %501 = vmatprep.subr.mxu0 0.0
        %502 = vmatpush1.xpose.msra.mxu0 %v499
        %503 = vmatprep.subr.mxu0 0.0
        %504 = vmatpush1.xpose.msra.mxu0 0.0
        %505 = vmatprep.subr.mxu0 0.0
        %506 = vmatpush1.xpose.msra.mxu0 0.0
        %507 = vmatprep.subr.mxu0 0.0
        %508 = vmatpush1.xpose.msra.mxu0 0.0
        %509 = vmatprep.subr.mxu0 0.0
        %510 = vmatpush1.xpose.msra.mxu0 0.0
        %511 = vmatprep.subr.mxu0 0.0
        %512 = vmatpush1.xpose.msra.mxu0 0.0
        %513 = vmatprep.subr.mxu0 0.0
        %514 = vmatpush1.xpose.msra.mxu0 0.0
        %515 = vmatprep.subr.mxu0 0.0
        %516 = vmatpush1.xpose.msra.mxu0 0.0
        %517 = vmatprep.subr.mxu0 0.0
        %518 = vmatpush1.xpose.msra.mxu0 0.0
        %519 = vmatprep.subr.mxu0 0.0
        %520 = vmatpush1.xpose.msra.mxu0 0.0
        %521 = vmatprep.subr.mxu0 0.0
        %522 = vmatpush1.xpose.msra.mxu0 0.0
        %523 = vmatprep.subr.mxu0 0.0
        %524 = vmatpush1.xpose.msra.mxu0 0.0
        %525 = vmatprep.subr.mxu0 0.0
        %526 = vmatpush1.xpose.msra.mxu0 0.0
        %527 = vmatprep.subr.mxu0 0.0
        %528 = vmatpush1.xpose.msra.mxu0 0.0
        %529 = vmatprep.subr.mxu0 0.0
        %530 = vmatpush1.xpose.msra.mxu0 0.0
        %531 = vmatprep.subr.mxu0 0.0
        %532 = vmatpush1.xpose.msra.mxu0 0.0
        %533 = vmatprep.subr.mxu0 0.0
        %534 = vmatpush1.xpose.msra.mxu0 0.0
        %535 = vmatprep.subr.mxu0 0.0
        %536 = vmatpush1.xpose.msra.mxu0 0.0
        %537 = vmatprep.subr.mxu0 0.0
        %538 = vmatpush1.xpose.msra.mxu0 0.0
        %539 = vmatprep.subr.mxu0 0.0
        %540 = vmatpush1.xpose.msra.mxu0 0.0
        %541 = vmatprep.subr.mxu0 0.0
        %542 = vmatpush1.xpose.msra.mxu0 0.0
        %543 = vmatprep.subr.mxu0 0.0
        %544 = vmatpush1.xpose.msra.mxu0 0.0
        %545 = vmatprep.subr.mxu0 0.0
        %546 = vmatpush1.xpose.msra.mxu0 0.0
        %547 = vmatprep.subr.mxu0 0.0
        %548 = vmatpush1.xpose.msra.mxu0 0.0
        %549 = vmatprep.subr.mxu0 0.0
        %550 = vmatpush1.xpose.msra.mxu0 0.0
        %551 = vmatprep.subr.mxu0 0.0
        %552 = vmatpush1.xpose.msra.mxu0 0.0
        %553 = vmatprep.subr.mxu0 0.0
        %554 = vmatpush1.xpose.msra.mxu0 0.0
        %555 = vmatprep.subr.mxu0 0.0
        %556 = vmatpush1.xpose.msra.mxu0 0.0
        %557 = vmatprep.subr.mxu0 0.0
        %558 = vmatpush1.xpose.msra.mxu0 0.0
        %559 = vmatprep.subr.mxu0 0.0
        %560 = vmatpush1.xpose.msra.mxu0 0.0
        %561 = vmatprep.subr.mxu0 0.0
        %562 = vmatpush1.xpose.msra.mxu0 0.0
        %563 = vmatprep.subr.mxu0 0.0
        %564 = vmatpush1.xpose.msra.mxu0 0.0
        %565 = vmatprep.mubr.f32.mxu0 0.0
        %566 = vmatmul.mubr.f32.gmra.mrb[0].mxu0 %v497
        %v567 = vpop.f32.mrb[0].mxu0
        %v568 = vadd.f32 0.0, %v567
        %v569 = vpop.f32.mrb[0].mxu0
        %570 = vdwg.mxu0
        %v572 = vsel %vm496, %v479, 0
        %v575 = vsel %vm496, %v451, 0
        %577 = vmatprep.subr.mxu0 0.0
        %578 = vmatpush1.xpose.msra.mxu0 %v575
        %579 = vmatprep.subr.mxu0 0.0
        %580 = vmatpush1.xpose.msra.mxu0 0.0
        %581 = vmatprep.subr.mxu0 0.0
        %582 = vmatpush1.xpose.msra.mxu0 0.0
        %583 = vmatprep.subr.mxu0 0.0
        %584 = vmatpush1.xpose.msra.mxu0 0.0
        %585 = vmatprep.subr.mxu0 0.0
        %586 = vmatpush1.xpose.msra.mxu0 0.0
        %587 = vmatprep.subr.mxu0 0.0
        %588 = vmatpush1.xpose.msra.mxu0 0.0
        %589 = vmatprep.subr.mxu0 0.0
        %590 = vmatpush1.xpose.msra.mxu0 0.0
        %591 = vmatprep.subr.mxu0 0.0
        %592 = vmatpush1.xpose.msra.mxu0 0.0
        %593 = vmatprep.subr.mxu0 0.0
        %594 = vmatpush1.xpose.msra.mxu0 0.0
        %595 = vmatprep.subr.mxu0 0.0
        %596 = vmatpush1.xpose.msra.mxu0 0.0
        %597 = vmatprep.subr.mxu0 0.0
        %598 = vmatpush1.xpose.msra.mxu0 0.0
        %599 = vmatprep.subr.mxu0 0.0
        %600 = vmatpush1.xpose.msra.mxu0 0.0
        %601 = vmatprep.subr.mxu0 0.0
        %602 = vmatpush1.xpose.msra.mxu0 0.0
        %603 = vmatprep.subr.mxu0 0.0
        %604 = vmatpush1.xpose.msra.mxu0 0.0
        %605 = vmatprep.subr.mxu0 0.0
        %606 = vmatpush1.xpose.msra.mxu0 0.0
        %607 = vmatprep.subr.mxu0 0.0
        %608 = vmatpush1.xpose.msra.mxu0 0.0
        %609 = vmatprep.subr.mxu0 0.0
        %610 = vmatpush1.xpose.msra.mxu0 0.0
        %611 = vmatprep.subr.mxu0 0.0
        %612 = vmatpush1.xpose.msra.mxu0 0.0
        %613 = vmatprep.subr.mxu0 0.0
        %614 = vmatpush1.xpose.msra.mxu0 0.0
        %615 = vmatprep.subr.mxu0 0.0
        %616 = vmatpush1.xpose.msra.mxu0 0.0
        %617 = vmatprep.subr.mxu0 0.0
        %618 = vmatpush1.xpose.msra.mxu0 0.0
        %619 = vmatprep.subr.mxu0 0.0
        %620 = vmatpush1.xpose.msra.mxu0 0.0
        %621 = vmatprep.subr.mxu0 0.0
        %622 = vmatpush1.xpose.msra.mxu0 0.0
        %623 = vmatprep.subr.mxu0 0.0
        %624 = vmatpush1.xpose.msra.mxu0 0.0
        %625 = vmatprep.subr.mxu0 0.0
        %626 = vmatpush1.xpose.msra.mxu0 0.0
        %627 = vmatprep.subr.mxu0 0.0
        %628 = vmatpush1.xpose.msra.mxu0 0.0
        %629 = vmatprep.subr.mxu0 0.0
        %630 = vmatpush1.xpose.msra.mxu0 0.0
        %631 = vmatprep.subr.mxu0 0.0
        %632 = vmatpush1.xpose.msra.mxu0 0.0
        %633 = vmatprep.subr.mxu0 0.0
        %634 = vmatpush1.xpose.msra.mxu0 0.0
        %635 = vmatprep.subr.mxu0 0.0
        %636 = vmatpush1.xpose.msra.mxu0 0.0
        %637 = vmatprep.subr.mxu0 0.0
        %638 = vmatpush1.xpose.msra.mxu0 0.0
        %639 = vmatprep.subr.mxu0 0.0
        %640 = vmatpush1.xpose.msra.mxu0 0.0
        %641 = vmatprep.mubr.f32.mxu0 0.0
        %642 = vmatmul.mubr.f32.gmra.mrb[0].mxu0 %v572
        %v643 = vpop.f32.mrb[0].mxu0
        %v644 = vadd.f32 %v568, %v643
        %v645 = vpop.f32.mrb[0].mxu0
        %646 = vdwg.mxu0
        %v647 = vsel %vm472, %v644, -1e+30
        %v648 = vld [vmem:[#allocation2] sm:$0xff]
        %vm649 = vcmask 64512
        %v650 = vsel %vm649, %v647, -inf
        %651 = vmax.xlane.f32.xlu0 %v650
        %v652 = vpop.xlane.xlu0 %651
        %v653 = vmax.f32 %v648, %v652
        %v654 = vsub.f32 %v648, %v653
        %v655 = vmul.f32 %v654, 1.442695
        %v656 = vpow.pop %v655
        %658 = vset.pattern.permute.xlu0 0
        %659 = vperm.xlu0 %658, %v653
        %v660 = vpop.permute.xlu0 %659
        %v662 = vsub.f32 %v647, %v660
        %v663 = vmul.f32 %v662, 1.442695
        %v664 = vpow.pop %v663
        %v665 = vld [vmem:[#allocation3] sm:$0xff]
        %v666 = vmul.f32 %v656, %v665
        %v667 = vsel %vm649, %v664, 0.0
        %668 = vadd.xlane.f32.xlu0 %v667
        %v669 = vpop.xlane.xlu0 %668
        %v670 = vadd.f32 %v666, %v669
        %vm671 = vcmask 7168
        %672 = vst.msk [vmem:[#allocation3] sm:$0xff] %vm671, %v670
        %v673 = vld [vmem:[#allocation4] sm:$0xff]
        %675 = vset.pattern.permute.xlu0 0
        %676 = vperm.xlu0 %675, %v656
        %v677 = vpop.permute.xlu0 %676
        %v679 = vmul.f32 %v677, %v673
        %v681 = vsel %vm649, %v664, 0
        %683 = vmatprep.subr.mxu0 0.0
        %684 = vmatpush1.msra.mxu0 %v462
        %685 = vmatprep.subr.mxu0 0.0
        %686 = vmatpush1.msra.mxu0 0.0
        %687 = vmatprep.subr.mxu0 0.0
        %688 = vmatpush1.msra.mxu0 0.0
        %689 = vmatprep.subr.mxu0 0.0
        %690 = vmatpush1.msra.mxu0 0.0
        %691 = vmatprep.subr.mxu0 0.0
        %692 = vmatpush1.msra.mxu0 0.0
        %693 = vmatprep.subr.mxu0 0.0
        %694 = vmatpush1.msra.mxu0 0.0
        %695 = vmatprep.subr.mxu0 0.0
        %696 = vmatpush1.msra.mxu0 0.0
        %697 = vmatprep.subr.mxu0 0.0
        %698 = vmatpush1.msra.mxu0 0.0
        %699 = vmatprep.subr.mxu0 0.0
        %700 = vmatpush1.msra.mxu0 0.0
        %701 = vmatprep.subr.mxu0 0.0
        %702 = vmatpush1.msra.mxu0 0.0
        %703 = vmatprep.subr.mxu0 0.0
        %704 = vmatpush1.msra.mxu0 0.0
        %705 = vmatprep.subr.mxu0 0.0
        %706 = vmatpush1.msra.mxu0 0.0
        %707 = vmatprep.subr.mxu0 0.0
        %708 = vmatpush1.msra.mxu0 0.0
        %709 = vmatprep.subr.mxu0 0.0
        %710 = vmatpush1.msra.mxu0 0.0
        %711 = vmatprep.subr.mxu0 0.0
        %712 = vmatpush1.msra.mxu0 0.0
        %713 = vmatprep.subr.mxu0 0.0
        %714 = vmatpush1.msra.mxu0 0.0
        %715 = vmatprep.subr.mxu0 0.0
        %716 = vmatpush1.msra.mxu0 0.0
        %717 = vmatprep.subr.mxu0 0.0
        %718 = vmatpush1.msra.mxu0 0.0
        %719 = vmatprep.subr.mxu0 0.0
        %720 = vmatpush1.msra.mxu0 0.0
        %721 = vmatprep.subr.mxu0 0.0
        %722 = vmatpush1.msra.mxu0 0.0
        %723 = vmatprep.subr.mxu0 0.0
        %724 = vmatpush1.msra.mxu0 0.0
        %725 = vmatprep.subr.mxu0 0.0
        %726 = vmatpush1.msra.mxu0 0.0
        %727 = vmatprep.subr.mxu0 0.0
        %728 = vmatpush1.msra.mxu0 0.0
        %729 = vmatprep.subr.mxu0 0.0
        %730 = vmatpush1.msra.mxu0 0.0
        %731 = vmatprep.subr.mxu0 0.0
        %732 = vmatpush1.msra.mxu0 0.0
        %733 = vmatprep.subr.mxu0 0.0
        %734 = vmatpush1.msra.mxu0 0.0
        %735 = vmatprep.subr.mxu0 0.0
        %736 = vmatpush1.msra.mxu0 0.0
        %737 = vmatprep.subr.mxu0 0.0
        %738 = vmatpush1.msra.mxu0 0.0
        %739 = vmatprep.subr.mxu0 0.0
        %740 = vmatpush1.msra.mxu0 0.0
        %741 = vmatprep.subr.mxu0 0.0
        %742 = vmatpush1.msra.mxu0 0.0
        %743 = vmatprep.subr.mxu0 0.0
        %744 = vmatpush1.msra.mxu0 0.0
        %745 = vmatprep.subr.mxu0 0.0
        %746 = vmatpush1.msra.mxu0 0.0
        %747 = vmatprep.mubr.f32.mxu0 0.0
        %748 = vmatmul.mubr.f32.gmra.mrb[0].mxu0 %v681
        %v749 = vpop.f32.mrb[0].mxu0
        %v750 = vadd.f32 0.0, %v749
        %v751 = vpop.f32.mrb[0].mxu0
        %752 = vdwg.mxu0
        %v753 = vadd.f32 %v679, %v750
        %754 = vst [vmem:[#allocation4] sm:$0xff] %v753
        %755 = vst.msk [vmem:[#allocation2] sm:$0xff] %vm671, %v653
        %v756 = vld [vmem:[%s378 + $0x8] sm:$0xff]
        %v757 = vmul.f32 %v756, %v463
        %759 = vrot.lane.b32.xlu0 %v757, 64
        %v760 = vpop.permute.xlu0 %759
        %v762 = vsub.f32 %v757, %v760
        %v763 = vmul.f32 %v756, %v482
        %765 = vrot.lane.b32.xlu0 %v763, 64
        %v766 = vpop.permute.xlu0 %765
        %v768 = vadd.f32 %v763, %v766
        %770 = vrot.lane.b32.xlu0 %v768, 64
        %v771 = vpop.permute.xlu0 %770
        %v772 = vsel %vm496, %v771, 0
        %774 = vmatprep.subr.mxu0 0.0
        %775 = vmatpush1.xpose.msra.mxu0 %v499
        %776 = vmatprep.subr.mxu0 0.0
        %777 = vmatpush1.xpose.msra.mxu0 0.0
        %778 = vmatprep.subr.mxu0 0.0
        %779 = vmatpush1.xpose.msra.mxu0 0.0
        %780 = vmatprep.subr.mxu0 0.0
        %781 = vmatpush1.xpose.msra.mxu0 0.0
        %782 = vmatprep.subr.mxu0 0.0
        %783 = vmatpush1.xpose.msra.mxu0 0.0
        %784 = vmatprep.subr.mxu0 0.0
        %785 = vmatpush1.xpose.msra.mxu0 0.0
        %786 = vmatprep.subr.mxu0 0.0
        %787 = vmatpush1.xpose.msra.mxu0 0.0
        %788 = vmatprep.subr.mxu0 0.0
        %789 = vmatpush1.xpose.msra.mxu0 0.0
        %790 = vmatprep.subr.mxu0 0.0
        %791 = vmatpush1.xpose.msra.mxu0 0.0
        %792 = vmatprep.subr.mxu0 0.0
        %793 = vmatpush1.xpose.msra.mxu0 0.0
        %794 = vmatprep.subr.mxu0 0.0
        %795 = vmatpush1.xpose.msra.mxu0 0.0
        %796 = vmatprep.subr.mxu0 0.0
        %797 = vmatpush1.xpose.msra.mxu0 0.0
        %798 = vmatprep.subr.mxu0 0.0
        %799 = vmatpush1.xpose.msra.mxu0 0.0
        %800 = vmatprep.subr.mxu0 0.0
        %801 = vmatpush1.xpose.msra.mxu0 0.0
        %802 = vmatprep.subr.mxu0 0.0
        %803 = vmatpush1.xpose.msra.mxu0 0.0
        %804 = vmatprep.subr.mxu0 0.0
        %805 = vmatpush1.xpose.msra.mxu0 0.0
        %806 = vmatprep.subr.mxu0 0.0
        %807 = vmatpush1.xpose.msra.mxu0 0.0
        %808 = vmatprep.subr.mxu0 0.0
        %809 = vmatpush1.xpose.msra.mxu0 0.0
        %810 = vmatprep.subr.mxu0 0.0
        %811 = vmatpush1.xpose.msra.mxu0 0.0
        %812 = vmatprep.subr.mxu0 0.0
        %813 = vmatpush1.xpose.msra.mxu0 0.0
        %814 = vmatprep.subr.mxu0 0.0
        %815 = vmatpush1.xpose.msra.mxu0 0.0
        %816 = vmatprep.subr.mxu0 0.0
        %817 = vmatpush1.xpose.msra.mxu0 0.0
        %818 = vmatprep.subr.mxu0 0.0
        %819 = vmatpush1.xpose.msra.mxu0 0.0
        %820 = vmatprep.subr.mxu0 0.0
        %821 = vmatpush1.xpose.msra.mxu0 0.0
        %822 = vmatprep.subr.mxu0 0.0
        %823 = vmatpush1.xpose.msra.mxu0 0.0
        %824 = vmatprep.subr.mxu0 0.0
        %825 = vmatpush1.xpose.msra.mxu0 0.0
        %826 = vmatprep.subr.mxu0 0.0
        %827 = vmatpush1.xpose.msra.mxu0 0.0
        %828 = vmatprep.subr.mxu0 0.0
        %829 = vmatpush1.xpose.msra.mxu0 0.0
        %830 = vmatprep.subr.mxu0 0.0
        %831 = vmatpush1.xpose.msra.mxu0 0.0
        %832 = vmatprep.subr.mxu0 0.0
        %833 = vmatpush1.xpose.msra.mxu0 0.0
        %834 = vmatprep.subr.mxu0 0.0
        %835 = vmatpush1.xpose.msra.mxu0 0.0
        %836 = vmatprep.subr.mxu0 0.0
        %837 = vmatpush1.xpose.msra.mxu0 0.0
        %838 = vmatprep.mubr.f32.mxu0 0.0
        %839 = vmatmul.mubr.f32.gmra.mrb[0].mxu0 %v772
        %v840 = vpop.f32.mrb[0].mxu0
        %v841 = vadd.f32 0.0, %v840
        %v842 = vpop.f32.mrb[0].mxu0
        %843 = vdwg.mxu0
        %v845 = vsel %vm496, %v762, 0
        %847 = vmatprep.subr.mxu0 0.0
        %848 = vmatpush1.xpose.msra.mxu0 %v575
        %849 = vmatprep.subr.mxu0 0.0
        %850 = vmatpush1.xpose.msra.mxu0 0.0
        %851 = vmatprep.subr.mxu0 0.0
        %852 = vmatpush1.xpose.msra.mxu0 0.0
        %853 = vmatprep.subr.mxu0 0.0
        %854 = vmatpush1.xpose.msra.mxu0 0.0
        %855 = vmatprep.subr.mxu0 0.0
        %856 = vmatpush1.xpose.msra.mxu0 0.0
        %857 = vmatprep.subr.mxu0 0.0
        %858 = vmatpush1.xpose.msra.mxu0 0.0
        %859 = vmatprep.subr.mxu0 0.0
        %860 = vmatpush1.xpose.msra.mxu0 0.0
        %861 = vmatprep.subr.mxu0 0.0
        %862 = vmatpush1.xpose.msra.mxu0 0.0
        %863 = vmatprep.subr.mxu0 0.0
        %864 = vmatpush1.xpose.msra.mxu0 0.0
        %865 = vmatprep.subr.mxu0 0.0
        %866 = vmatpush1.xpose.msra.mxu0 0.0
        %867 = vmatprep.subr.mxu0 0.0
        %868 = vmatpush1.xpose.msra.mxu0 0.0
        %869 = vmatprep.subr.mxu0 0.0
        %870 = vmatpush1.xpose.msra.mxu0 0.0
        %871 = vmatprep.subr.mxu0 0.0
        %872 = vmatpush1.xpose.msra.mxu0 0.0
        %873 = vmatprep.subr.mxu0 0.0
        %874 = vmatpush1.xpose.msra.mxu0 0.0
        %875 = vmatprep.subr.mxu0 0.0
        %876 = vmatpush1.xpose.msra.mxu0 0.0
        %877 = vmatprep.subr.mxu0 0.0
        %878 = vmatpush1.xpose.msra.mxu0 0.0
        %879 = vmatprep.subr.mxu0 0.0
        %880 = vmatpush1.xpose.msra.mxu0 0.0
        %881 = vmatprep.subr.mxu0 0.0
        %882 = vmatpush1.xpose.msra.mxu0 0.0
        %883 = vmatprep.subr.mxu0 0.0
        %884 = vmatpush1.xpose.msra.mxu0 0.0
        %885 = vmatprep.subr.mxu0 0.0
        %886 = vmatpush1.xpose.msra.mxu0 0.0
        %887 = vmatprep.subr.mxu0 0.0
        %888 = vmatpush1.xpose.msra.mxu0 0.0
        %889 = vmatprep.subr.mxu0 0.0
        %890 = vmatpush1.xpose.msra.mxu0 0.0
        %891 = vmatprep.subr.mxu0 0.0
        %892 = vmatpush1.xpose.msra.mxu0 0.0
        %893 = vmatprep.subr.mxu0 0.0
        %894 = vmatpush1.xpose.msra.mxu0 0.0
        %895 = vmatprep.subr.mxu0 0.0
        %896 = vmatpush1.xpose.msra.mxu0 0.0
        %897 = vmatprep.subr.mxu0 0.0
        %898 = vmatpush1.xpose.msra.mxu0 0.0
        %899 = vmatprep.subr.mxu0 0.0
        %900 = vmatpush1.xpose.msra.mxu0 0.0
        %901 = vmatprep.subr.mxu0 0.0
        %902 = vmatpush1.xpose.msra.mxu0 0.0
        %903 = vmatprep.subr.mxu0 0.0
        %904 = vmatpush1.xpose.msra.mxu0 0.0
        %905 = vmatprep.subr.mxu0 0.0
        %906 = vmatpush1.xpose.msra.mxu0 0.0
        %907 = vmatprep.subr.mxu0 0.0
        %908 = vmatpush1.xpose.msra.mxu0 0.0
        %909 = vmatprep.subr.mxu0 0.0
        %910 = vmatpush1.xpose.msra.mxu0 0.0
        %911 = vmatprep.mubr.f32.mxu0 0.0
        %912 = vmatmul.mubr.f32.gmra.mrb[0].mxu0 %v845
        %v913 = vpop.f32.mrb[0].mxu0
        %v914 = vadd.f32 %v841, %v913
        %v915 = vpop.f32.mrb[0].mxu0
        %916 = vdwg.mxu0
        %v917 = vsel %vm472, %v914, -1e+30
        %s918 = scalar_lea.vmem [#allocation2], 8
        %v919 = vld [vmem:[%s918] sm:$0xff]
        %v920 = vsel %vm649, %v917, -inf
        %921 = vmax.xlane.f32.xlu0 %v920
        %v922 = vpop.xlane.xlu0 %921
        %v923 = vmax.f32 %v919, %v922
        %v924 = vsub.f32 %v919, %v923
        %v925 = vmul.f32 %v924, 1.442695
        %v926 = vpow.pop %v925
        %928 = vset.pattern.permute.xlu0 0
        %929 = vperm.xlu0 %928, %v923
        %v930 = vpop.permute.xlu0 %929
        %v932 = vsub.f32 %v917, %v930
        %v933 = vmul.f32 %v932, 1.442695
        %v934 = vpow.pop %v933
        %s935 = scalar_lea.vmem [#allocation3], 8
        %v936 = vld [vmem:[%s935] sm:$0xff]
        %v937 = vmul.f32 %v926, %v936
        %v938 = vsel %vm649, %v934, 0.0
        %939 = vadd.xlane.f32.xlu0 %v938
        %v940 = vpop.xlane.xlu0 %939
        %v941 = vadd.f32 %v937, %v940
        %942 = vst.msk [vmem:[%s935] sm:$0xff] %vm671, %v941
        %v943 = vld [vmem:[#allocation4 + $0x8] sm:$0xff]
        %945 = vset.pattern.permute.xlu0 0
        %946 = vperm.xlu0 %945, %v926
        %v947 = vpop.permute.xlu0 %946
        %v949 = vmul.f32 %v947, %v943
        %v951 = vsel %vm649, %v934, 0
        %953 = vmatprep.subr.mxu0 0.0
        %954 = vmatpush1.msra.mxu0 %v462
        %955 = vmatprep.subr.mxu0 0.0
        %956 = vmatpush1.msra.mxu0 0.0
        %957 = vmatprep.subr.mxu0 0.0
        %958 = vmatpush1.msra.mxu0 0.0
        %959 = vmatprep.subr.mxu0 0.0
        %960 = vmatpush1.msra.mxu0 0.0
        %961 = vmatprep.subr.mxu0 0.0
        %962 = vmatpush1.msra.mxu0 0.0
        %963 = vmatprep.subr.mxu0 0.0
        %964 = vmatpush1.msra.mxu0 0.0
        %965 = vmatprep.subr.mxu0 0.0
        %966 = vmatpush1.msra.mxu0 0.0
        %967 = vmatprep.subr.mxu0 0.0
        %968 = vmatpush1.msra.mxu0 0.0
        %969 = vmatprep.subr.mxu0 0.0
        %970 = vmatpush1.msra.mxu0 0.0
        %971 = vmatprep.subr.mxu0 0.0
        %972 = vmatpush1.msra.mxu0 0.0
        %973 = vmatprep.subr.mxu0 0.0
        %974 = vmatpush1.msra.mxu0 0.0
        %975 = vmatprep.subr.mxu0 0.0
        %976 = vmatpush1.msra.mxu0 0.0
        %977 = vmatprep.subr.mxu0 0.0
        %978 = vmatpush1.msra.mxu0 0.0
        %979 = vmatprep.subr.mxu0 0.0
        %980 = vmatpush1.msra.mxu0 0.0
        %981 = vmatprep.subr.mxu0 0.0
        %982 = vmatpush1.msra.mxu0 0.0
        %983 = vmatprep.subr.mxu0 0.0
        %984 = vmatpush1.msra.mxu0 0.0
        %985 = vmatprep.subr.mxu0 0.0
        %986 = vmatpush1.msra.mxu0 0.0
        %987 = vmatprep.subr.mxu0 0.0
        %988 = vmatpush1.msra.mxu0 0.0
        %989 = vmatprep.subr.mxu0 0.0
        %990 = vmatpush1.msra.mxu0 0.0
        %991 = vmatprep.subr.mxu0 0.0
        %992 = vmatpush1.msra.mxu0 0.0
        %993 = vmatprep.subr.mxu0 0.0
        %994 = vmatpush1.msra.mxu0 0.0
        %995 = vmatprep.subr.mxu0 0.0
        %996 = vmatpush1.msra.mxu0 0.0
        %997 = vmatprep.subr.mxu0 0.0
        %998 = vmatpush1.msra.mxu0 0.0
        %999 = vmatprep.subr.mxu0 0.0
        %1000 = vmatpush1.msra.mxu0 0.0
        %1001 = vmatprep.subr.mxu0 0.0
        %1002 = vmatpush1.msra.mxu0 0.0
        %1003 = vmatprep.subr.mxu0 0.0
        %1004 = vmatpush1.msra.mxu0 0.0
        %1005 = vmatprep.subr.mxu0 0.0
        %1006 = vmatpush1.msra.mxu0 0.0
        %1007 = vmatprep.subr.mxu0 0.0
        %1008 = vmatpush1.msra.mxu0 0.0
        %1009 = vmatprep.subr.mxu0 0.0
        %1010 = vmatpush1.msra.mxu0 0.0
        %1011 = vmatprep.subr.mxu0 0.0
        %1012 = vmatpush1.msra.mxu0 0.0
        %1013 = vmatprep.subr.mxu0 0.0
        %1014 = vmatpush1.msra.mxu0 0.0
        %1015 = vmatprep.subr.mxu0 0.0
        %1016 = vmatpush1.msra.mxu0 0.0
        %1017 = vmatprep.mubr.f32.mxu0 0.0
        %1018 = vmatmul.mubr.f32.gmra.mrb[0].mxu0 %v951
        %v1019 = vpop.f32.mrb[0].mxu0
        %v1020 = vadd.f32 0.0, %v1019
        %v1021 = vpop.f32.mrb[0].mxu0
        %1022 = vdwg.mxu0
        %v1023 = vadd.f32 %v949, %v1020
        %1024 = vst [vmem:[#allocation4 + $0x8] sm:$0xff] %v1023
        %1025 = vst.msk [vmem:[%s918] sm:$0xff] %vm671, %v923
      $region48: #{mixtral_attention_forward.4} parent=39 // pred_fallthru
        _
      // Predicated region
      $region49: #{mixtral_attention_forward.4} parent=39 // pred_check
        %p1026 = pneg %p426
      $region50: #{mixtral_attention_forward.4} parent=39 // pred_check_branch
        %1028 = sbr.rel (%p1026) target = $region52
      $region51: #{mixtral_attention_forward.4} parent=39 // pred_region
        %v1029 = vld [vmem:[#allocation4] sm:$0xff]
        %v1030 = vld [vmem:[#allocation3] sm:$0xff]
        %1032 = vset.pattern.permute.xlu0 0
        %1033 = vperm.xlu0 %1032, %v1030
        %v1034 = vpop.permute.xlu0 %1033
        %v1036 = vrcp.pop %v1034
        %v1037 = vmul.f32 %v1029, %v1036
        %1038 = vst [vmem:[#allocation4] sm:$0xff] %v1037
        %v1039 = vld [vmem:[#allocation4 + $0x8] sm:$0xff]
        %s1040 = scalar_lea.vmem [#allocation3], 8
        %v1041 = vld [vmem:[%s1040] sm:$0xff]
        %1043 = vset.pattern.permute.xlu0 0
        %1044 = vperm.xlu0 %1043, %v1041
        %v1045 = vpop.permute.xlu0 %1044
        %v1047 = vrcp.pop %v1045
        %v1048 = vmul.f32 %v1039, %v1047
        %1049 = vst [vmem:[#allocation4 + $0x8] sm:$0xff] %v1048
        %v1050 = vld [vmem:[#allocation4] sm:$0xff]
        %v1051 = vld [vmem:[#allocation4 + $0x8] sm:$0xff]
        %1052 = vst [vmem:[%s424] sm:$0xff] %v1050
        %1053 = vst [vmem:[%s424 + $0x8] sm:$0xff] %v1051
      $region52: #{mixtral_attention_forward.4} parent=39 // pred_fallthru
        _
      %s1054 = smul.u32 2, %s23
      %p1055 = scmp.lt.s32.totalorder %s22, 1
      %s1056 = scalar_select %p1055, %s22, 1
      %p1057 = scmp.lt.s32.totalorder %s24, 0
      %s1058 = scalar_select %p1057, %s24, 0
      %p1059 = scmp.lt.s32.totalorder %s1054, 3
      %s1060 = scalar_select %p1059, %s1054, 3
      %s1061 = smul.addr %s1058, 4
      %s1062 = sadd.s32 %s1060, %s1061
      %s1063 = smul.addr %s1056, 4
      %s1064 = sadd.s32 %s1062, %s1063
      %s1065 = smul.addr %s1064, 8
      %s1066 = scalar_lea.vmem %s5, %s1065
      // Predicated region
      $region53: #{mixtral_attention_forward.4} parent=39 // pred_check
        %p1067 = pneg %p206
      $region54: #{mixtral_attention_forward.4} parent=39 // pred_check_branch
        %1069 = sbr.rel (%p1067) target = $region56
      $region55: #{mixtral_attention_forward.4} parent=39 // pred_region
        %s1070 = smul.u32 2, %s23
      $region56: #{mixtral_attention_forward.4} parent=39 // pred_fallthru
        _
    $region40: #{mixtral_attention_forward.4} parent=5 // pred_fallthru
      _
    %p1071 = scmp.le.s32.totalorder 2, %s11
    // Predicated region
    $region57: #{mixtral_attention_forward.4} parent=5 // pred_check
      %p1072 = pneg %p1071
    $region58: #{mixtral_attention_forward.4} parent=5 // pred_check_branch
      %1074 = sbr.rel (%p1072) target = $region60
    $region59: #{mixtral_attention_forward.4} parent=5 // pred_region
      %s1075 = ssub.s32 %s11, 2
      // Predicated region
      $region61: #{mixtral_attention_forward.4} parent=59 // pred_check
        %p1076 = pneg %p212
      $region62: #{mixtral_attention_forward.4} parent=59 // pred_check_branch
        %1078 = sbr.rel (%p1076) target = $region64
      $region63: #{mixtral_attention_forward.4} parent=59 // pred_region
        %s1079 = smul.u32 2, %s27
        %p1080 = scmp.lt.s32.totalorder %s26, 1
        %s1081 = scalar_select %p1080, %s26, 1
        %p1082 = scmp.lt.s32.totalorder %s28, 0
        %s1083 = scalar_select %p1082, %s28, 0
        %p1084 = scmp.lt.s32.totalorder %s1079, 3
        %s1085 = scalar_select %p1084, %s1079, 3
        %s1086 = smul.addr %s1083, 4
        %s1087 = sadd.s32 %s1085, %s1086
        %s1088 = smul.addr %s1081, 4
        %s1089 = sadd.s32 %s1087, %s1088
        %s1090 = smul.addr %s1089, 8
        %s1091 = scalar_lea.vmem %s5, %s1090
      $region64: #{mixtral_attention_forward.4} parent=59 // pred_fallthru
        _
    $region60: #{mixtral_attention_forward.4} parent=5 // pred_fallthru
      _
  $region6: #{mixtral_attention_forward.4} parent=0 // loop_footer
    %s15 = sadd.s32 1, %s11
  $region7: #{mixtral_attention_forward.4} parent=0 // loop_footer_branch
    %10 = sbr.rel target = $region3
  $region8: #{mixtral_attention_forward.4} parent=0 // loop_exit
    _

</llo_original>
